<compile_context>
chip_gen: v7x
topology: tpu7x:2x2x1
jax: 0.10.0
libtpu: 0.0.40
codegen_flags: <defaults>
</compile_context>

<pallas_src>
import jax
import jax.numpy as jnp
from jax.experimental import pallas as pl
from jax.experimental.pallas import tpu as pltpu


# ----------------------------------------------------------------------------
# Pallas kernels
# ----------------------------------------------------------------------------
def _conv_pool_bn_kernel(p0_ref, p1_ref, p2_ref, p3_ref, w_ref, b_ref,
                         s_ref, t_ref, o_ref):
    """Fused conv(matmul) + bias + ReLU over 4 pool taps, 2x2-max, BN affine."""
    w = w_ref[...]
    b = b_ref[...]
    z0 = jnp.maximum(jnp.dot(p0_ref[...], w, preferred_element_type=jnp.float32) + b, 0.0)
    z1 = jnp.maximum(jnp.dot(p1_ref[...], w, preferred_element_type=jnp.float32) + b, 0.0)
    z2 = jnp.maximum(jnp.dot(p2_ref[...], w, preferred_element_type=jnp.float32) + b, 0.0)
    z3 = jnp.maximum(jnp.dot(p3_ref[...], w, preferred_element_type=jnp.float32) + b, 0.0)
    m = jnp.maximum(jnp.maximum(z0, z1), jnp.maximum(z2, z3))
    o_ref[...] = m * s_ref[...] + t_ref[...]


def _conv_bn_kernel(p_ref, w_ref, b_ref, s_ref, t_ref, o_ref):
    """Fused conv(matmul) + bias + ReLU + BN affine (no pooling)."""
    z = jnp.dot(p_ref[...], w_ref[...], preferred_element_type=jnp.float32) + b_ref[...]
    z = jnp.maximum(z, 0.0)
    o_ref[...] = z * s_ref[...] + t_ref[...]


def _dense_stack_kernel(x_ref, w1_ref, b1_ref, w2_ref, b2_ref, w3_ref, b3_ref,
                        o_ref):
    """dense1(+BN folded) -> dense2(+BN folded) -> out, intermediates in VMEM."""
    h = jnp.dot(x_ref[...], w1_ref[...], preferred_element_type=jnp.float32) + b1_ref[...]
    h = jnp.dot(h, w2_ref[...], preferred_element_type=jnp.float32) + b2_ref[...]
    o_ref[...] = jnp.dot(h, w3_ref[...], preferred_element_type=jnp.float32) + b3_ref[...]


# ----------------------------------------------------------------------------
# Tiling helpers
# ----------------------------------------------------------------------------
_VMEM_LIMIT = 32 * 1024 * 1024  # sized for v7x (64 MiB physical) with headroom


def _round_up(x, m):
    return (x + m - 1) // m * m


def _m_tiles(m, max_tile=512):
    """Pick a row tile (multiple of 8, <= max_tile) and padded row count."""
    tile = min(max_tile, _round_up(max(m, 1), 8))
    return tile, _round_up(m, tile)


def _full_spec(shape):
    return pl.BlockSpec(shape, lambda i: (0, 0))


# ----------------------------------------------------------------------------
# Conv block: im2col (grouped by pool tap) + fused Pallas kernel
# ----------------------------------------------------------------------------
def conv_block(x_nhwc, w_oihw, b, bn_scale, bn_shift, *, pad, pool):
    """Conv(k5, stride1, pad) + ReLU [+ MaxPool2x2] + BatchNorm (eval affine)."""
    OC, IC, KH, KW = w_oihw.shape
    B, H, W, C = x_nhwc.shape
    assert C == IC

    xpad = jnp.pad(x_nhwc, ((0, 0), (pad, pad), (pad, pad), (0, 0)))
    OH = H + 2 * pad - KH + 1
    OW = W + 2 * pad - KW + 1
    K = KH * KW * C

    # im2col patches, K flattened in (i, j, c) order.
    taps = []
    for i in range(KH):
        for j in range(KW):
            taps.append(xpad[:, i:i + OH, j:j + OW, :])
    pall = jnp.stack(taps, axis=3).reshape(B, OH, OW, K).astype(jnp.float32)

    # Weight matrix matching (i, j, c) flattening order.
    w_mat = jnp.transpose(w_oihw, (2, 3, 1, 0)).reshape(K, OC).astype(jnp.float32)
    b2 = b.reshape(1, OC).astype(jnp.float32)
    s2 = bn_scale.reshape(1, OC).astype(jnp.float32)
    t2 = bn_shift.reshape(1, OC).astype(jnp.float32)

    if pool:
        PH, PW = OH // 2, OW // 2
        M = B * PH * PW
        tile_m, Mp = _m_tiles(M)
        patch_list = []
        for ti in range(2):
            for tj in range(2):
                sub = pall[:, ti:2 * PH:2, tj:2 * PW:2, :].reshape(M, K)
                patch_list.append(jnp.pad(sub, ((0, Mp - M), (0, 0))))
        grid = (Mp // tile_m,)
        patch_spec = pl.BlockSpec((tile_m, K), lambda i: (i, 0))
        flops = 2 * Mp * K * OC * 4 + 7 * Mp * OC
        bytes_acc = 4 * (4 * Mp * K + K * OC + 3 * OC + Mp * OC)
        out = pl.pallas_call(
            _conv_pool_bn_kernel,
            out_shape=jax.ShapeDtypeStruct((Mp, OC), jnp.float32),
            grid=grid,
            in_specs=[patch_spec, patch_spec, patch_spec, patch_spec,
                      _full_spec((K, OC)), _full_spec((1, OC)),
                      _full_spec((1, OC)), _full_spec((1, OC))],
            out_specs=pl.BlockSpec((tile_m, OC), lambda i: (i, 0)),
            compiler_params=pltpu.CompilerParams(
                dimension_semantics=("parallel",),
                vmem_limit_bytes=_VMEM_LIMIT),
            cost_estimate=pl.CostEstimate(
                flops=int(flops), transcendentals=0, bytes_accessed=int(bytes_acc)),
        )(*patch_list, w_mat, b2, s2, t2)
        return out[:M].reshape(B, PH, PW, OC)

    # No pooling (conv3 block).
    M = B * OH * OW
    tile_m, Mp = _m_tiles(M)
    patches = jnp.pad(pall.reshape(M, K), ((0, Mp - M), (0, 0)))
    grid = (Mp // tile_m,)
    flops = 2 * Mp * K * OC + 3 * Mp * OC
    bytes_acc = 4 * (Mp * K + K * OC + 3 * OC + Mp * OC)
    out = pl.pallas_call(
        _conv_bn_kernel,
        out_shape=jax.ShapeDtypeStruct((Mp, OC), jnp.float32),
        grid=grid,
        in_specs=[pl.BlockSpec((tile_m, K), lambda i: (i, 0)),
                  _full_spec((K, OC)), _full_spec((1, OC)),
                  _full_spec((1, OC)), _full_spec((1, OC))],
        out_specs=pl.BlockSpec((tile_m, OC), lambda i: (i, 0)),
        compiler_params=pltpu.CompilerParams(
            dimension_semantics=("parallel",),
            vmem_limit_bytes=_VMEM_LIMIT),
        cost_estimate=pl.CostEstimate(
            flops=int(flops), transcendentals=0, bytes_accessed=int(bytes_acc)),
    )(patches, w_mat, b2, s2, t2)
    return out[:M].reshape(B, OH, OW, OC)


# ----------------------------------------------------------------------------
# Fused dense stack (dense1+BN, dense2+BN, out) — one Pallas kernel
# ----------------------------------------------------------------------------
def dense_stack(x, w1, b1, w2, b2, w3, b3):
    """x: [B, K1]. wi: [Ki, Ni] float32 with any BN already folded in."""
    B, K1 = x.shape
    N1, N2, N3 = w1.shape[1], w2.shape[1], w3.shape[1]
    tile_b, Bp = _m_tiles(B, max_tile=256)
    xp = jnp.pad(x.astype(jnp.float32), ((0, Bp - B), (0, 0)))
    grid = (Bp // tile_b,)
    flops = 2 * Bp * (K1 * N1 + N1 * N2 + N2 * N3)
    bytes_acc = 4 * (Bp * K1 + K1 * N1 + N1 * N2 + N2 * N3 + N1 + N2 + N3 + Bp * N3)
    out = pl.pallas_call(
        _dense_stack_kernel,
        out_shape=jax.ShapeDtypeStruct((Bp, N3), jnp.float32),
        grid=grid,
        in_specs=[pl.BlockSpec((tile_b, K1), lambda i: (i, 0)),
                  _full_spec((K1, N1)), _full_spec((1, N1)),
                  _full_spec((N1, N2)), _full_spec((1, N2)),
                  _full_spec((N2, N3)), _full_spec((1, N3))],
        out_specs=pl.BlockSpec((tile_b, N3), lambda i: (i, 0)),
        compiler_params=pltpu.CompilerParams(
            dimension_semantics=("parallel",),
            vmem_limit_bytes=_VMEM_LIMIT),
        cost_estimate=pl.CostEstimate(
            flops=int(flops), transcendentals=0, bytes_accessed=int(bytes_acc)),
    )(xp,
      w1.astype(jnp.float32), b1.reshape(1, N1).astype(jnp.float32),
      w2.astype(jnp.float32), b2.reshape(1, N2).astype(jnp.float32),
      w3.astype(jnp.float32), b3.reshape(1, N3).astype(jnp.float32))
    return out[:B]


# ----------------------------------------------------------------------------
# Parameters / BatchNorm (eval-mode, PyTorch defaults)
# ----------------------------------------------------------------------------
def init_params(key):
    ks = jax.random.split(key, 12)

    def unif(k, shape, fan_in):
        bound = 1.0 / jnp.sqrt(fan_in)
        return jax.random.uniform(k, shape, jnp.float32, -bound, bound)

    p = {}
    p["conv1_w"] = unif(ks[0], (8, 1, 5, 5), 1 * 5 * 5)
    p["conv1_b"] = unif(ks[1], (8,), 1 * 5 * 5)
    p["conv2_w"] = unif(ks[2], (16, 8, 5, 5), 8 * 5 * 5)
    p["conv2_b"] = unif(ks[3], (16,), 8 * 5 * 5)
    p["conv3_w"] = unif(ks[4], (32, 16, 5, 5), 16 * 5 * 5)
    p["conv3_b"] = unif(ks[5], (32,), 16 * 5 * 5)
    p["dense1_w"] = unif(ks[6], (144, 288), 288)   # PyTorch Linear: [out, in]
    p["dense1_b"] = unif(ks[7], (144,), 288)
    p["dense2_w"] = unif(ks[8], (36, 144), 144)
    p["dense2_b"] = unif(ks[9], (36,), 144)
    p["out_w"] = unif(ks[10], (10, 36), 36)
    p["out_b"] = unif(ks[11], (10,), 36)
    return p


def bn_scale_shift(n, eps=1e-5):
    # PyTorch defaults (eval): gamma=1, beta=0, running_mean=0, running_var=1.
    gamma = jnp.ones((n,), jnp.float32)
    beta = jnp.zeros((n,), jnp.float32)
    mean = jnp.zeros((n,), jnp.float32)
    var = jnp.ones((n,), jnp.float32)
    scale = gamma / jnp.sqrt(var + eps)
    shift = beta - mean * scale
    return scale, shift


def fold_bn_into_linear(w_mat, b, scale, shift):
    """y = BN(x@w + b)  ==  x@(w*scale) + (b*scale + shift)  (eval, exact)."""
    return w_mat * scale[None, :], b * scale + shift


# ----------------------------------------------------------------------------
# Forward pass (matches Variant4.forward, eval mode)
# ----------------------------------------------------------------------------
@jax.jit
def variant4_forward(params, x_nchw):
    x = jnp.transpose(x_nchw, (0, 2, 3, 1)).astype(jnp.float32)   # NCHW -> NHWC

    # conv1: Conv(1->8,k5,p1) + ReLU + MaxPool2 + BN(8)
    s, t = bn_scale_shift(8)
    x = conv_block(x, params["conv1_w"], params["conv1_b"], s, t, pad=1, pool=True)   # [B,13,13,8]

    # conv2: Conv(8->16,k5,p1) + ReLU + MaxPool2 + BN(16)
    s, t = bn_scale_shift(16)
    x = conv_block(x, params["conv2_w"], params["conv2_b"], s, t, pad=1, pool=True)   # [B,5,5,16]

    # conv3: Conv(16->32,k5,p1) + ReLU + BN(32)   (no pooling)
    s, t = bn_scale_shift(32)
    x = conv_block(x, params["conv3_w"], params["conv3_b"], s, t, pad=1, pool=False)  # [B,3,3,32]

    # Flatten in NHWC order; the channel-major (NCHW) flatten of nn.Flatten is
    # absorbed by permuting dense1's weight rows (no activation transpose).
    B = x.shape[0]
    x = x.reshape(B, 3 * 3 * 32)                                                      # [B,288]

    w1 = params["dense1_w"]                                   # [144,288], in = c*9 + h*3 + w
    w1_nhwc = jnp.transpose(w1.reshape(144, 32, 3, 3), (0, 2, 3, 1)).reshape(144, 288)
    w1_mat = w1_nhwc.T                                        # [288,144], in = (h*3+w)*32 + c
    s, t = bn_scale_shift(144)
    w1f, b1f = fold_bn_into_linear(w1_mat, params["dense1_b"], s, t)

    s, t = bn_scale_shift(36)
    w2f, b2f = fold_bn_into_linear(params["dense2_w"].T, params["dense2_b"], s, t)

    w3_mat = params["out_w"].T
    b3 = params["out_b"]

    return dense_stack(x, w1f, b1f, w2f, b2f, w3_mat, b3)


if __name__ == "__main__":
    key = jax.random.PRNGKey(0)
    pkey, xkey = jax.random.split(key)
    params = init_params(pkey)
    # Geometry implied by the module (32*3*3 flatten) -> 28x28 single-channel input.
    x = jax.random.normal(xkey, (2, 1, 28, 28), jnp.float32)
    out = variant4_forward(params, x)
    out = jax.block_until_ready(out)
    assert out.shape == (2, 10), out.shape
    print("KERNEL_OK")
</pallas_src>

<mosaic_0001>
module attributes {stable_mosaic.version = 11 : i64} {
  func.func @_conv_pool_bn_kernel(%arg0: i32, %arg1: memref<344x25xf32, #tpu.memory_space<vmem>>, %arg2: memref<344x25xf32, #tpu.memory_space<vmem>>, %arg3: memref<344x25xf32, #tpu.memory_space<vmem>>, %arg4: memref<344x25xf32, #tpu.memory_space<vmem>>, %arg5: memref<25x8xf32, #tpu.memory_space<vmem>>, %arg6: memref<1x8xf32, #tpu.memory_space<vmem>>, %arg7: memref<1x8xf32, #tpu.memory_space<vmem>>, %arg8: memref<1x8xf32, #tpu.memory_space<vmem>>, %arg9: memref<344x8xf32, #tpu.memory_space<vmem>>) attributes {dimension_semantics = [#tpu.dimension_semantics<parallel>], iteration_bounds = array<i64: 1>, scalar_prefetch = 0 : i64, scratch_operands = 0 : i64, tpu.core_type = #tpu.core_type<tc>, window_params = [{transform_indices = @transform_0, window_bounds = array<i64: 344, 25>}, {transform_indices = @transform_1, window_bounds = array<i64: 344, 25>}, {transform_indices = @transform_2, window_bounds = array<i64: 344, 25>}, {transform_indices = @transform_3, window_bounds = array<i64: 344, 25>}, {pipeline_mode = #tpu.pipeline_mode<synchronous>, transform_indices = @transform_4, window_bounds = array<i64: 25, 8>}, {pipeline_mode = #tpu.pipeline_mode<synchronous>, transform_indices = @transform_5, window_bounds = array<i64: 1, 8>}, {pipeline_mode = #tpu.pipeline_mode<synchronous>, transform_indices = @transform_6, window_bounds = array<i64: 1, 8>}, {pipeline_mode = #tpu.pipeline_mode<synchronous>, transform_indices = @transform_7, window_bounds = array<i64: 1, 8>}, {transform_indices = @transform_8, window_bounds = array<i64: 344, 8>}]} {
    %c0 = arith.constant 0 : index
    %c0_0 = arith.constant 0 : index
    %0 = vector.load %arg5[%c0, %c0_0] : memref<25x8xf32, #tpu.memory_space<vmem>>, vector<25x8xf32>
    %c0_1 = arith.constant 0 : index
    %c0_2 = arith.constant 0 : index
    %1 = vector.load %arg6[%c0_1, %c0_2] : memref<1x8xf32, #tpu.memory_space<vmem>>, vector<1x8xf32>
    %c0_3 = arith.constant 0 : index
    %c0_4 = arith.constant 0 : index
    %2 = vector.load %arg1[%c0_3, %c0_4] : memref<344x25xf32, #tpu.memory_space<vmem>>, vector<344x25xf32>
    %cst = arith.constant dense<0.000000e+00> : vector<344x8xf32>
    %3 = tpu.matmul %2, %0, %cst {dimension_numbers = #tpu.dot_dimension_numbers<[1], [0], [0], [1], [0, 0, 1, 1], [], []>} : vector<344x25xf32>, vector<25x8xf32>, vector<344x8xf32> -> vector<344x8xf32>
    %4 = vector.broadcast %1 : vector<1x8xf32> to vector<344x8xf32>
    %5 = arith.addf %3, %4 : vector<344x8xf32>
    %cst_5 = arith.constant 0.000000e+00 : f32
    %6 = vector.broadcast %cst_5 : f32 to vector<344x8xf32>
    %7 = arith.maximumf %5, %6 : vector<344x8xf32>
    %c0_6 = arith.constant 0 : index
    %c0_7 = arith.constant 0 : index
    %8 = vector.load %arg2[%c0_6, %c0_7] : memref<344x25xf32, #tpu.memory_space<vmem>>, vector<344x25xf32>
    %cst_8 = arith.constant dense<0.000000e+00> : vector<344x8xf32>
    %9 = tpu.matmul %8, %0, %cst_8 {dimension_numbers = #tpu.dot_dimension_numbers<[1], [0], [0], [1], [0, 0, 1, 1], [], []>} : vector<344x25xf32>, vector<25x8xf32>, vector<344x8xf32> -> vector<344x8xf32>
    %10 = vector.broadcast %1 : vector<1x8xf32> to vector<344x8xf32>
    %11 = arith.addf %9, %10 : vector<344x8xf32>
    %cst_9 = arith.constant 0.000000e+00 : f32
    %12 = vector.broadcast %cst_9 : f32 to vector<344x8xf32>
    %13 = arith.maximumf %11, %12 : vector<344x8xf32>
    %c0_10 = arith.constant 0 : index
    %c0_11 = arith.constant 0 : index
    %14 = vector.load %arg3[%c0_10, %c0_11] : memref<344x25xf32, #tpu.memory_space<vmem>>, vector<344x25xf32>
    %cst_12 = arith.constant dense<0.000000e+00> : vector<344x8xf32>
    %15 = tpu.matmul %14, %0, %cst_12 {dimension_numbers = #tpu.dot_dimension_numbers<[1], [0], [0], [1], [0, 0, 1, 1], [], []>} : vector<344x25xf32>, vector<25x8xf32>, vector<344x8xf32> -> vector<344x8xf32>
    %16 = vector.broadcast %1 : vector<1x8xf32> to vector<344x8xf32>
    %17 = arith.addf %15, %16 : vector<344x8xf32>
    %cst_13 = arith.constant 0.000000e+00 : f32
    %18 = vector.broadcast %cst_13 : f32 to vector<344x8xf32>
    %19 = arith.maximumf %17, %18 : vector<344x8xf32>
    %c0_14 = arith.constant 0 : index
    %c0_15 = arith.constant 0 : index
    %20 = vector.load %arg4[%c0_14, %c0_15] : memref<344x25xf32, #tpu.memory_space<vmem>>, vector<344x25xf32>
    %cst_16 = arith.constant dense<0.000000e+00> : vector<344x8xf32>
    %21 = tpu.matmul %20, %0, %cst_16 {dimension_numbers = #tpu.dot_dimension_numbers<[1], [0], [0], [1], [0, 0, 1, 1], [], []>} : vector<344x25xf32>, vector<25x8xf32>, vector<344x8xf32> -> vector<344x8xf32>
    %22 = vector.broadcast %1 : vector<1x8xf32> to vector<344x8xf32>
    %23 = arith.addf %21, %22 : vector<344x8xf32>
    %cst_17 = arith.constant 0.000000e+00 : f32
    %24 = vector.broadcast %cst_17 : f32 to vector<344x8xf32>
    %25 = arith.maximumf %23, %24 : vector<344x8xf32>
    %26 = arith.maximumf %7, %13 : vector<344x8xf32>
    %27 = arith.maximumf %19, %25 : vector<344x8xf32>
    %28 = arith.maximumf %26, %27 : vector<344x8xf32>
    %c0_18 = arith.constant 0 : index
    %c0_19 = arith.constant 0 : index
    %29 = vector.load %arg7[%c0_18, %c0_19] : memref<1x8xf32, #tpu.memory_space<vmem>>, vector<1x8xf32>
    %30 = vector.broadcast %29 : vector<1x8xf32> to vector<344x8xf32>
    %31 = arith.mulf %28, %30 : vector<344x8xf32>
    %c0_20 = arith.constant 0 : index
    %c0_21 = arith.constant 0 : index
    %32 = vector.load %arg8[%c0_20, %c0_21] : memref<1x8xf32, #tpu.memory_space<vmem>>, vector<1x8xf32>
    %33 = vector.broadcast %32 : vector<1x8xf32> to vector<344x8xf32>
    %34 = arith.addf %31, %33 : vector<344x8xf32>
    %c0_22 = arith.constant 0 : index
    %c0_23 = arith.constant 0 : index
    %35 = vector.load %arg9[%c0_22, %c0_23] : memref<344x8xf32, #tpu.memory_space<vmem>>, vector<344x8xf32>
    tpu.vector_store %arg9[%c0_22, %c0_23], %34 {strides = array<i32>} : memref<344x8xf32, #tpu.memory_space<vmem>>, vector<344x8xf32>,
    return
  }
  func.func @transform_0(%arg0: i32) -> (i32, i32) {
    %c0_i32 = arith.constant 0 : i32
    %c0_i32_0 = arith.constant 0 : i32
    return %arg0, %c0_i32 : i32, i32
  }
  func.func @transform_1(%arg0: i32) -> (i32, i32) {
    %c0_i32 = arith.constant 0 : i32
    %c0_i32_0 = arith.constant 0 : i32
    return %arg0, %c0_i32 : i32, i32
  }
  func.func @transform_2(%arg0: i32) -> (i32, i32) {
    %c0_i32 = arith.constant 0 : i32
    %c0_i32_0 = arith.constant 0 : i32
    return %arg0, %c0_i32 : i32, i32
  }
  func.func @transform_3(%arg0: i32) -> (i32, i32) {
    %c0_i32 = arith.constant 0 : i32
    %c0_i32_0 = arith.constant 0 : i32
    return %arg0, %c0_i32 : i32, i32
  }
  func.func @transform_4(%arg0: i32) -> (i32, i32) {
    %c0_i32 = arith.constant 0 : i32
    %c0_i32_0 = arith.constant 0 : i32
    %c0_i32_1 = arith.constant 0 : i32
    return %c0_i32, %c0_i32_0 : i32, i32
  }
  func.func @transform_5(%arg0: i32) -> (i32, i32) {
    %c0_i32 = arith.constant 0 : i32
    %c0_i32_0 = arith.constant 0 : i32
    %c0_i32_1 = arith.constant 0 : i32
    return %c0_i32, %c0_i32_0 : i32, i32
  }
  func.func @transform_6(%arg0: i32) -> (i32, i32) {
    %c0_i32 = arith.constant 0 : i32
    %c0_i32_0 = arith.constant 0 : i32
    %c0_i32_1 = arith.constant 0 : i32
    return %c0_i32, %c0_i32_0 : i32, i32
  }
  func.func @transform_7(%arg0: i32) -> (i32, i32) {
    %c0_i32 = arith.constant 0 : i32
    %c0_i32_0 = arith.constant 0 : i32
    %c0_i32_1 = arith.constant 0 : i32
    return %c0_i32, %c0_i32_0 : i32, i32
  }
  func.func @transform_8(%arg0: i32) -> (i32, i32) {
    %c0_i32 = arith.constant 0 : i32
    %c0_i32_0 = arith.constant 0 : i32
    return %arg0, %c0_i32 : i32, i32
  }
}

module attributes {stable_mosaic.version = 11 : i64} {
  func.func @_conv_pool_bn_kernel(%arg0: i32, %arg1: memref<56x200xf32, #tpu.memory_space<vmem>>, %arg2: memref<56x200xf32, #tpu.memory_space<vmem>>, %arg3: memref<56x200xf32, #tpu.memory_space<vmem>>, %arg4: memref<56x200xf32, #tpu.memory_space<vmem>>, %arg5: memref<200x16xf32, #tpu.memory_space<vmem>>, %arg6: memref<1x16xf32, #tpu.memory_space<vmem>>, %arg7: memref<1x16xf32, #tpu.memory_space<vmem>>, %arg8: memref<1x16xf32, #tpu.memory_space<vmem>>, %arg9: memref<56x16xf32, #tpu.memory_space<vmem>>) attributes {dimension_semantics = [#tpu.dimension_semantics<parallel>], iteration_bounds = array<i64: 1>, scalar_prefetch = 0 : i64, scratch_operands = 0 : i64, tpu.core_type = #tpu.core_type<tc>, window_params = [{transform_indices = @transform_0, window_bounds = array<i64: 56, 200>}, {transform_indices = @transform_1, window_bounds = array<i64: 56, 200>}, {transform_indices = @transform_2, window_bounds = array<i64: 56, 200>}, {transform_indices = @transform_3, window_bounds = array<i64: 56, 200>}, {pipeline_mode = #tpu.pipeline_mode<synchronous>, transform_indices = @transform_4, window_bounds = array<i64: 200, 16>}, {pipeline_mode = #tpu.pipeline_mode<synchronous>, transform_indices = @transform_5, window_bounds = array<i64: 1, 16>}, {pipeline_mode = #tpu.pipeline_mode<synchronous>, transform_indices = @transform_6, window_bounds = array<i64: 1, 16>}, {pipeline_mode = #tpu.pipeline_mode<synchronous>, transform_indices = @transform_7, window_bounds = array<i64: 1, 16>}, {transform_indices = @transform_8, window_bounds = array<i64: 56, 16>}]} {
    %c0 = arith.constant 0 : index
    %c0_0 = arith.constant 0 : index
    %0 = vector.load %arg5[%c0, %c0_0] : memref<200x16xf32, #tpu.memory_space<vmem>>, vector<200x16xf32>
    %c0_1 = arith.constant 0 : index
    %c0_2 = arith.constant 0 : index
    %1 = vector.load %arg6[%c0_1, %c0_2] : memref<1x16xf32, #tpu.memory_space<vmem>>, vector<1x16xf32>
    %c0_3 = arith.constant 0 : index
    %c0_4 = arith.constant 0 : index
    %2 = vector.load %arg1[%c0_3, %c0_4] : memref<56x200xf32, #tpu.memory_space<vmem>>, vector<56x200xf32>
    %cst = arith.constant dense<0.000000e+00> : vector<56x16xf32>
    %3 = tpu.matmul %2, %0, %cst {dimension_numbers = #tpu.dot_dimension_numbers<[1], [0], [0], [1], [0, 0, 1, 1], [], []>} : vector<56x200xf32>, vector<200x16xf32>, vector<56x16xf32> -> vector<56x16xf32>
    %4 = vector.broadcast %1 : vector<1x16xf32> to vector<56x16xf32>
    %5 = arith.addf %3, %4 : vector<56x16xf32>
    %cst_5 = arith.constant 0.000000e+00 : f32
    %6 = vector.broadcast %cst_5 : f32 to vector<56x16xf32>
    %7 = arith.maximumf %5, %6 : vector<56x16xf32>
    %c0_6 = arith.constant 0 : index
    %c0_7 = arith.constant 0 : index
    %8 = vector.load %arg2[%c0_6, %c0_7] : memref<56x200xf32, #tpu.memory_space<vmem>>, vector<56x200xf32>
    %cst_8 = arith.constant dense<0.000000e+00> : vector<56x16xf32>
    %9 = tpu.matmul %8, %0, %cst_8 {dimension_numbers = #tpu.dot_dimension_numbers<[1], [0], [0], [1], [0, 0, 1, 1], [], []>} : vector<56x200xf32>, vector<200x16xf32>, vector<56x16xf32> -> vector<56x16xf32>
    %10 = vector.broadcast %1 : vector<1x16xf32> to vector<56x16xf32>
    %11 = arith.addf %9, %10 : vector<56x16xf32>
    %cst_9 = arith.constant 0.000000e+00 : f32
    %12 = vector.broadcast %cst_9 : f32 to vector<56x16xf32>
    %13 = arith.maximumf %11, %12 : vector<56x16xf32>
    %c0_10 = arith.constant 0 : index
    %c0_11 = arith.constant 0 : index
    %14 = vector.load %arg3[%c0_10, %c0_11] : memref<56x200xf32, #tpu.memory_space<vmem>>, vector<56x200xf32>
    %cst_12 = arith.constant dense<0.000000e+00> : vector<56x16xf32>
    %15 = tpu.matmul %14, %0, %cst_12 {dimension_numbers = #tpu.dot_dimension_numbers<[1], [0], [0], [1], [0, 0, 1, 1], [], []>} : vector<56x200xf32>, vector<200x16xf32>, vector<56x16xf32> -> vector<56x16xf32>
    %16 = vector.broadcast %1 : vector<1x16xf32> to vector<56x16xf32>
    %17 = arith.addf %15, %16 : vector<56x16xf32>
    %cst_13 = arith.constant 0.000000e+00 : f32
    %18 = vector.broadcast %cst_13 : f32 to vector<56x16xf32>
    %19 = arith.maximumf %17, %18 : vector<56x16xf32>
    %c0_14 = arith.constant 0 : index
    %c0_15 = arith.constant 0 : index
    %20 = vector.load %arg4[%c0_14, %c0_15] : memref<56x200xf32, #tpu.memory_space<vmem>>, vector<56x200xf32>
    %cst_16 = arith.constant dense<0.000000e+00> : vector<56x16xf32>
    %21 = tpu.matmul %20, %0, %cst_16 {dimension_numbers = #tpu.dot_dimension_numbers<[1], [0], [0], [1], [0, 0, 1, 1], [], []>} : vector<56x200xf32>, vector<200x16xf32>, vector<56x16xf32> -> vector<56x16xf32>
    %22 = vector.broadcast %1 : vector<1x16xf32> to vector<56x16xf32>
    %23 = arith.addf %21, %22 : vector<56x16xf32>
    %cst_17 = arith.constant 0.000000e+00 : f32
    %24 = vector.broadcast %cst_17 : f32 to vector<56x16xf32>
    %25 = arith.maximumf %23, %24 : vector<56x16xf32>
    %26 = arith.maximumf %7, %13 : vector<56x16xf32>
    %27 = arith.maximumf %19, %25 : vector<56x16xf32>
    %28 = arith.maximumf %26, %27 : vector<56x16xf32>
    %c0_18 = arith.constant 0 : index
    %c0_19 = arith.constant 0 : index
    %29 = vector.load %arg7[%c0_18, %c0_19] : memref<1x16xf32, #tpu.memory_space<vmem>>, vector<1x16xf32>
    %30 = vector.broadcast %29 : vector<1x16xf32> to vector<56x16xf32>
    %31 = arith.mulf %28, %30 : vector<56x16xf32>
    %c0_20 = arith.constant 0 : index
    %c0_21 = arith.constant 0 : index
    %32 = vector.load %arg8[%c0_20, %c0_21] : memref<1x16xf32, #tpu.memory_space<vmem>>, vector<1x16xf32>
    %33 = vector.broadcast %32 : vector<1x16xf32> to vector<56x16xf32>
    %34 = arith.addf %31, %33 : vector<56x16xf32>
    %c0_22 = arith.constant 0 : index
    %c0_23 = arith.constant 0 : index
    %35 = vector.load %arg9[%c0_22, %c0_23] : memref<56x16xf32, #tpu.memory_space<vmem>>, vector<56x16xf32>
    tpu.vector_store %arg9[%c0_22, %c0_23], %34 {strides = array<i32>} : memref<56x16xf32, #tpu.memory_space<vmem>>, vector<56x16xf32>,
    return
  }
  func.func @transform_0(%arg0: i32) -> (i32, i32) {
    %c0_i32 = arith.constant 0 : i32
    %c0_i32_0 = arith.constant 0 : i32
    return %arg0, %c0_i32 : i32, i32
  }
  func.func @transform_1(%arg0: i32) -> (i32, i32) {
    %c0_i32 = arith.constant 0 : i32
    %c0_i32_0 = arith.constant 0 : i32
    return %arg0, %c0_i32 : i32, i32
  }
  func.func @transform_2(%arg0: i32) -> (i32, i32) {
    %c0_i32 = arith.constant 0 : i32
    %c0_i32_0 = arith.constant 0 : i32
    return %arg0, %c0_i32 : i32, i32
  }
  func.func @transform_3(%arg0: i32) -> (i32, i32) {
    %c0_i32 = arith.constant 0 : i32
    %c0_i32_0 = arith.constant 0 : i32
    return %arg0, %c0_i32 : i32, i32
  }
  func.func @transform_4(%arg0: i32) -> (i32, i32) {
    %c0_i32 = arith.constant 0 : i32
    %c0_i32_0 = arith.constant 0 : i32
    %c0_i32_1 = arith.constant 0 : i32
    return %c0_i32, %c0_i32_0 : i32, i32
  }
  func.func @transform_5(%arg0: i32) -> (i32, i32) {
    %c0_i32 = arith.constant 0 : i32
    %c0_i32_0 = arith.constant 0 : i32
    %c0_i32_1 = arith.constant 0 : i32
    return %c0_i32, %c0_i32_0 : i32, i32
  }
  func.func @transform_6(%arg0: i32) -> (i32, i32) {
    %c0_i32 = arith.constant 0 : i32
    %c0_i32_0 = arith.constant 0 : i32
    %c0_i32_1 = arith.constant 0 : i32
    return %c0_i32, %c0_i32_0 : i32, i32
  }
  func.func @transform_7(%arg0: i32) -> (i32, i32) {
    %c0_i32 = arith.constant 0 : i32
    %c0_i32_0 = arith.constant 0 : i32
    %c0_i32_1 = arith.constant 0 : i32
    return %c0_i32, %c0_i32_0 : i32, i32
  }
  func.func @transform_8(%arg0: i32) -> (i32, i32) {
    %c0_i32 = arith.constant 0 : i32
    %c0_i32_0 = arith.constant 0 : i32
    return %arg0, %c0_i32 : i32, i32
  }
}

module attributes {stable_mosaic.version = 11 : i64} {
  func.func @_conv_bn_kernel(%arg0: i32, %arg1: memref<24x400xf32, #tpu.memory_space<vmem>>, %arg2: memref<400x32xf32, #tpu.memory_space<vmem>>, %arg3: memref<1x32xf32, #tpu.memory_space<vmem>>, %arg4: memref<1x32xf32, #tpu.memory_space<vmem>>, %arg5: memref<1x32xf32, #tpu.memory_space<vmem>>, %arg6: memref<24x32xf32, #tpu.memory_space<vmem>>) attributes {dimension_semantics = [#tpu.dimension_semantics<parallel>], iteration_bounds = array<i64: 1>, scalar_prefetch = 0 : i64, scratch_operands = 0 : i64, tpu.core_type = #tpu.core_type<tc>, window_params = [{transform_indices = @transform_0, window_bounds = array<i64: 24, 400>}, {pipeline_mode = #tpu.pipeline_mode<synchronous>, transform_indices = @transform_1, window_bounds = array<i64: 400, 32>}, {pipeline_mode = #tpu.pipeline_mode<synchronous>, transform_indices = @transform_2, window_bounds = array<i64: 1, 32>}, {pipeline_mode = #tpu.pipeline_mode<synchronous>, transform_indices = @transform_3, window_bounds = array<i64: 1, 32>}, {pipeline_mode = #tpu.pipeline_mode<synchronous>, transform_indices = @transform_4, window_bounds = array<i64: 1, 32>}, {transform_indices = @transform_5, window_bounds = array<i64: 24, 32>}]} {
    %c0 = arith.constant 0 : index
    %c0_0 = arith.constant 0 : index
    %0 = vector.load %arg1[%c0, %c0_0] : memref<24x400xf32, #tpu.memory_space<vmem>>, vector<24x400xf32>
    %c0_1 = arith.constant 0 : index
    %c0_2 = arith.constant 0 : index
    %1 = vector.load %arg2[%c0_1, %c0_2] : memref<400x32xf32, #tpu.memory_space<vmem>>, vector<400x32xf32>
    %cst = arith.constant dense<0.000000e+00> : vector<24x32xf32>
    %2 = tpu.matmul %0, %1, %cst {dimension_numbers = #tpu.dot_dimension_numbers<[1], [0], [0], [1], [0, 0, 1, 1], [], []>} : vector<24x400xf32>, vector<400x32xf32>, vector<24x32xf32> -> vector<24x32xf32>
    %c0_3 = arith.constant 0 : index
    %c0_4 = arith.constant 0 : index
    %3 = vector.load %arg3[%c0_3, %c0_4] : memref<1x32xf32, #tpu.memory_space<vmem>>, vector<1x32xf32>
    %4 = vector.broadcast %3 : vector<1x32xf32> to vector<24x32xf32>
    %5 = arith.addf %2, %4 : vector<24x32xf32>
    %cst_5 = arith.constant 0.000000e+00 : f32
    %6 = vector.broadcast %cst_5 : f32 to vector<24x32xf32>
    %7 = arith.maximumf %5, %6 : vector<24x32xf32>
    %c0_6 = arith.constant 0 : index
    %c0_7 = arith.constant 0 : index
    %8 = vector.load %arg4[%c0_6, %c0_7] : memref<1x32xf32, #tpu.memory_space<vmem>>, vector<1x32xf32>
    %9 = vector.broadcast %8 : vector<1x32xf32> to vector<24x32xf32>
    %10 = arith.mulf %7, %9 : vector<24x32xf32>
    %c0_8 = arith.constant 0 : index
    %c0_9 = arith.constant 0 : index
    %11 = vector.load %arg5[%c0_8, %c0_9] : memref<1x32xf32, #tpu.memory_space<vmem>>, vector<1x32xf32>
    %12 = vector.broadcast %11 : vector<1x32xf32> to vector<24x32xf32>
    %13 = arith.addf %10, %12 : vector<24x32xf32>
    %c0_10 = arith.constant 0 : index
    %c0_11 = arith.constant 0 : index
    %14 = vector.load %arg6[%c0_10, %c0_11] : memref<24x32xf32, #tpu.memory_space<vmem>>, vector<24x32xf32>
    tpu.vector_store %arg6[%c0_10, %c0_11], %13 {strides = array<i32>} : memref<24x32xf32, #tpu.memory_space<vmem>>, vector<24x32xf32>,
    return
  }
  func.func @transform_0(%arg0: i32) -> (i32, i32) {
    %c0_i32 = arith.constant 0 : i32
    %c0_i32_0 = arith.constant 0 : i32
    return %arg0, %c0_i32 : i32, i32
  }
  func.func @transform_1(%arg0: i32) -> (i32, i32) {
    %c0_i32 = arith.constant 0 : i32
    %c0_i32_0 = arith.constant 0 : i32
    %c0_i32_1 = arith.constant 0 : i32
    return %c0_i32, %c0_i32_0 : i32, i32
  }
  func.func @transform_2(%arg0: i32) -> (i32, i32) {
    %c0_i32 = arith.constant 0 : i32
    %c0_i32_0 = arith.constant 0 : i32
    %c0_i32_1 = arith.constant 0 : i32
    return %c0_i32, %c0_i32_0 : i32, i32
  }
  func.func @transform_3(%arg0: i32) -> (i32, i32) {
    %c0_i32 = arith.constant 0 : i32
    %c0_i32_0 = arith.constant 0 : i32
    %c0_i32_1 = arith.constant 0 : i32
    return %c0_i32, %c0_i32_0 : i32, i32
  }
  func.func @transform_4(%arg0: i32) -> (i32, i32) {
    %c0_i32 = arith.constant 0 : i32
    %c0_i32_0 = arith.constant 0 : i32
    %c0_i32_1 = arith.constant 0 : i32
    return %c0_i32, %c0_i32_0 : i32, i32
  }
  func.func @transform_5(%arg0: i32) -> (i32, i32) {
    %c0_i32 = arith.constant 0 : i32
    %c0_i32_0 = arith.constant 0 : i32
    return %arg0, %c0_i32 : i32, i32
  }
}

module attributes {stable_mosaic.version = 11 : i64} {
  func.func @_dense_stack_kernel(%arg0: i32, %arg1: memref<8x288xf32, #tpu.memory_space<vmem>>, %arg2: memref<288x144xf32, #tpu.memory_space<vmem>>, %arg3: memref<1x144xf32, #tpu.memory_space<vmem>>, %arg4: memref<144x36xf32, #tpu.memory_space<vmem>>, %arg5: memref<1x36xf32, #tpu.memory_space<vmem>>, %arg6: memref<36x10xf32, #tpu.memory_space<vmem>>, %arg7: memref<1x10xf32, #tpu.memory_space<vmem>>, %arg8: memref<8x10xf32, #tpu.memory_space<vmem>>) attributes {dimension_semantics = [#tpu.dimension_semantics<parallel>], iteration_bounds = array<i64: 1>, scalar_prefetch = 0 : i64, scratch_operands = 0 : i64, tpu.core_type = #tpu.core_type<tc>, window_params = [{transform_indices = @transform_0, window_bounds = array<i64: 8, 288>}, {pipeline_mode = #tpu.pipeline_mode<synchronous>, transform_indices = @transform_1, window_bounds = array<i64: 288, 144>}, {pipeline_mode = #tpu.pipeline_mode<synchronous>, transform_indices = @transform_2, window_bounds = array<i64: 1, 144>}, {pipeline_mode = #tpu.pipeline_mode<synchronous>, transform_indices = @transform_3, window_bounds = array<i64: 144, 36>}, {pipeline_mode = #tpu.pipeline_mode<synchronous>, transform_indices = @transform_4, window_bounds = array<i64: 1, 36>}, {pipeline_mode = #tpu.pipeline_mode<synchronous>, transform_indices = @transform_5, window_bounds = array<i64: 36, 10>}, {pipeline_mode = #tpu.pipeline_mode<synchronous>, transform_indices = @transform_6, window_bounds = array<i64: 1, 10>}, {transform_indices = @transform_7, window_bounds = array<i64: 8, 10>}]} {
    %c0 = arith.constant 0 : index
    %c0_0 = arith.constant 0 : index
    %0 = vector.load %arg1[%c0, %c0_0] : memref<8x288xf32, #tpu.memory_space<vmem>>, vector<8x288xf32>
    %c0_1 = arith.constant 0 : index
    %c0_2 = arith.constant 0 : index
    %1 = vector.load %arg2[%c0_1, %c0_2] : memref<288x144xf32, #tpu.memory_space<vmem>>, vector<288x144xf32>
    %cst = arith.constant dense<0.000000e+00> : vector<8x144xf32>
    %2 = tpu.matmul %0, %1, %cst {dimension_numbers = #tpu.dot_dimension_numbers<[1], [0], [0], [1], [0, 0, 1, 1], [], []>} : vector<8x288xf32>, vector<288x144xf32>, vector<8x144xf32> -> vector<8x144xf32>
    %c0_3 = arith.constant 0 : index
    %c0_4 = arith.constant 0 : index
    %3 = vector.load %arg3[%c0_3, %c0_4] : memref<1x144xf32, #tpu.memory_space<vmem>>, vector<1x144xf32>
    %4 = vector.broadcast %3 : vector<1x144xf32> to vector<8x144xf32>
    %5 = arith.addf %2, %4 : vector<8x144xf32>
    %c0_5 = arith.constant 0 : index
    %c0_6 = arith.constant 0 : index
    %6 = vector.load %arg4[%c0_5, %c0_6] : memref<144x36xf32, #tpu.memory_space<vmem>>, vector<144x36xf32>
    %cst_7 = arith.constant dense<0.000000e+00> : vector<8x36xf32>
    %7 = tpu.matmul %5, %6, %cst_7 {dimension_numbers = #tpu.dot_dimension_numbers<[1], [0], [0], [1], [0, 0, 1, 1], [], []>} : vector<8x144xf32>, vector<144x36xf32>, vector<8x36xf32> -> vector<8x36xf32>
    %c0_8 = arith.constant 0 : index
    %c0_9 = arith.constant 0 : index
    %8 = vector.load %arg5[%c0_8, %c0_9] : memref<1x36xf32, #tpu.memory_space<vmem>>, vector<1x36xf32>
    %9 = vector.broadcast %8 : vector<1x36xf32> to vector<8x36xf32>
    %10 = arith.addf %7, %9 : vector<8x36xf32>
    %c0_10 = arith.constant 0 : index
    %c0_11 = arith.constant 0 : index
    %11 = vector.load %arg6[%c0_10, %c0_11] : memref<36x10xf32, #tpu.memory_space<vmem>>, vector<36x10xf32>
    %cst_12 = arith.constant dense<0.000000e+00> : vector<8x10xf32>
    %12 = tpu.matmul %10, %11, %cst_12 {dimension_numbers = #tpu.dot_dimension_numbers<[1], [0], [0], [1], [0, 0, 1, 1], [], []>} : vector<8x36xf32>, vector<36x10xf32>, vector<8x10xf32> -> vector<8x10xf32>
    %c0_13 = arith.constant 0 : index
    %c0_14 = arith.constant 0 : index
    %13 = vector.load %arg7[%c0_13, %c0_14] : memref<1x10xf32, #tpu.memory_space<vmem>>, vector<1x10xf32>
    %14 = vector.broadcast %13 : vector<1x10xf32> to vector<8x10xf32>
    %15 = arith.addf %12, %14 : vector<8x10xf32>
    %c0_15 = arith.constant 0 : index
    %c0_16 = arith.constant 0 : index
    %16 = vector.load %arg8[%c0_15, %c0_16] : memref<8x10xf32, #tpu.memory_space<vmem>>, vector<8x10xf32>
    tpu.vector_store %arg8[%c0_15, %c0_16], %15 {strides = array<i32>} : memref<8x10xf32, #tpu.memory_space<vmem>>, vector<8x10xf32>,
    return
  }
  func.func @transform_0(%arg0: i32) -> (i32, i32) {
    %c0_i32 = arith.constant 0 : i32
    %c0_i32_0 = arith.constant 0 : i32
    return %arg0, %c0_i32 : i32, i32
  }
  func.func @transform_1(%arg0: i32) -> (i32, i32) {
    %c0_i32 = arith.constant 0 : i32
    %c0_i32_0 = arith.constant 0 : i32
    %c0_i32_1 = arith.constant 0 : i32
    return %c0_i32, %c0_i32_0 : i32, i32
  }
  func.func @transform_2(%arg0: i32) -> (i32, i32) {
    %c0_i32 = arith.constant 0 : i32
    %c0_i32_0 = arith.constant 0 : i32
    %c0_i32_1 = arith.constant 0 : i32
    return %c0_i32, %c0_i32_0 : i32, i32
  }
  func.func @transform_3(%arg0: i32) -> (i32, i32) {
    %c0_i32 = arith.constant 0 : i32
    %c0_i32_0 = arith.constant 0 : i32
    %c0_i32_1 = arith.constant 0 : i32
    return %c0_i32, %c0_i32_0 : i32, i32
  }
  func.func @transform_4(%arg0: i32) -> (i32, i32) {
    %c0_i32 = arith.constant 0 : i32
    %c0_i32_0 = arith.constant 0 : i32
    %c0_i32_1 = arith.constant 0 : i32
    return %c0_i32, %c0_i32_0 : i32, i32
  }
  func.func @transform_5(%arg0: i32) -> (i32, i32) {
    %c0_i32 = arith.constant 0 : i32
    %c0_i32_0 = arith.constant 0 : i32
    %c0_i32_1 = arith.constant 0 : i32
    return %c0_i32, %c0_i32_0 : i32, i32
  }
  func.func @transform_6(%arg0: i32) -> (i32, i32) {
    %c0_i32 = arith.constant 0 : i32
    %c0_i32_0 = arith.constant 0 : i32
    %c0_i32_1 = arith.constant 0 : i32
    return %c0_i32, %c0_i32_0 : i32, i32
  }
  func.func @transform_7(%arg0: i32) -> (i32, i32) {
    %c0_i32 = arith.constant 0 : i32
    %c0_i32_0 = arith.constant 0 : i32
    return %arg0, %c0_i32 : i32, i32
  }
}

</mosaic_0001>

<llo_original>
// kernel: variant4_forward.4
$region0: #{variant4_forward.4}
  #allocation0 [shape = 'u32[]', space=smem, size = 0x4, offset = 0x4, fixed_abs, tag = 'smem constant byte address 0x4 - core index']
  #allocation1 [shape = 'u32[144,128]{1,0:T(1,128)}', space=vmem, size = 0x12000, scoped, tag = 'internal scratch']
  %s0 = inlined_call_operand.vmem [shape: f32[344,25], index: 0, kind: input, shape index: {}]
  %s1 = inlined_call_operand.vmem [shape: f32[344,25], index: 1, kind: input, shape index: {}]
  %s2 = inlined_call_operand.vmem [shape: f32[344,25], index: 2, kind: input, shape index: {}]
  %s3 = inlined_call_operand.vmem [shape: f32[344,25], index: 3, kind: input, shape index: {}]
  %s4 = inlined_call_operand.vmem [shape: f32[25,8], index: 4, kind: input, shape index: {}]
  %s5 = inlined_call_operand.vmem [shape: f32[1,8], index: 5, kind: input, shape index: {}]
  %s6 = inlined_call_operand.vmem [shape: f32[1,8], index: 6, kind: input, shape index: {}]
  %s7 = inlined_call_operand.vmem [shape: f32[1,8], index: 7, kind: input, shape index: {}]
  %s8 = inlined_call_operand.vmem [shape: f32[344,8], index: 8, kind: output, shape index: {}]
  %s9 = sld [smem:[#allocation0]]
  $region42: #{variant4_forward.4} parent=0
    _
  %s11 = ssub.s32 1, %s9
  %s12 = scalar_select 0, %s11, %s9
  // Predicated region
  $region2: #{variant4_forward.4} parent=0 // pred_check
    _
  $region3: #{variant4_forward.4} parent=0 // pred_check_branch
    %14 = sbr.rel (0) target = $region5
  $region4: #{variant4_forward.4} parent=0 // pred_region
    _
  $region5: #{variant4_forward.4} parent=0 // pred_fallthru
    _
  // Predicated region
  $region6: #{variant4_forward.4} parent=0 // pred_check
    _
  $region7: #{variant4_forward.4} parent=0 // pred_check_branch
    %16 = sbr.rel (0) target = $region9
  $region8: #{variant4_forward.4} parent=0 // pred_region
    _
  $region9: #{variant4_forward.4} parent=0 // pred_fallthru
    _
  // Predicated region
  $region10: #{variant4_forward.4} parent=0 // pred_check
    _
  $region11: #{variant4_forward.4} parent=0 // pred_check_branch
    %18 = sbr.rel (0) target = $region13
  $region12: #{variant4_forward.4} parent=0 // pred_region
    _
  $region13: #{variant4_forward.4} parent=0 // pred_fallthru
    _
  // Predicated region
  $region14: #{variant4_forward.4} parent=0 // pred_check
    _
  $region15: #{variant4_forward.4} parent=0 // pred_check_branch
    %20 = sbr.rel (0) target = $region17
  $region16: #{variant4_forward.4} parent=0 // pred_region
    _
  $region17: #{variant4_forward.4} parent=0 // pred_fallthru
    _
  // Predicated region
  $region18: #{variant4_forward.4} parent=0 // pred_check
    _
  $region19: #{variant4_forward.4} parent=0 // pred_check_branch
    %22 = sbr.rel (0) target = $region21
  $region20: #{variant4_forward.4} parent=0 // pred_region
    _
  $region21: #{variant4_forward.4} parent=0 // pred_fallthru
    _
  // Predicated region
  $region22: #{variant4_forward.4} parent=0 // pred_check
    _
  $region23: #{variant4_forward.4} parent=0 // pred_check_branch
    %24 = sbr.rel (0) target = $region25
  $region24: #{variant4_forward.4} parent=0 // pred_region
    _
  $region25: #{variant4_forward.4} parent=0 // pred_fallthru
    _
  // Predicated region
  $region26: #{variant4_forward.4} parent=0 // pred_check
    _
  $region27: #{variant4_forward.4} parent=0 // pred_check_branch
    %26 = sbr.rel (0) target = $region29
  $region28: #{variant4_forward.4} parent=0 // pred_region
    _
  $region29: #{variant4_forward.4} parent=0 // pred_fallthru
    _
  // Predicated region
  $region30: #{variant4_forward.4} parent=0 // pred_check
    _
  $region31: #{variant4_forward.4} parent=0 // pred_check_branch
    %28 = sbr.rel (0) target = $region33
  $region32: #{variant4_forward.4} parent=0 // pred_region
    _
  $region33: #{variant4_forward.4} parent=0 // pred_fallthru
    _
  %v29 = vld [vmem:[%s4] sm:$0xff]
  %v30 = vld [vmem:[%s4 + $0x8] sm:$0xff]
  %v31 = vld [vmem:[%s4 + $0x10] sm:$0xff]
  %v32 = vld [vmem:[%s4 + $0x18] sm:$0x1]
  %v33 = vld [vmem:[%s5] sm:$0x1]
  %v34 = vld [vmem:[%s0] sm:$0xff]
  %v35 = vld [vmem:[%s0 + $0x8] sm:$0xff]
  %v36 = vld [vmem:[%s0 + $0x10] sm:$0xff]
  %v37 = vld [vmem:[%s0 + $0x18] sm:$0xff]
  %v38 = vld [vmem:[%s0 + $0x20] sm:$0xff]
  %v39 = vld [vmem:[%s0 + $0x28] sm:$0xff]
  %v40 = vld [vmem:[%s0 + $0x30] sm:$0xff]
  %v41 = vld [vmem:[%s0 + $0x38] sm:$0xff]
  %v42 = vld [vmem:[%s0 + $0x40] sm:$0xff]
  %v43 = vld [vmem:[%s0 + $0x48] sm:$0xff]
  %v44 = vld [vmem:[%s0 + $0x50] sm:$0xff]
  %v45 = vld [vmem:[%s0 + $0x58] sm:$0xff]
  %v46 = vld [vmem:[%s0 + $0x60] sm:$0xff]
  %v47 = vld [vmem:[%s0 + $0x68] sm:$0xff]
  %v48 = vld [vmem:[%s0 + $0x70] sm:$0xff]
  %v49 = vld [vmem:[%s0 + $0x78] sm:$0xff]
  %v50 = vld [vmem:[%s0 + $0x80] sm:$0xff]
  %v51 = vld [vmem:[%s0 + $0x88] sm:$0xff]
  %v52 = vld [vmem:[%s0 + $0x90] sm:$0xff]
  %v53 = vld [vmem:[%s0 + $0x98] sm:$0xff]
  %v54 = vld [vmem:[%s0 + $0xa0] sm:$0xff]
  %v55 = vld [vmem:[%s0 + $0xa8] sm:$0xff]
  %v56 = vld [vmem:[%s0 + $0xb0] sm:$0xff]
  %v57 = vld [vmem:[%s0 + $0xb8] sm:$0xff]
  %v58 = vld [vmem:[%s0 + $0xc0] sm:$0xff]
  %v59 = vld [vmem:[%s0 + $0xc8] sm:$0xff]
  %v60 = vld [vmem:[%s0 + $0xd0] sm:$0xff]
  %v61 = vld [vmem:[%s0 + $0xd8] sm:$0xff]
  %v62 = vld [vmem:[%s0 + $0xe0] sm:$0xff]
  %v63 = vld [vmem:[%s0 + $0xe8] sm:$0xff]
  %v64 = vld [vmem:[%s0 + $0xf0] sm:$0xff]
  %v65 = vld [vmem:[%s0 + $0xf8] sm:$0xff]
  %v66 = vld [vmem:[%s0 + $0x100] sm:$0xff]
  %v67 = vld [vmem:[%s0 + $0x108] sm:$0xff]
  %v68 = vld [vmem:[%s0 + $0x110] sm:$0xff]
  %v69 = vld [vmem:[%s0 + $0x118] sm:$0xff]
  %v70 = vld [vmem:[%s0 + $0x120] sm:$0xff]
  %v71 = vld [vmem:[%s0 + $0x128] sm:$0xff]
  %v72 = vld [vmem:[%s0 + $0x130] sm:$0xff]
  %v73 = vld [vmem:[%s0 + $0x138] sm:$0xff]
  %v74 = vld [vmem:[%s0 + $0x140] sm:$0xff]
  %v75 = vld [vmem:[%s0 + $0x148] sm:$0xff]
  %v76 = vld [vmem:[%s0 + $0x150] sm:$0xff]
  %v78 = vlaneseq
  %v79 = vshrl.u32 %v78, 7
  %v80 = vsub.s32 0, %v79
  %v81 = vrot.slane %v33, %v80
  %vm83 = vcmask 203776
  %v85 = vsel %vm83, %v34, 0
  %v88 = vsel %vm83, %v35, 0
  %v91 = vsel %vm83, %v36, 0
  %v94 = vsel %vm83, %v37, 0
  %v97 = vsel %vm83, %v38, 0
  %v100 = vsel %vm83, %v39, 0
  %v103 = vsel %vm83, %v40, 0
  %v106 = vsel %vm83, %v41, 0
  %v109 = vsel %vm83, %v42, 0
  %v112 = vsel %vm83, %v43, 0
  %v115 = vsel %vm83, %v44, 0
  %v118 = vsel %vm83, %v45, 0
  %v121 = vsel %vm83, %v46, 0
  %v124 = vsel %vm83, %v47, 0
  %v127 = vsel %vm83, %v48, 0
  %v130 = vsel %vm83, %v49, 0
  %v133 = vsel %vm83, %v50, 0
  %v136 = vsel %vm83, %v51, 0
  %v139 = vsel %vm83, %v52, 0
  %v142 = vsel %vm83, %v53, 0
  %v145 = vsel %vm83, %v54, 0
  %v148 = vsel %vm83, %v55, 0
  %v151 = vsel %vm83, %v56, 0
  %v154 = vsel %vm83, %v57, 0
  %v157 = vsel %vm83, %v58, 0
  %v160 = vsel %vm83, %v59, 0
  %v163 = vsel %vm83, %v60, 0
  %v166 = vsel %vm83, %v61, 0
  %v169 = vsel %vm83, %v62, 0
  %v172 = vsel %vm83, %v63, 0
  %v175 = vsel %vm83, %v64, 0
  %v178 = vsel %vm83, %v65, 0
  %v181 = vsel %vm83, %v66, 0
  %v184 = vsel %vm83, %v67, 0
  %v187 = vsel %vm83, %v68, 0
  %v190 = vsel %vm83, %v69, 0
  %v193 = vsel %vm83, %v70, 0
  %v196 = vsel %vm83, %v71, 0
  %v199 = vsel %vm83, %v72, 0
  %v202 = vsel %vm83, %v73, 0
  %v205 = vsel %vm83, %v74, 0
  %v208 = vsel %vm83, %v75, 0
  %v211 = vsel %vm83, %v76, 0
  %vm213 = vcmask 1040384
  %v215 = vsel %vm213, %v32, 0
  %217 = vmatprep.subr.mxu0 0.0
  %218 = vmatpush1.msra.mxu0 %v29
  %219 = vmatprep.subr.mxu0 0.0
  %220 = vmatpush1.msra.mxu0 %v30
  %221 = vmatprep.subr.mxu0 0.0
  %222 = vmatpush1.msra.mxu0 %v31
  %223 = vmatprep.subr.mxu0 0.0
  %224 = vmatpush1.msra.mxu0 %v215
  %225 = vmatprep.subr.mxu0 0.0
  %226 = vmatpush1.msra.mxu0 0.0
  %227 = vmatprep.subr.mxu0 0.0
  %228 = vmatpush1.msra.mxu0 0.0
  %229 = vmatprep.subr.mxu0 0.0
  %230 = vmatpush1.msra.mxu0 0.0
  %231 = vmatprep.subr.mxu0 0.0
  %232 = vmatpush1.msra.mxu0 0.0
  %233 = vmatprep.subr.mxu0 0.0
  %234 = vmatpush1.msra.mxu0 0.0
  %235 = vmatprep.subr.mxu0 0.0
  %236 = vmatpush1.msra.mxu0 0.0
  %237 = vmatprep.subr.mxu0 0.0
  %238 = vmatpush1.msra.mxu0 0.0
  %239 = vmatprep.subr.mxu0 0.0
  %240 = vmatpush1.msra.mxu0 0.0
  %241 = vmatprep.subr.mxu0 0.0
  %242 = vmatpush1.msra.mxu0 0.0
  %243 = vmatprep.subr.mxu0 0.0
  %244 = vmatpush1.msra.mxu0 0.0
  %245 = vmatprep.subr.mxu0 0.0
  %246 = vmatpush1.msra.mxu0 0.0
  %247 = vmatprep.subr.mxu0 0.0
  %248 = vmatpush1.msra.mxu0 0.0
  %249 = vmatprep.subr.mxu0 0.0
  %250 = vmatpush1.msra.mxu0 0.0
  %251 = vmatprep.subr.mxu0 0.0
  %252 = vmatpush1.msra.mxu0 0.0
  %253 = vmatprep.subr.mxu0 0.0
  %254 = vmatpush1.msra.mxu0 0.0
  %255 = vmatprep.subr.mxu0 0.0
  %256 = vmatpush1.msra.mxu0 0.0
  %257 = vmatprep.subr.mxu0 0.0
  %258 = vmatpush1.msra.mxu0 0.0
  %259 = vmatprep.subr.mxu0 0.0
  %260 = vmatpush1.msra.mxu0 0.0
  %261 = vmatprep.subr.mxu0 0.0
  %262 = vmatpush1.msra.mxu0 0.0
  %263 = vmatprep.subr.mxu0 0.0
  %264 = vmatpush1.msra.mxu0 0.0
  %265 = vmatprep.subr.mxu0 0.0
  %266 = vmatpush1.msra.mxu0 0.0
  %267 = vmatprep.subr.mxu0 0.0
  %268 = vmatpush1.msra.mxu0 0.0
  %269 = vmatprep.subr.mxu0 0.0
  %270 = vmatpush1.msra.mxu0 0.0
  %271 = vmatprep.subr.mxu0 0.0
  %272 = vmatpush1.msra.mxu0 0.0
  %273 = vmatprep.subr.mxu0 0.0
  %274 = vmatpush1.msra.mxu0 0.0
  %275 = vmatprep.subr.mxu0 0.0
  %276 = vmatpush1.msra.mxu0 0.0
  %277 = vmatprep.subr.mxu0 0.0
  %278 = vmatpush1.msra.mxu0 0.0
  %279 = vmatprep.subr.mxu0 0.0
  %280 = vmatpush1.msra.mxu0 0.0
  %281 = vmatprep.mubr.f32.mxu0 0.0
  %282 = vmatmul.mubr.f32.gmra.mrb[0].mxu0 %v85
  %v283 = vpop.f32.mrb[0].mxu0
  %v284 = vadd.f32 %v81, %v283
  %v285 = vpop.f32.mrb[0].mxu0
  %286 = vmatprep.mubr.f32.mxu0 0.0
  %287 = vmatmul.mubr.f32.gmra.mrb[0].mxu0 %v88
  %v288 = vpop.f32.mrb[0].mxu0
  %v289 = vadd.f32 %v81, %v288
  %v290 = vpop.f32.mrb[0].mxu0
  %291 = vmatprep.mubr.f32.mxu0 0.0
  %292 = vmatmul.mubr.f32.gmra.mrb[0].mxu0 %v91
  %v293 = vpop.f32.mrb[0].mxu0
  %v294 = vadd.f32 %v81, %v293
  %v295 = vpop.f32.mrb[0].mxu0
  %296 = vmatprep.mubr.f32.mxu0 0.0
  %297 = vmatmul.mubr.f32.gmra.mrb[0].mxu0 %v94
  %v298 = vpop.f32.mrb[0].mxu0
  %v299 = vadd.f32 %v81, %v298
  %v300 = vpop.f32.mrb[0].mxu0
  %301 = vmatprep.mubr.f32.mxu0 0.0
  %302 = vmatmul.mubr.f32.gmra.mrb[0].mxu0 %v97
  %v303 = vpop.f32.mrb[0].mxu0
  %v304 = vadd.f32 %v81, %v303
  %v305 = vpop.f32.mrb[0].mxu0
  %306 = vmatprep.mubr.f32.mxu0 0.0
  %307 = vmatmul.mubr.f32.gmra.mrb[0].mxu0 %v100
  %v308 = vpop.f32.mrb[0].mxu0
  %v309 = vadd.f32 %v81, %v308
  %v310 = vpop.f32.mrb[0].mxu0
  %311 = vmatprep.mubr.f32.mxu0 0.0
  %312 = vmatmul.mubr.f32.gmra.mrb[0].mxu0 %v103
  %v313 = vpop.f32.mrb[0].mxu0
  %v314 = vadd.f32 %v81, %v313
  %v315 = vpop.f32.mrb[0].mxu0
  %316 = vmatprep.mubr.f32.mxu0 0.0
  %317 = vmatmul.mubr.f32.gmra.mrb[0].mxu0 %v106
  %v318 = vpop.f32.mrb[0].mxu0
  %v319 = vadd.f32 %v81, %v318
  %v320 = vpop.f32.mrb[0].mxu0
  %321 = vmatprep.mubr.f32.mxu0 0.0
  %322 = vmatmul.mubr.f32.gmra.mrb[0].mxu0 %v109
  %v323 = vpop.f32.mrb[0].mxu0
  %v324 = vadd.f32 %v81, %v323
  %v325 = vpop.f32.mrb[0].mxu0
  %326 = vmatprep.mubr.f32.mxu0 0.0
  %327 = vmatmul.mubr.f32.gmra.mrb[0].mxu0 %v112
  %v328 = vpop.f32.mrb[0].mxu0
  %v329 = vadd.f32 %v81, %v328
  %v330 = vpop.f32.mrb[0].mxu0
  %331 = vmatprep.mubr.f32.mxu0 0.0
  %332 = vmatmul.mubr.f32.gmra.mrb[0].mxu0 %v115
  %v333 = vpop.f32.mrb[0].mxu0
  %v334 = vadd.f32 %v81, %v333
  %v335 = vpop.f32.mrb[0].mxu0
  %336 = vmatprep.mubr.f32.mxu0 0.0
  %337 = vmatmul.mubr.f32.gmra.mrb[0].mxu0 %v118
  %v338 = vpop.f32.mrb[0].mxu0
  %v339 = vadd.f32 %v81, %v338
  %v340 = vpop.f32.mrb[0].mxu0
  %341 = vmatprep.mubr.f32.mxu0 0.0
  %342 = vmatmul.mubr.f32.gmra.mrb[0].mxu0 %v121
  %v343 = vpop.f32.mrb[0].mxu0
  %v344 = vadd.f32 %v81, %v343
  %v345 = vpop.f32.mrb[0].mxu0
  %346 = vmatprep.mubr.f32.mxu0 0.0
  %347 = vmatmul.mubr.f32.gmra.mrb[0].mxu0 %v124
  %v348 = vpop.f32.mrb[0].mxu0
  %v349 = vadd.f32 %v81, %v348
  %v350 = vpop.f32.mrb[0].mxu0
  %351 = vmatprep.mubr.f32.mxu0 0.0
  %352 = vmatmul.mubr.f32.gmra.mrb[0].mxu0 %v127
  %v353 = vpop.f32.mrb[0].mxu0
  %v354 = vadd.f32 %v81, %v353
  %v355 = vpop.f32.mrb[0].mxu0
  %356 = vmatprep.mubr.f32.mxu0 0.0
  %357 = vmatmul.mubr.f32.gmra.mrb[0].mxu0 %v130
  %v358 = vpop.f32.mrb[0].mxu0
  %v359 = vadd.f32 %v81, %v358
  %v360 = vpop.f32.mrb[0].mxu0
  %361 = vmatprep.mubr.f32.mxu0 0.0
  %362 = vmatmul.mubr.f32.gmra.mrb[0].mxu0 %v133
  %v363 = vpop.f32.mrb[0].mxu0
  %v364 = vadd.f32 %v81, %v363
  %v365 = vpop.f32.mrb[0].mxu0
  %366 = vmatprep.mubr.f32.mxu0 0.0
  %367 = vmatmul.mubr.f32.gmra.mrb[0].mxu0 %v136
  %v368 = vpop.f32.mrb[0].mxu0
  %v369 = vadd.f32 %v81, %v368
  %v370 = vpop.f32.mrb[0].mxu0
  %371 = vmatprep.mubr.f32.mxu0 0.0
  %372 = vmatmul.mubr.f32.gmra.mrb[0].mxu0 %v139
  %v373 = vpop.f32.mrb[0].mxu0
  %v374 = vadd.f32 %v81, %v373
  %v375 = vpop.f32.mrb[0].mxu0
  %376 = vmatprep.mubr.f32.mxu0 0.0
  %377 = vmatmul.mubr.f32.gmra.mrb[0].mxu0 %v142
  %v378 = vpop.f32.mrb[0].mxu0
  %v379 = vadd.f32 %v81, %v378
  %v380 = vpop.f32.mrb[0].mxu0
  %381 = vmatprep.mubr.f32.mxu0 0.0
  %382 = vmatmul.mubr.f32.gmra.mrb[0].mxu0 %v145
  %v383 = vpop.f32.mrb[0].mxu0
  %v384 = vadd.f32 %v81, %v383
  %v385 = vpop.f32.mrb[0].mxu0
  %386 = vmatprep.mubr.f32.mxu0 0.0
  %387 = vmatmul.mubr.f32.gmra.mrb[0].mxu0 %v148
  %v388 = vpop.f32.mrb[0].mxu0
  %v389 = vadd.f32 %v81, %v388
  %v390 = vpop.f32.mrb[0].mxu0
  %391 = vmatprep.mubr.f32.mxu0 0.0
  %392 = vmatmul.mubr.f32.gmra.mrb[0].mxu0 %v151
  %v393 = vpop.f32.mrb[0].mxu0
  %v394 = vadd.f32 %v81, %v393
  %v395 = vpop.f32.mrb[0].mxu0
  %396 = vmatprep.mubr.f32.mxu0 0.0
  %397 = vmatmul.mubr.f32.gmra.mrb[0].mxu0 %v154
  %v398 = vpop.f32.mrb[0].mxu0
  %v399 = vadd.f32 %v81, %v398
  %v400 = vpop.f32.mrb[0].mxu0
  %401 = vmatprep.mubr.f32.mxu0 0.0
  %402 = vmatmul.mubr.f32.gmra.mrb[0].mxu0 %v157
  %v403 = vpop.f32.mrb[0].mxu0
  %v404 = vadd.f32 %v81, %v403
  %v405 = vpop.f32.mrb[0].mxu0
  %406 = vmatprep.mubr.f32.mxu0 0.0
  %407 = vmatmul.mubr.f32.gmra.mrb[0].mxu0 %v160
  %v408 = vpop.f32.mrb[0].mxu0
  %v409 = vadd.f32 %v81, %v408
  %v410 = vpop.f32.mrb[0].mxu0
  %411 = vmatprep.mubr.f32.mxu0 0.0
  %412 = vmatmul.mubr.f32.gmra.mrb[0].mxu0 %v163
  %v413 = vpop.f32.mrb[0].mxu0
  %v414 = vadd.f32 %v81, %v413
  %v415 = vpop.f32.mrb[0].mxu0
  %416 = vmatprep.mubr.f32.mxu0 0.0
  %417 = vmatmul.mubr.f32.gmra.mrb[0].mxu0 %v166
  %v418 = vpop.f32.mrb[0].mxu0
  %v419 = vadd.f32 %v81, %v418
  %v420 = vpop.f32.mrb[0].mxu0
  %421 = vmatprep.mubr.f32.mxu0 0.0
  %422 = vmatmul.mubr.f32.gmra.mrb[0].mxu0 %v169
  %v423 = vpop.f32.mrb[0].mxu0
  %v424 = vadd.f32 %v81, %v423
  %v425 = vpop.f32.mrb[0].mxu0
  %426 = vmatprep.mubr.f32.mxu0 0.0
  %427 = vmatmul.mubr.f32.gmra.mrb[0].mxu0 %v172
  %v428 = vpop.f32.mrb[0].mxu0
  %v429 = vadd.f32 %v81, %v428
  %v430 = vpop.f32.mrb[0].mxu0
  %431 = vmatprep.mubr.f32.mxu0 0.0
  %432 = vmatmul.mubr.f32.gmra.mrb[0].mxu0 %v175
  %v433 = vpop.f32.mrb[0].mxu0
  %v434 = vadd.f32 %v81, %v433
  %v435 = vpop.f32.mrb[0].mxu0
  %436 = vmatprep.mubr.f32.mxu0 0.0
  %437 = vmatmul.mubr.f32.gmra.mrb[0].mxu0 %v178
  %v438 = vpop.f32.mrb[0].mxu0
  %v439 = vadd.f32 %v81, %v438
  %v440 = vpop.f32.mrb[0].mxu0
  %441 = vmatprep.mubr.f32.mxu0 0.0
  %442 = vmatmul.mubr.f32.gmra.mrb[0].mxu0 %v181
  %v443 = vpop.f32.mrb[0].mxu0
  %v444 = vadd.f32 %v81, %v443
  %v445 = vpop.f32.mrb[0].mxu0
  %446 = vmatprep.mubr.f32.mxu0 0.0
  %447 = vmatmul.mubr.f32.gmra.mrb[0].mxu0 %v184
  %v448 = vpop.f32.mrb[0].mxu0
  %v449 = vadd.f32 %v81, %v448
  %v450 = vpop.f32.mrb[0].mxu0
  %451 = vmatprep.mubr.f32.mxu0 0.0
  %452 = vmatmul.mubr.f32.gmra.mrb[0].mxu0 %v187
  %v453 = vpop.f32.mrb[0].mxu0
  %v454 = vadd.f32 %v81, %v453
  %v455 = vpop.f32.mrb[0].mxu0
  %456 = vmatprep.mubr.f32.mxu0 0.0
  %457 = vmatmul.mubr.f32.gmra.mrb[0].mxu0 %v190
  %v458 = vpop.f32.mrb[0].mxu0
  %v459 = vadd.f32 %v81, %v458
  %v460 = vpop.f32.mrb[0].mxu0
  %461 = vmatprep.mubr.f32.mxu0 0.0
  %462 = vmatmul.mubr.f32.gmra.mrb[0].mxu0 %v193
  %v463 = vpop.f32.mrb[0].mxu0
  %v464 = vadd.f32 %v81, %v463
  %v465 = vpop.f32.mrb[0].mxu0
  %466 = vmatprep.mubr.f32.mxu0 0.0
  %467 = vmatmul.mubr.f32.gmra.mrb[0].mxu0 %v196
  %v468 = vpop.f32.mrb[0].mxu0
  %v469 = vadd.f32 %v81, %v468
  %v470 = vpop.f32.mrb[0].mxu0
  %471 = vmatprep.mubr.f32.mxu0 0.0
  %472 = vmatmul.mubr.f32.gmra.mrb[0].mxu0 %v199
  %v473 = vpop.f32.mrb[0].mxu0
  %v474 = vadd.f32 %v81, %v473
  %v475 = vpop.f32.mrb[0].mxu0
  %476 = vmatprep.mubr.f32.mxu0 0.0
  %477 = vmatmul.mubr.f32.gmra.mrb[0].mxu0 %v202
  %v478 = vpop.f32.mrb[0].mxu0
  %v479 = vadd.f32 %v81, %v478
  %v480 = vpop.f32.mrb[0].mxu0
  %481 = vmatprep.mubr.f32.mxu0 0.0
  %482 = vmatmul.mubr.f32.gmra.mrb[0].mxu0 %v205
  %v483 = vpop.f32.mrb[0].mxu0
  %v484 = vadd.f32 %v81, %v483
  %v485 = vpop.f32.mrb[0].mxu0
  %486 = vmatprep.mubr.f32.mxu0 0.0
  %487 = vmatmul.mubr.f32.gmra.mrb[0].mxu0 %v208
  %v488 = vpop.f32.mrb[0].mxu0
  %v489 = vadd.f32 %v81, %v488
  %v490 = vpop.f32.mrb[0].mxu0
  %491 = vmatprep.mubr.f32.mxu0 0.0
  %492 = vmatmul.mubr.f32.gmra.mrb[0].mxu0 %v211
  %v493 = vpop.f32.mrb[0].mxu0
  %v494 = vadd.f32 %v81, %v493
  %v495 = vpop.f32.mrb[0].mxu0
  %496 = vdwg.mxu0
  %v497 = vmax.f32 %v284, 0.0
  %v498 = vmax.f32 %v289, 0.0
  %v499 = vmax.f32 %v294, 0.0
  %v500 = vmax.f32 %v299, 0.0
  %v501 = vmax.f32 %v304, 0.0
  %v502 = vmax.f32 %v309, 0.0
  %v503 = vmax.f32 %v314, 0.0
  %v504 = vmax.f32 %v319, 0.0
  %v505 = vmax.f32 %v324, 0.0
  %v506 = vmax.f32 %v329, 0.0
  %v507 = vmax.f32 %v334, 0.0
  %v508 = vmax.f32 %v339, 0.0
  %v509 = vmax.f32 %v344, 0.0
  %v510 = vmax.f32 %v349, 0.0
  %v511 = vmax.f32 %v354, 0.0
  %v512 = vmax.f32 %v359, 0.0
  %v513 = vmax.f32 %v364, 0.0
  %v514 = vmax.f32 %v369, 0.0
  %v515 = vmax.f32 %v374, 0.0
  %v516 = vmax.f32 %v379, 0.0
  %v517 = vmax.f32 %v384, 0.0
  %v518 = vmax.f32 %v389, 0.0
  %v519 = vmax.f32 %v394, 0.0
  %v520 = vmax.f32 %v399, 0.0
  %v521 = vmax.f32 %v404, 0.0
  %v522 = vmax.f32 %v409, 0.0
  %v523 = vmax.f32 %v414, 0.0
  %v524 = vmax.f32 %v419, 0.0
  %v525 = vmax.f32 %v424, 0.0
  %v526 = vmax.f32 %v429, 0.0
  %v527 = vmax.f32 %v434, 0.0
  %v528 = vmax.f32 %v439, 0.0
  %v529 = vmax.f32 %v444, 0.0
  %v530 = vmax.f32 %v449, 0.0
  %v531 = vmax.f32 %v454, 0.0
  %v532 = vmax.f32 %v459, 0.0
  %v533 = vmax.f32 %v464, 0.0
  %v534 = vmax.f32 %v469, 0.0
  %v535 = vmax.f32 %v474, 0.0
  %v536 = vmax.f32 %v479, 0.0
  %v537 = vmax.f32 %v484, 0.0
  %v538 = vmax.f32 %v489, 0.0
  %v539 = vmax.f32 %v494, 0.0
  %v540 = vld [vmem:[%s1] sm:$0xff]
  %v541 = vld [vmem:[%s1 + $0x8] sm:$0xff]
  %v542 = vld [vmem:[%s1 + $0x10] sm:$0xff]
  %v543 = vld [vmem:[%s1 + $0x18] sm:$0xff]
  %v544 = vld [vmem:[%s1 + $0x20] sm:$0xff]
  %v545 = vld [vmem:[%s1 + $0x28] sm:$0xff]
  %v546 = vld [vmem:[%s1 + $0x30] sm:$0xff]
  %v547 = vld [vmem:[%s1 + $0x38] sm:$0xff]
  %v548 = vld [vmem:[%s1 + $0x40] sm:$0xff]
  %v549 = vld [vmem:[%s1 + $0x48] sm:$0xff]
  %v550 = vld [vmem:[%s1 + $0x50] sm:$0xff]
  %v551 = vld [vmem:[%s1 + $0x58] sm:$0xff]
  %v552 = vld [vmem:[%s1 + $0x60] sm:$0xff]
  %v553 = vld [vmem:[%s1 + $0x68] sm:$0xff]
  %v554 = vld [vmem:[%s1 + $0x70] sm:$0xff]
  %v555 = vld [vmem:[%s1 + $0x78] sm:$0xff]
  %v556 = vld [vmem:[%s1 + $0x80] sm:$0xff]
  %v557 = vld [vmem:[%s1 + $0x88] sm:$0xff]
  %v558 = vld [vmem:[%s1 + $0x90] sm:$0xff]
  %v559 = vld [vmem:[%s1 + $0x98] sm:$0xff]
  %v560 = vld [vmem:[%s1 + $0xa0] sm:$0xff]
  %v561 = vld [vmem:[%s1 + $0xa8] sm:$0xff]
  %v562 = vld [vmem:[%s1 + $0xb0] sm:$0xff]
  %v563 = vld [vmem:[%s1 + $0xb8] sm:$0xff]
  %v564 = vld [vmem:[%s1 + $0xc0] sm:$0xff]
  %v565 = vld [vmem:[%s1 + $0xc8] sm:$0xff]
  %v566 = vld [vmem:[%s1 + $0xd0] sm:$0xff]
  %v567 = vld [vmem:[%s1 + $0xd8] sm:$0xff]
  %v568 = vld [vmem:[%s1 + $0xe0] sm:$0xff]
  %v569 = vld [vmem:[%s1 + $0xe8] sm:$0xff]
  %v570 = vld [vmem:[%s1 + $0xf0] sm:$0xff]
  %v571 = vld [vmem:[%s1 + $0xf8] sm:$0xff]
  %v572 = vld [vmem:[%s1 + $0x100] sm:$0xff]
  %v573 = vld [vmem:[%s1 + $0x108] sm:$0xff]
  %v574 = vld [vmem:[%s1 + $0x110] sm:$0xff]
  %v575 = vld [vmem:[%s1 + $0x118] sm:$0xff]
  %v576 = vld [vmem:[%s1 + $0x120] sm:$0xff]
  %v577 = vld [vmem:[%s1 + $0x128] sm:$0xff]
  %v578 = vld [vmem:[%s1 + $0x130] sm:$0xff]
  %v579 = vld [vmem:[%s1 + $0x138] sm:$0xff]
  %v580 = vld [vmem:[%s1 + $0x140] sm:$0xff]
  %v581 = vld [vmem:[%s1 + $0x148] sm:$0xff]
  %v582 = vld [vmem:[%s1 + $0x150] sm:$0xff]
  %v584 = vsel %vm83, %v540, 0
  %v587 = vsel %vm83, %v541, 0
  %v590 = vsel %vm83, %v542, 0
  %v593 = vsel %vm83, %v543, 0
  %v596 = vsel %vm83, %v544, 0
  %v599 = vsel %vm83, %v545, 0
  %v602 = vsel %vm83, %v546, 0
  %v605 = vsel %vm83, %v547, 0
  %v608 = vsel %vm83, %v548, 0
  %v611 = vsel %vm83, %v549, 0
  %v614 = vsel %vm83, %v550, 0
  %v617 = vsel %vm83, %v551, 0
  %v620 = vsel %vm83, %v552, 0
  %v623 = vsel %vm83, %v553, 0
  %v626 = vsel %vm83, %v554, 0
  %v629 = vsel %vm83, %v555, 0
  %v632 = vsel %vm83, %v556, 0
  %v635 = vsel %vm83, %v557, 0
  %v638 = vsel %vm83, %v558, 0
  %v641 = vsel %vm83, %v559, 0
  %v644 = vsel %vm83, %v560, 0
  %v647 = vsel %vm83, %v561, 0
  %v650 = vsel %vm83, %v562, 0
  %v653 = vsel %vm83, %v563, 0
  %v656 = vsel %vm83, %v564, 0
  %v659 = vsel %vm83, %v565, 0
  %v662 = vsel %vm83, %v566, 0
  %v665 = vsel %vm83, %v567, 0
  %v668 = vsel %vm83, %v568, 0
  %v671 = vsel %vm83, %v569, 0
  %v674 = vsel %vm83, %v570, 0
  %v677 = vsel %vm83, %v571, 0
  %v680 = vsel %vm83, %v572, 0
  %v683 = vsel %vm83, %v573, 0
  %v686 = vsel %vm83, %v574, 0
  %v689 = vsel %vm83, %v575, 0
  %v692 = vsel %vm83, %v576, 0
  %v695 = vsel %vm83, %v577, 0
  %v698 = vsel %vm83, %v578, 0
  %v701 = vsel %vm83, %v579, 0
  %v704 = vsel %vm83, %v580, 0
  %v707 = vsel %vm83, %v581, 0
  %v710 = vsel %vm83, %v582, 0
  %712 = vmatprep.subr.mxu0 0.0
  %713 = vmatpush1.msra.mxu0 %v29
  %714 = vmatprep.subr.mxu0 0.0
  %715 = vmatpush1.msra.mxu0 %v30
  %716 = vmatprep.subr.mxu0 0.0
  %717 = vmatpush1.msra.mxu0 %v31
  %718 = vmatprep.subr.mxu0 0.0
  %719 = vmatpush1.msra.mxu0 %v215
  %720 = vmatprep.subr.mxu0 0.0
  %721 = vmatpush1.msra.mxu0 0.0
  %722 = vmatprep.subr.mxu0 0.0
  %723 = vmatpush1.msra.mxu0 0.0
  %724 = vmatprep.subr.mxu0 0.0
  %725 = vmatpush1.msra.mxu0 0.0
  %726 = vmatprep.subr.mxu0 0.0
  %727 = vmatpush1.msra.mxu0 0.0
  %728 = vmatprep.subr.mxu0 0.0
  %729 = vmatpush1.msra.mxu0 0.0
  %730 = vmatprep.subr.mxu0 0.0
  %731 = vmatpush1.msra.mxu0 0.0
  %732 = vmatprep.subr.mxu0 0.0
  %733 = vmatpush1.msra.mxu0 0.0
  %734 = vmatprep.subr.mxu0 0.0
  %735 = vmatpush1.msra.mxu0 0.0
  %736 = vmatprep.subr.mxu0 0.0
  %737 = vmatpush1.msra.mxu0 0.0
  %738 = vmatprep.subr.mxu0 0.0
  %739 = vmatpush1.msra.mxu0 0.0
  %740 = vmatprep.subr.mxu0 0.0
  %741 = vmatpush1.msra.mxu0 0.0
  %742 = vmatprep.subr.mxu0 0.0
  %743 = vmatpush1.msra.mxu0 0.0
  %744 = vmatprep.subr.mxu0 0.0
  %745 = vmatpush1.msra.mxu0 0.0
  %746 = vmatprep.subr.mxu0 0.0
  %747 = vmatpush1.msra.mxu0 0.0
  %748 = vmatprep.subr.mxu0 0.0
  %749 = vmatpush1.msra.mxu0 0.0
  %750 = vmatprep.subr.mxu0 0.0
  %751 = vmatpush1.msra.mxu0 0.0
  %752 = vmatprep.subr.mxu0 0.0
  %753 = vmatpush1.msra.mxu0 0.0
  %754 = vmatprep.subr.mxu0 0.0
  %755 = vmatpush1.msra.mxu0 0.0
  %756 = vmatprep.subr.mxu0 0.0
  %757 = vmatpush1.msra.mxu0 0.0
  %758 = vmatprep.subr.mxu0 0.0
  %759 = vmatpush1.msra.mxu0 0.0
  %760 = vmatprep.subr.mxu0 0.0
  %761 = vmatpush1.msra.mxu0 0.0
  %762 = vmatprep.subr.mxu0 0.0
  %763 = vmatpush1.msra.mxu0 0.0
  %764 = vmatprep.subr.mxu0 0.0
  %765 = vmatpush1.msra.mxu0 0.0
  %766 = vmatprep.subr.mxu0 0.0
  %767 = vmatpush1.msra.mxu0 0.0
  %768 = vmatprep.subr.mxu0 0.0
  %769 = vmatpush1.msra.mxu0 0.0
  %770 = vmatprep.subr.mxu0 0.0
  %771 = vmatpush1.msra.mxu0 0.0
  %772 = vmatprep.subr.mxu0 0.0
  %773 = vmatpush1.msra.mxu0 0.0
  %774 = vmatprep.subr.mxu0 0.0
  %775 = vmatpush1.msra.mxu0 0.0
  %776 = vmatprep.mubr.f32.mxu0 0.0
  %777 = vmatmul.mubr.f32.gmra.mrb[0].mxu0 %v584
  %v778 = vpop.f32.mrb[0].mxu0
  %v779 = vadd.f32 %v81, %v778
  %v780 = vpop.f32.mrb[0].mxu0
  %781 = vmatprep.mubr.f32.mxu0 0.0
  %782 = vmatmul.mubr.f32.gmra.mrb[0].mxu0 %v587
  %v783 = vpop.f32.mrb[0].mxu0
  %v784 = vadd.f32 %v81, %v783
  %v785 = vpop.f32.mrb[0].mxu0
  %786 = vmatprep.mubr.f32.mxu0 0.0
  %787 = vmatmul.mubr.f32.gmra.mrb[0].mxu0 %v590
  %v788 = vpop.f32.mrb[0].mxu0
  %v789 = vadd.f32 %v81, %v788
  %v790 = vpop.f32.mrb[0].mxu0
  %791 = vmatprep.mubr.f32.mxu0 0.0
  %792 = vmatmul.mubr.f32.gmra.mrb[0].mxu0 %v593
  %v793 = vpop.f32.mrb[0].mxu0
  %v794 = vadd.f32 %v81, %v793
  %v795 = vpop.f32.mrb[0].mxu0
  %796 = vmatprep.mubr.f32.mxu0 0.0
  %797 = vmatmul.mubr.f32.gmra.mrb[0].mxu0 %v596
  %v798 = vpop.f32.mrb[0].mxu0
  %v799 = vadd.f32 %v81, %v798
  %v800 = vpop.f32.mrb[0].mxu0
  %801 = vmatprep.mubr.f32.mxu0 0.0
  %802 = vmatmul.mubr.f32.gmra.mrb[0].mxu0 %v599
  %v803 = vpop.f32.mrb[0].mxu0
  %v804 = vadd.f32 %v81, %v803
  %v805 = vpop.f32.mrb[0].mxu0
  %806 = vmatprep.mubr.f32.mxu0 0.0
  %807 = vmatmul.mubr.f32.gmra.mrb[0].mxu0 %v602
  %v808 = vpop.f32.mrb[0].mxu0
  %v809 = vadd.f32 %v81, %v808
  %v810 = vpop.f32.mrb[0].mxu0
  %811 = vmatprep.mubr.f32.mxu0 0.0
  %812 = vmatmul.mubr.f32.gmra.mrb[0].mxu0 %v605
  %v813 = vpop.f32.mrb[0].mxu0
  %v814 = vadd.f32 %v81, %v813
  %v815 = vpop.f32.mrb[0].mxu0
  %816 = vmatprep.mubr.f32.mxu0 0.0
  %817 = vmatmul.mubr.f32.gmra.mrb[0].mxu0 %v608
  %v818 = vpop.f32.mrb[0].mxu0
  %v819 = vadd.f32 %v81, %v818
  %v820 = vpop.f32.mrb[0].mxu0
  %821 = vmatprep.mubr.f32.mxu0 0.0
  %822 = vmatmul.mubr.f32.gmra.mrb[0].mxu0 %v611
  %v823 = vpop.f32.mrb[0].mxu0
  %v824 = vadd.f32 %v81, %v823
  %v825 = vpop.f32.mrb[0].mxu0
  %826 = vmatprep.mubr.f32.mxu0 0.0
  %827 = vmatmul.mubr.f32.gmra.mrb[0].mxu0 %v614
  %v828 = vpop.f32.mrb[0].mxu0
  %v829 = vadd.f32 %v81, %v828
  %v830 = vpop.f32.mrb[0].mxu0
  %831 = vmatprep.mubr.f32.mxu0 0.0
  %832 = vmatmul.mubr.f32.gmra.mrb[0].mxu0 %v617
  %v833 = vpop.f32.mrb[0].mxu0
  %v834 = vadd.f32 %v81, %v833
  %v835 = vpop.f32.mrb[0].mxu0
  %836 = vmatprep.mubr.f32.mxu0 0.0
  %837 = vmatmul.mubr.f32.gmra.mrb[0].mxu0 %v620
  %v838 = vpop.f32.mrb[0].mxu0
  %v839 = vadd.f32 %v81, %v838
  %v840 = vpop.f32.mrb[0].mxu0
  %841 = vmatprep.mubr.f32.mxu0 0.0
  %842 = vmatmul.mubr.f32.gmra.mrb[0].mxu0 %v623
  %v843 = vpop.f32.mrb[0].mxu0
  %v844 = vadd.f32 %v81, %v843
  %v845 = vpop.f32.mrb[0].mxu0
  %846 = vmatprep.mubr.f32.mxu0 0.0
  %847 = vmatmul.mubr.f32.gmra.mrb[0].mxu0 %v626
  %v848 = vpop.f32.mrb[0].mxu0
  %v849 = vadd.f32 %v81, %v848
  %v850 = vpop.f32.mrb[0].mxu0
  %851 = vmatprep.mubr.f32.mxu0 0.0
  %852 = vmatmul.mubr.f32.gmra.mrb[0].mxu0 %v629
  %v853 = vpop.f32.mrb[0].mxu0
  %v854 = vadd.f32 %v81, %v853
  %v855 = vpop.f32.mrb[0].mxu0
  %856 = vmatprep.mubr.f32.mxu0 0.0
  %857 = vmatmul.mubr.f32.gmra.mrb[0].mxu0 %v632
  %v858 = vpop.f32.mrb[0].mxu0
  %v859 = vadd.f32 %v81, %v858
  %v860 = vpop.f32.mrb[0].mxu0
  %861 = vmatprep.mubr.f32.mxu0 0.0
  %862 = vmatmul.mubr.f32.gmra.mrb[0].mxu0 %v635
  %v863 = vpop.f32.mrb[0].mxu0
  %v864 = vadd.f32 %v81, %v863
  %v865 = vpop.f32.mrb[0].mxu0
  %866 = vmatprep.mubr.f32.mxu0 0.0
  %867 = vmatmul.mubr.f32.gmra.mrb[0].mxu0 %v638
  %v868 = vpop.f32.mrb[0].mxu0
  %v869 = vadd.f32 %v81, %v868
  %v870 = vpop.f32.mrb[0].mxu0
  %871 = vmatprep.mubr.f32.mxu0 0.0
  %872 = vmatmul.mubr.f32.gmra.mrb[0].mxu0 %v641
  %v873 = vpop.f32.mrb[0].mxu0
  %v874 = vadd.f32 %v81, %v873
  %v875 = vpop.f32.mrb[0].mxu0
  %876 = vmatprep.mubr.f32.mxu0 0.0
  %877 = vmatmul.mubr.f32.gmra.mrb[0].mxu0 %v644
  %v878 = vpop.f32.mrb[0].mxu0
  %v879 = vadd.f32 %v81, %v878
  %v880 = vpop.f32.mrb[0].mxu0
  %881 = vmatprep.mubr.f32.mxu0 0.0
  %882 = vmatmul.mubr.f32.gmra.mrb[0].mxu0 %v647
  %v883 = vpop.f32.mrb[0].mxu0
  %v884 = vadd.f32 %v81, %v883
  %v885 = vpop.f32.mrb[0].mxu0
  %886 = vmatprep.mubr.f32.mxu0 0.0
  %887 = vmatmul.mubr.f32.gmra.mrb[0].mxu0 %v650
  %v888 = vpop.f32.mrb[0].mxu0
  %v889 = vadd.f32 %v81, %v888
  %v890 = vpop.f32.mrb[0].mxu0
  %891 = vmatprep.mubr.f32.mxu0 0.0
  %892 = vmatmul.mubr.f32.gmra.mrb[0].mxu0 %v653
  %v893 = vpop.f32.mrb[0].mxu0
  %v894 = vadd.f32 %v81, %v893
  %v895 = vpop.f32.mrb[0].mxu0
  %896 = vmatprep.mubr.f32.mxu0 0.0
  %897 = vmatmul.mubr.f32.gmra.mrb[0].mxu0 %v656
  %v898 = vpop.f32.mrb[0].mxu0
  %v899 = vadd.f32 %v81, %v898
  %v900 = vpop.f32.mrb[0].mxu0
  %901 = vmatprep.mubr.f32.mxu0 0.0
  %902 = vmatmul.mubr.f32.gmra.mrb[0].mxu0 %v659
  %v903 = vpop.f32.mrb[0].mxu0
  %v904 = vadd.f32 %v81, %v903
  %v905 = vpop.f32.mrb[0].mxu0
  %906 = vmatprep.mubr.f32.mxu0 0.0
  %907 = vmatmul.mubr.f32.gmra.mrb[0].mxu0 %v662
  %v908 = vpop.f32.mrb[0].mxu0
  %v909 = vadd.f32 %v81, %v908
  %v910 = vpop.f32.mrb[0].mxu0
  %911 = vmatprep.mubr.f32.mxu0 0.0
  %912 = vmatmul.mubr.f32.gmra.mrb[0].mxu0 %v665
  %v913 = vpop.f32.mrb[0].mxu0
  %v914 = vadd.f32 %v81, %v913
  %v915 = vpop.f32.mrb[0].mxu0
  %916 = vmatprep.mubr.f32.mxu0 0.0
  %917 = vmatmul.mubr.f32.gmra.mrb[0].mxu0 %v668
  %v918 = vpop.f32.mrb[0].mxu0
  %v919 = vadd.f32 %v81, %v918
  %v920 = vpop.f32.mrb[0].mxu0
  %921 = vmatprep.mubr.f32.mxu0 0.0
  %922 = vmatmul.mubr.f32.gmra.mrb[0].mxu0 %v671
  %v923 = vpop.f32.mrb[0].mxu0
  %v924 = vadd.f32 %v81, %v923
  %v925 = vpop.f32.mrb[0].mxu0
  %926 = vmatprep.mubr.f32.mxu0 0.0
  %927 = vmatmul.mubr.f32.gmra.mrb[0].mxu0 %v674
  %v928 = vpop.f32.mrb[0].mxu0
  %v929 = vadd.f32 %v81, %v928
  %v930 = vpop.f32.mrb[0].mxu0
  %931 = vmatprep.mubr.f32.mxu0 0.0
  %932 = vmatmul.mubr.f32.gmra.mrb[0].mxu0 %v677
  %v933 = vpop.f32.mrb[0].mxu0
  %v934 = vadd.f32 %v81, %v933
  %v935 = vpop.f32.mrb[0].mxu0
  %936 = vmatprep.mubr.f32.mxu0 0.0
  %937 = vmatmul.mubr.f32.gmra.mrb[0].mxu0 %v680
  %v938 = vpop.f32.mrb[0].mxu0
  %v939 = vadd.f32 %v81, %v938
  %v940 = vpop.f32.mrb[0].mxu0
  %941 = vmatprep.mubr.f32.mxu0 0.0
  %942 = vmatmul.mubr.f32.gmra.mrb[0].mxu0 %v683
  %v943 = vpop.f32.mrb[0].mxu0
  %v944 = vadd.f32 %v81, %v943
  %v945 = vpop.f32.mrb[0].mxu0
  %946 = vmatprep.mubr.f32.mxu0 0.0
  %947 = vmatmul.mubr.f32.gmra.mrb[0].mxu0 %v686
  %v948 = vpop.f32.mrb[0].mxu0
  %v949 = vadd.f32 %v81, %v948
  %v950 = vpop.f32.mrb[0].mxu0
  %951 = vmatprep.mubr.f32.mxu0 0.0
  %952 = vmatmul.mubr.f32.gmra.mrb[0].mxu0 %v689
  %v953 = vpop.f32.mrb[0].mxu0
  %v954 = vadd.f32 %v81, %v953
  %v955 = vpop.f32.mrb[0].mxu0
  %956 = vmatprep.mubr.f32.mxu0 0.0
  %957 = vmatmul.mubr.f32.gmra.mrb[0].mxu0 %v692
  %v958 = vpop.f32.mrb[0].mxu0
  %v959 = vadd.f32 %v81, %v958
  %v960 = vpop.f32.mrb[0].mxu0
  %961 = vmatprep.mubr.f32.mxu0 0.0
  %962 = vmatmul.mubr.f32.gmra.mrb[0].mxu0 %v695
  %v963 = vpop.f32.mrb[0].mxu0
  %v964 = vadd.f32 %v81, %v963
  %v965 = vpop.f32.mrb[0].mxu0
  %966 = vmatprep.mubr.f32.mxu0 0.0
  %967 = vmatmul.mubr.f32.gmra.mrb[0].mxu0 %v698
  %v968 = vpop.f32.mrb[0].mxu0
  %v969 = vadd.f32 %v81, %v968
  %v970 = vpop.f32.mrb[0].mxu0
  %971 = vmatprep.mubr.f32.mxu0 0.0
  %972 = vmatmul.mubr.f32.gmra.mrb[0].mxu0 %v701
  %v973 = vpop.f32.mrb[0].mxu0
  %v974 = vadd.f32 %v81, %v973
  %v975 = vpop.f32.mrb[0].mxu0
  %976 = vmatprep.mubr.f32.mxu0 0.0
  %977 = vmatmul.mubr.f32.gmra.mrb[0].mxu0 %v704
  %v978 = vpop.f32.mrb[0].mxu0
  %v979 = vadd.f32 %v81, %v978
  %v980 = vpop.f32.mrb[0].mxu0
  %981 = vmatprep.mubr.f32.mxu0 0.0
  %982 = vmatmul.mubr.f32.gmra.mrb[0].mxu0 %v707
  %v983 = vpop.f32.mrb[0].mxu0
  %v984 = vadd.f32 %v81, %v983
  %v985 = vpop.f32.mrb[0].mxu0
  %986 = vmatprep.mubr.f32.mxu0 0.0
  %987 = vmatmul.mubr.f32.gmra.mrb[0].mxu0 %v710
  %v988 = vpop.f32.mrb[0].mxu0
  %v989 = vadd.f32 %v81, %v988
  %v990 = vpop.f32.mrb[0].mxu0
  %991 = vdwg.mxu0
  %v992 = vmax.f32 %v779, 0.0
  %v993 = vmax.f32 %v784, 0.0
  %v994 = vmax.f32 %v789, 0.0
  %v995 = vmax.f32 %v794, 0.0
  %v996 = vmax.f32 %v799, 0.0
  %v997 = vmax.f32 %v804, 0.0
  %v998 = vmax.f32 %v809, 0.0
  %v999 = vmax.f32 %v814, 0.0
  %v1000 = vmax.f32 %v819, 0.0
  %v1001 = vmax.f32 %v824, 0.0
  %v1002 = vmax.f32 %v829, 0.0
  %v1003 = vmax.f32 %v834, 0.0
  %v1004 = vmax.f32 %v839, 0.0
  %v1005 = vmax.f32 %v844, 0.0
  %v1006 = vmax.f32 %v849, 0.0
  %v1007 = vmax.f32 %v854, 0.0
  %v1008 = vmax.f32 %v859, 0.0
  %v1009 = vmax.f32 %v864, 0.0
  %v1010 = vmax.f32 %v869, 0.0
  %v1011 = vmax.f32 %v874, 0.0
  %v1012 = vmax.f32 %v879, 0.0
  %v1013 = vmax.f32 %v884, 0.0
  %v1014 = vmax.f32 %v889, 0.0
  %v1015 = vmax.f32 %v894, 0.0
  %v1016 = vmax.f32 %v899, 0.0
  %v1017 = vmax.f32 %v904, 0.0
  %v1018 = vmax.f32 %v909, 0.0
  %v1019 = vmax.f32 %v914, 0.0
  %v1020 = vmax.f32 %v919, 0.0
  %v1021 = vmax.f32 %v924, 0.0
  %v1022 = vmax.f32 %v929, 0.0
  %v1023 = vmax.f32 %v934, 0.0
  %v1024 = vmax.f32 %v939, 0.0
  %v1025 = vmax.f32 %v944, 0.0
  %v1026 = vmax.f32 %v949, 0.0
  %v1027 = vmax.f32 %v954, 0.0
  %v1028 = vmax.f32 %v959, 0.0
  %v1029 = vmax.f32 %v964, 0.0
  %v1030 = vmax.f32 %v969, 0.0
  %v1031 = vmax.f32 %v974, 0.0
  %v1032 = vmax.f32 %v979, 0.0
  %v1033 = vmax.f32 %v984, 0.0
  %v1034 = vmax.f32 %v989, 0.0
  %v1035 = vld [vmem:[%s2] sm:$0xff]
  %v1036 = vld [vmem:[%s2 + $0x8] sm:$0xff]
  %v1037 = vld [vmem:[%s2 + $0x10] sm:$0xff]
  %v1038 = vld [vmem:[%s2 + $0x18] sm:$0xff]
  %v1039 = vld [vmem:[%s2 + $0x20] sm:$0xff]
  %v1040 = vld [vmem:[%s2 + $0x28] sm:$0xff]
  %v1041 = vld [vmem:[%s2 + $0x30] sm:$0xff]
  %v1042 = vld [vmem:[%s2 + $0x38] sm:$0xff]
  %v1043 = vld [vmem:[%s2 + $0x40] sm:$0xff]
  %v1044 = vld [vmem:[%s2 + $0x48] sm:$0xff]
  %v1045 = vld [vmem:[%s2 + $0x50] sm:$0xff]
  %v1046 = vld [vmem:[%s2 + $0x58] sm:$0xff]
  %v1047 = vld [vmem:[%s2 + $0x60] sm:$0xff]
  %v1048 = vld [vmem:[%s2 + $0x68] sm:$0xff]
  %v1049 = vld [vmem:[%s2 + $0x70] sm:$0xff]
  %v1050 = vld [vmem:[%s2 + $0x78] sm:$0xff]
  %v1051 = vld [vmem:[%s2 + $0x80] sm:$0xff]
  %v1052 = vld [vmem:[%s2 + $0x88] sm:$0xff]
  %v1053 = vld [vmem:[%s2 + $0x90] sm:$0xff]
  %v1054 = vld [vmem:[%s2 + $0x98] sm:$0xff]
  %v1055 = vld [vmem:[%s2 + $0xa0] sm:$0xff]
  %v1056 = vld [vmem:[%s2 + $0xa8] sm:$0xff]
  %v1057 = vld [vmem:[%s2 + $0xb0] sm:$0xff]
  %v1058 = vld [vmem:[%s2 + $0xb8] sm:$0xff]
  %v1059 = vld [vmem:[%s2 + $0xc0] sm:$0xff]
  %v1060 = vld [vmem:[%s2 + $0xc8] sm:$0xff]
  %v1061 = vld [vmem:[%s2 + $0xd0] sm:$0xff]
  %v1062 = vld [vmem:[%s2 + $0xd8] sm:$0xff]
  %v1063 = vld [vmem:[%s2 + $0xe0] sm:$0xff]
  %v1064 = vld [vmem:[%s2 + $0xe8] sm:$0xff]
  %v1065 = vld [vmem:[%s2 + $0xf0] sm:$0xff]
  %v1066 = vld [vmem:[%s2 + $0xf8] sm:$0xff]
  %v1067 = vld [vmem:[%s2 + $0x100] sm:$0xff]
  %v1068 = vld [vmem:[%s2 + $0x108] sm:$0xff]
  %v1069 = vld [vmem:[%s2 + $0x110] sm:$0xff]
  %v1070 = vld [vmem:[%s2 + $0x118] sm:$0xff]
  %v1071 = vld [vmem:[%s2 + $0x120] sm:$0xff]
  %v1072 = vld [vmem:[%s2 + $0x128] sm:$0xff]
  %v1073 = vld [vmem:[%s2 + $0x130] sm:$0xff]
  %v1074 = vld [vmem:[%s2 + $0x138] sm:$0xff]
  %v1075 = vld [vmem:[%s2 + $0x140] sm:$0xff]
  %v1076 = vld [vmem:[%s2 + $0x148] sm:$0xff]
  %v1077 = vld [vmem:[%s2 + $0x150] sm:$0xff]
  %v1079 = vsel %vm83, %v1035, 0
  %v1082 = vsel %vm83, %v1036, 0
  %v1085 = vsel %vm83, %v1037, 0
  %v1088 = vsel %vm83, %v1038, 0
  %v1091 = vsel %vm83, %v1039, 0
  %v1094 = vsel %vm83, %v1040, 0
  %v1097 = vsel %vm83, %v1041, 0
  %v1100 = vsel %vm83, %v1042, 0
  %v1103 = vsel %vm83, %v1043, 0
  %v1106 = vsel %vm83, %v1044, 0
  %v1109 = vsel %vm83, %v1045, 0
  %v1112 = vsel %vm83, %v1046, 0
  %v1115 = vsel %vm83, %v1047, 0
  %v1118 = vsel %vm83, %v1048, 0
  %v1121 = vsel %vm83, %v1049, 0
  %v1124 = vsel %vm83, %v1050, 0
  %v1127 = vsel %vm83, %v1051, 0
  %v1130 = vsel %vm83, %v1052, 0
  %v1133 = vsel %vm83, %v1053, 0
  %v1136 = vsel %vm83, %v1054, 0
  %v1139 = vsel %vm83, %v1055, 0
  %v1142 = vsel %vm83, %v1056, 0
  %v1145 = vsel %vm83, %v1057, 0
  %v1148 = vsel %vm83, %v1058, 0
  %v1151 = vsel %vm83, %v1059, 0
  %v1154 = vsel %vm83, %v1060, 0
  %v1157 = vsel %vm83, %v1061, 0
  %v1160 = vsel %vm83, %v1062, 0
  %v1163 = vsel %vm83, %v1063, 0
  %v1166 = vsel %vm83, %v1064, 0
  %v1169 = vsel %vm83, %v1065, 0
  %v1172 = vsel %vm83, %v1066, 0
  %v1175 = vsel %vm83, %v1067, 0
  %v1178 = vsel %vm83, %v1068, 0
  %v1181 = vsel %vm83, %v1069, 0
  %v1184 = vsel %vm83, %v1070, 0
  %v1187 = vsel %vm83, %v1071, 0
  %v1190 = vsel %vm83, %v1072, 0
  %v1193 = vsel %vm83, %v1073, 0
  %v1196 = vsel %vm83, %v1074, 0
  %v1199 = vsel %vm83, %v1075, 0
  %v1202 = vsel %vm83, %v1076, 0
  %v1205 = vsel %vm83, %v1077, 0
  %1207 = vmatprep.subr.mxu0 0.0
  %1208 = vmatpush1.msra.mxu0 %v29
  %1209 = vmatprep.subr.mxu0 0.0
  %1210 = vmatpush1.msra.mxu0 %v30
  %1211 = vmatprep.subr.mxu0 0.0
  %1212 = vmatpush1.msra.mxu0 %v31
  %1213 = vmatprep.subr.mxu0 0.0
  %1214 = vmatpush1.msra.mxu0 %v215
  %1215 = vmatprep.subr.mxu0 0.0
  %1216 = vmatpush1.msra.mxu0 0.0
  %1217 = vmatprep.subr.mxu0 0.0
  %1218 = vmatpush1.msra.mxu0 0.0
  %1219 = vmatprep.subr.mxu0 0.0
  %1220 = vmatpush1.msra.mxu0 0.0
  %1221 = vmatprep.subr.mxu0 0.0
  %1222 = vmatpush1.msra.mxu0 0.0
  %1223 = vmatprep.subr.mxu0 0.0
  %1224 = vmatpush1.msra.mxu0 0.0
  %1225 = vmatprep.subr.mxu0 0.0
  %1226 = vmatpush1.msra.mxu0 0.0
  %1227 = vmatprep.subr.mxu0 0.0
  %1228 = vmatpush1.msra.mxu0 0.0
  %1229 = vmatprep.subr.mxu0 0.0
  %1230 = vmatpush1.msra.mxu0 0.0
  %1231 = vmatprep.subr.mxu0 0.0
  %1232 = vmatpush1.msra.mxu0 0.0
  %1233 = vmatprep.subr.mxu0 0.0
  %1234 = vmatpush1.msra.mxu0 0.0
  %1235 = vmatprep.subr.mxu0 0.0
  %1236 = vmatpush1.msra.mxu0 0.0
  %1237 = vmatprep.subr.mxu0 0.0
  %1238 = vmatpush1.msra.mxu0 0.0
  %1239 = vmatprep.subr.mxu0 0.0
  %1240 = vmatpush1.msra.mxu0 0.0
  %1241 = vmatprep.subr.mxu0 0.0
  %1242 = vmatpush1.msra.mxu0 0.0
  %1243 = vmatprep.subr.mxu0 0.0
  %1244 = vmatpush1.msra.mxu0 0.0
  %1245 = vmatprep.subr.mxu0 0.0
  %1246 = vmatpush1.msra.mxu0 0.0
  %1247 = vmatprep.subr.mxu0 0.0
  %1248 = vmatpush1.msra.mxu0 0.0
  %1249 = vmatprep.subr.mxu0 0.0
  %1250 = vmatpush1.msra.mxu0 0.0
  %1251 = vmatprep.subr.mxu0 0.0
  %1252 = vmatpush1.msra.mxu0 0.0
  %1253 = vmatprep.subr.mxu0 0.0
  %1254 = vmatpush1.msra.mxu0 0.0
  %1255 = vmatprep.subr.mxu0 0.0
  %1256 = vmatpush1.msra.mxu0 0.0
  %1257 = vmatprep.subr.mxu0 0.0
  %1258 = vmatpush1.msra.mxu0 0.0
  %1259 = vmatprep.subr.mxu0 0.0
  %1260 = vmatpush1.msra.mxu0 0.0
  %1261 = vmatprep.subr.mxu0 0.0
  %1262 = vmatpush1.msra.mxu0 0.0
  %1263 = vmatprep.subr.mxu0 0.0
  %1264 = vmatpush1.msra.mxu0 0.0
  %1265 = vmatprep.subr.mxu0 0.0
  %1266 = vmatpush1.msra.mxu0 0.0
  %1267 = vmatprep.subr.mxu0 0.0
  %1268 = vmatpush1.msra.mxu0 0.0
  %1269 = vmatprep.subr.mxu0 0.0
  %1270 = vmatpush1.msra.mxu0 0.0
  %1271 = vmatprep.mubr.f32.mxu0 0.0
  %1272 = vmatmul.mubr.f32.gmra.mrb[0].mxu0 %v1079
  %v1273 = vpop.f32.mrb[0].mxu0
  %v1274 = vadd.f32 %v81, %v1273
  %v1275 = vpop.f32.mrb[0].mxu0
  %1276 = vmatprep.mubr.f32.mxu0 0.0
  %1277 = vmatmul.mubr.f32.gmra.mrb[0].mxu0 %v1082
  %v1278 = vpop.f32.mrb[0].mxu0
  %v1279 = vadd.f32 %v81, %v1278
  %v1280 = vpop.f32.mrb[0].mxu0
  %1281 = vmatprep.mubr.f32.mxu0 0.0
  %1282 = vmatmul.mubr.f32.gmra.mrb[0].mxu0 %v1085
  %v1283 = vpop.f32.mrb[0].mxu0
  %v1284 = vadd.f32 %v81, %v1283
  %v1285 = vpop.f32.mrb[0].mxu0
  %1286 = vmatprep.mubr.f32.mxu0 0.0
  %1287 = vmatmul.mubr.f32.gmra.mrb[0].mxu0 %v1088
  %v1288 = vpop.f32.mrb[0].mxu0
  %v1289 = vadd.f32 %v81, %v1288
  %v1290 = vpop.f32.mrb[0].mxu0
  %1291 = vmatprep.mubr.f32.mxu0 0.0
  %1292 = vmatmul.mubr.f32.gmra.mrb[0].mxu0 %v1091
  %v1293 = vpop.f32.mrb[0].mxu0
  %v1294 = vadd.f32 %v81, %v1293
  %v1295 = vpop.f32.mrb[0].mxu0
  %1296 = vmatprep.mubr.f32.mxu0 0.0
  %1297 = vmatmul.mubr.f32.gmra.mrb[0].mxu0 %v1094
  %v1298 = vpop.f32.mrb[0].mxu0
  %v1299 = vadd.f32 %v81, %v1298
  %v1300 = vpop.f32.mrb[0].mxu0
  %1301 = vmatprep.mubr.f32.mxu0 0.0
  %1302 = vmatmul.mubr.f32.gmra.mrb[0].mxu0 %v1097
  %v1303 = vpop.f32.mrb[0].mxu0
  %v1304 = vadd.f32 %v81, %v1303
  %v1305 = vpop.f32.mrb[0].mxu0
  %1306 = vmatprep.mubr.f32.mxu0 0.0
  %1307 = vmatmul.mubr.f32.gmra.mrb[0].mxu0 %v1100
  %v1308 = vpop.f32.mrb[0].mxu0
  %v1309 = vadd.f32 %v81, %v1308
  %v1310 = vpop.f32.mrb[0].mxu0
  %1311 = vmatprep.mubr.f32.mxu0 0.0
  %1312 = vmatmul.mubr.f32.gmra.mrb[0].mxu0 %v1103
  %v1313 = vpop.f32.mrb[0].mxu0
  %v1314 = vadd.f32 %v81, %v1313
  %v1315 = vpop.f32.mrb[0].mxu0
  %1316 = vmatprep.mubr.f32.mxu0 0.0
  %1317 = vmatmul.mubr.f32.gmra.mrb[0].mxu0 %v1106
  %v1318 = vpop.f32.mrb[0].mxu0
  %v1319 = vadd.f32 %v81, %v1318
  %v1320 = vpop.f32.mrb[0].mxu0
  %1321 = vmatprep.mubr.f32.mxu0 0.0
  %1322 = vmatmul.mubr.f32.gmra.mrb[0].mxu0 %v1109
  %v1323 = vpop.f32.mrb[0].mxu0
  %v1324 = vadd.f32 %v81, %v1323
  %v1325 = vpop.f32.mrb[0].mxu0
  %1326 = vmatprep.mubr.f32.mxu0 0.0
  %1327 = vmatmul.mubr.f32.gmra.mrb[0].mxu0 %v1112
  %v1328 = vpop.f32.mrb[0].mxu0
  %v1329 = vadd.f32 %v81, %v1328
  %v1330 = vpop.f32.mrb[0].mxu0
  %1331 = vmatprep.mubr.f32.mxu0 0.0
  %1332 = vmatmul.mubr.f32.gmra.mrb[0].mxu0 %v1115
  %v1333 = vpop.f32.mrb[0].mxu0
  %v1334 = vadd.f32 %v81, %v1333
  %v1335 = vpop.f32.mrb[0].mxu0
  %1336 = vmatprep.mubr.f32.mxu0 0.0
  %1337 = vmatmul.mubr.f32.gmra.mrb[0].mxu0 %v1118
  %v1338 = vpop.f32.mrb[0].mxu0
  %v1339 = vadd.f32 %v81, %v1338
  %v1340 = vpop.f32.mrb[0].mxu0
  %1341 = vmatprep.mubr.f32.mxu0 0.0
  %1342 = vmatmul.mubr.f32.gmra.mrb[0].mxu0 %v1121
  %v1343 = vpop.f32.mrb[0].mxu0
  %v1344 = vadd.f32 %v81, %v1343
  %v1345 = vpop.f32.mrb[0].mxu0
  %1346 = vmatprep.mubr.f32.mxu0 0.0
  %1347 = vmatmul.mubr.f32.gmra.mrb[0].mxu0 %v1124
  %v1348 = vpop.f32.mrb[0].mxu0
  %v1349 = vadd.f32 %v81, %v1348
  %v1350 = vpop.f32.mrb[0].mxu0
  %1351 = vmatprep.mubr.f32.mxu0 0.0
  %1352 = vmatmul.mubr.f32.gmra.mrb[0].mxu0 %v1127
  %v1353 = vpop.f32.mrb[0].mxu0
  %v1354 = vadd.f32 %v81, %v1353
  %v1355 = vpop.f32.mrb[0].mxu0
  %1356 = vmatprep.mubr.f32.mxu0 0.0
  %1357 = vmatmul.mubr.f32.gmra.mrb[0].mxu0 %v1130
  %v1358 = vpop.f32.mrb[0].mxu0
  %v1359 = vadd.f32 %v81, %v1358
  %v1360 = vpop.f32.mrb[0].mxu0
  %1361 = vmatprep.mubr.f32.mxu0 0.0
  %1362 = vmatmul.mubr.f32.gmra.mrb[0].mxu0 %v1133
  %v1363 = vpop.f32.mrb[0].mxu0
  %v1364 = vadd.f32 %v81, %v1363
  %v1365 = vpop.f32.mrb[0].mxu0
  %1366 = vmatprep.mubr.f32.mxu0 0.0
  %1367 = vmatmul.mubr.f32.gmra.mrb[0].mxu0 %v1136
  %v1368 = vpop.f32.mrb[0].mxu0
  %v1369 = vadd.f32 %v81, %v1368
  %v1370 = vpop.f32.mrb[0].mxu0
  %1371 = vmatprep.mubr.f32.mxu0 0.0
  %1372 = vmatmul.mubr.f32.gmra.mrb[0].mxu0 %v1139
  %v1373 = vpop.f32.mrb[0].mxu0
  %v1374 = vadd.f32 %v81, %v1373
  %v1375 = vpop.f32.mrb[0].mxu0
  %1376 = vmatprep.mubr.f32.mxu0 0.0
  %1377 = vmatmul.mubr.f32.gmra.mrb[0].mxu0 %v1142
  %v1378 = vpop.f32.mrb[0].mxu0
  %v1379 = vadd.f32 %v81, %v1378
  %v1380 = vpop.f32.mrb[0].mxu0
  %1381 = vmatprep.mubr.f32.mxu0 0.0
  %1382 = vmatmul.mubr.f32.gmra.mrb[0].mxu0 %v1145
  %v1383 = vpop.f32.mrb[0].mxu0
  %v1384 = vadd.f32 %v81, %v1383
  %v1385 = vpop.f32.mrb[0].mxu0
  %1386 = vmatprep.mubr.f32.mxu0 0.0
  %1387 = vmatmul.mubr.f32.gmra.mrb[0].mxu0 %v1148
  %v1388 = vpop.f32.mrb[0].mxu0
  %v1389 = vadd.f32 %v81, %v1388
  %v1390 = vpop.f32.mrb[0].mxu0
  %1391 = vmatprep.mubr.f32.mxu0 0.0
  %1392 = vmatmul.mubr.f32.gmra.mrb[0].mxu0 %v1151
  %v1393 = vpop.f32.mrb[0].mxu0
  %v1394 = vadd.f32 %v81, %v1393
  %v1395 = vpop.f32.mrb[0].mxu0
  %1396 = vmatprep.mubr.f32.mxu0 0.0
  %1397 = vmatmul.mubr.f32.gmra.mrb[0].mxu0 %v1154
  %v1398 = vpop.f32.mrb[0].mxu0
  %v1399 = vadd.f32 %v81, %v1398
  %v1400 = vpop.f32.mrb[0].mxu0
  %1401 = vmatprep.mubr.f32.mxu0 0.0
  %1402 = vmatmul.mubr.f32.gmra.mrb[0].mxu0 %v1157
  %v1403 = vpop.f32.mrb[0].mxu0
  %v1404 = vadd.f32 %v81, %v1403
  %v1405 = vpop.f32.mrb[0].mxu0
  %1406 = vmatprep.mubr.f32.mxu0 0.0
  %1407 = vmatmul.mubr.f32.gmra.mrb[0].mxu0 %v1160
  %v1408 = vpop.f32.mrb[0].mxu0
  %v1409 = vadd.f32 %v81, %v1408
  %v1410 = vpop.f32.mrb[0].mxu0
  %1411 = vmatprep.mubr.f32.mxu0 0.0
  %1412 = vmatmul.mubr.f32.gmra.mrb[0].mxu0 %v1163
  %v1413 = vpop.f32.mrb[0].mxu0
  %v1414 = vadd.f32 %v81, %v1413
  %v1415 = vpop.f32.mrb[0].mxu0
  %1416 = vmatprep.mubr.f32.mxu0 0.0
  %1417 = vmatmul.mubr.f32.gmra.mrb[0].mxu0 %v1166
  %v1418 = vpop.f32.mrb[0].mxu0
  %v1419 = vadd.f32 %v81, %v1418
  %v1420 = vpop.f32.mrb[0].mxu0
  %1421 = vmatprep.mubr.f32.mxu0 0.0
  %1422 = vmatmul.mubr.f32.gmra.mrb[0].mxu0 %v1169
  %v1423 = vpop.f32.mrb[0].mxu0
  %v1424 = vadd.f32 %v81, %v1423
  %v1425 = vpop.f32.mrb[0].mxu0
  %1426 = vmatprep.mubr.f32.mxu0 0.0
  %1427 = vmatmul.mubr.f32.gmra.mrb[0].mxu0 %v1172
  %v1428 = vpop.f32.mrb[0].mxu0
  %v1429 = vadd.f32 %v81, %v1428
  %v1430 = vpop.f32.mrb[0].mxu0
  %1431 = vmatprep.mubr.f32.mxu0 0.0
  %1432 = vmatmul.mubr.f32.gmra.mrb[0].mxu0 %v1175
  %v1433 = vpop.f32.mrb[0].mxu0
  %v1434 = vadd.f32 %v81, %v1433
  %v1435 = vpop.f32.mrb[0].mxu0
  %1436 = vmatprep.mubr.f32.mxu0 0.0
  %1437 = vmatmul.mubr.f32.gmra.mrb[0].mxu0 %v1178
  %v1438 = vpop.f32.mrb[0].mxu0
  %v1439 = vadd.f32 %v81, %v1438
  %v1440 = vpop.f32.mrb[0].mxu0
  %1441 = vmatprep.mubr.f32.mxu0 0.0
  %1442 = vmatmul.mubr.f32.gmra.mrb[0].mxu0 %v1181
  %v1443 = vpop.f32.mrb[0].mxu0
  %v1444 = vadd.f32 %v81, %v1443
  %v1445 = vpop.f32.mrb[0].mxu0
  %1446 = vmatprep.mubr.f32.mxu0 0.0
  %1447 = vmatmul.mubr.f32.gmra.mrb[0].mxu0 %v1184
  %v1448 = vpop.f32.mrb[0].mxu0
  %v1449 = vadd.f32 %v81, %v1448
  %v1450 = vpop.f32.mrb[0].mxu0
  %1451 = vmatprep.mubr.f32.mxu0 0.0
  %1452 = vmatmul.mubr.f32.gmra.mrb[0].mxu0 %v1187
  %v1453 = vpop.f32.mrb[0].mxu0
  %v1454 = vadd.f32 %v81, %v1453
  %v1455 = vpop.f32.mrb[0].mxu0
  %1456 = vmatprep.mubr.f32.mxu0 0.0
  %1457 = vmatmul.mubr.f32.gmra.mrb[0].mxu0 %v1190
  %v1458 = vpop.f32.mrb[0].mxu0
  %v1459 = vadd.f32 %v81, %v1458
  %v1460 = vpop.f32.mrb[0].mxu0
  %1461 = vmatprep.mubr.f32.mxu0 0.0
  %1462 = vmatmul.mubr.f32.gmra.mrb[0].mxu0 %v1193
  %v1463 = vpop.f32.mrb[0].mxu0
  %v1464 = vadd.f32 %v81, %v1463
  %v1465 = vpop.f32.mrb[0].mxu0
  %1466 = vmatprep.mubr.f32.mxu0 0.0
  %1467 = vmatmul.mubr.f32.gmra.mrb[0].mxu0 %v1196
  %v1468 = vpop.f32.mrb[0].mxu0
  %v1469 = vadd.f32 %v81, %v1468
  %v1470 = vpop.f32.mrb[0].mxu0
  %1471 = vmatprep.mubr.f32.mxu0 0.0
  %1472 = vmatmul.mubr.f32.gmra.mrb[0].mxu0 %v1199
  %v1473 = vpop.f32.mrb[0].mxu0
  %v1474 = vadd.f32 %v81, %v1473
  %v1475 = vpop.f32.mrb[0].mxu0
  %1476 = vmatprep.mubr.f32.mxu0 0.0
  %1477 = vmatmul.mubr.f32.gmra.mrb[0].mxu0 %v1202
  %v1478 = vpop.f32.mrb[0].mxu0
  %v1479 = vadd.f32 %v81, %v1478
  %v1480 = vpop.f32.mrb[0].mxu0
  %1481 = vmatprep.mubr.f32.mxu0 0.0
  %1482 = vmatmul.mubr.f32.gmra.mrb[0].mxu0 %v1205
  %v1483 = vpop.f32.mrb[0].mxu0
  %v1484 = vadd.f32 %v81, %v1483
  %v1485 = vpop.f32.mrb[0].mxu0
  %1486 = vdwg.mxu0
  %v1487 = vmax.f32 %v1274, 0.0
  %v1488 = vmax.f32 %v1279, 0.0
  %v1489 = vmax.f32 %v1284, 0.0
  %v1490 = vmax.f32 %v1289, 0.0
  %v1491 = vmax.f32 %v1294, 0.0
  %v1492 = vmax.f32 %v1299, 0.0
  %v1493 = vmax.f32 %v1304, 0.0
  %v1494 = vmax.f32 %v1309, 0.0
  %v1495 = vmax.f32 %v1314, 0.0
  %v1496 = vmax.f32 %v1319, 0.0
  %v1497 = vmax.f32 %v1324, 0.0
  %v1498 = vmax.f32 %v1329, 0.0
  %v1499 = vmax.f32 %v1334, 0.0
  %v1500 = vmax.f32 %v1339, 0.0
  %v1501 = vmax.f32 %v1344, 0.0
  %v1502 = vmax.f32 %v1349, 0.0
  %v1503 = vmax.f32 %v1354, 0.0
  %v1504 = vmax.f32 %v1359, 0.0
  %v1505 = vmax.f32 %v1364, 0.0
  %v1506 = vmax.f32 %v1369, 0.0
  %v1507 = vmax.f32 %v1374, 0.0
  %v1508 = vmax.f32 %v1379, 0.0
  %v1509 = vmax.f32 %v1384, 0.0
  %v1510 = vmax.f32 %v1389, 0.0
  %v1511 = vmax.f32 %v1394, 0.0
  %v1512 = vmax.f32 %v1399, 0.0
  %v1513 = vmax.f32 %v1404, 0.0
  %v1514 = vmax.f32 %v1409, 0.0
  %v1515 = vmax.f32 %v1414, 0.0
  %v1516 = vmax.f32 %v1419, 0.0
  %v1517 = vmax.f32 %v1424, 0.0
  %v1518 = vmax.f32 %v1429, 0.0
  %v1519 = vmax.f32 %v1434, 0.0
  %v1520 = vmax.f32 %v1439, 0.0
  %v1521 = vmax.f32 %v1444, 0.0
  %v1522 = vmax.f32 %v1449, 0.0
  %v1523 = vmax.f32 %v1454, 0.0
  %v1524 = vmax.f32 %v1459, 0.0
  %v1525 = vmax.f32 %v1464, 0.0
  %v1526 = vmax.f32 %v1469, 0.0
  %v1527 = vmax.f32 %v1474, 0.0
  %v1528 = vmax.f32 %v1479, 0.0
  %v1529 = vmax.f32 %v1484, 0.0
  %v1530 = vld [vmem:[%s3] sm:$0xff]
  %v1531 = vld [vmem:[%s3 + $0x8] sm:$0xff]
  %v1532 = vld [vmem:[%s3 + $0x10] sm:$0xff]
  %v1533 = vld [vmem:[%s3 + $0x18] sm:$0xff]
  %v1534 = vld [vmem:[%s3 + $0x20] sm:$0xff]
  %v1535 = vld [vmem:[%s3 + $0x28] sm:$0xff]
  %v1536 = vld [vmem:[%s3 + $0x30] sm:$0xff]
  %v1537 = vld [vmem:[%s3 + $0x38] sm:$0xff]
  %v1538 = vld [vmem:[%s3 + $0x40] sm:$0xff]
  %v1539 = vld [vmem:[%s3 + $0x48] sm:$0xff]
  %v1540 = vld [vmem:[%s3 + $0x50] sm:$0xff]
  %v1541 = vld [vmem:[%s3 + $0x58] sm:$0xff]
  %v1542 = vld [vmem:[%s3 + $0x60] sm:$0xff]
  %v1543 = vld [vmem:[%s3 + $0x68] sm:$0xff]
  %v1544 = vld [vmem:[%s3 + $0x70] sm:$0xff]
  %v1545 = vld [vmem:[%s3 + $0x78] sm:$0xff]
  %v1546 = vld [vmem:[%s3 + $0x80] sm:$0xff]
  %v1547 = vld [vmem:[%s3 + $0x88] sm:$0xff]
  %v1548 = vld [vmem:[%s3 + $0x90] sm:$0xff]
  %v1549 = vld [vmem:[%s3 + $0x98] sm:$0xff]
  %v1550 = vld [vmem:[%s3 + $0xa0] sm:$0xff]
  %v1551 = vld [vmem:[%s3 + $0xa8] sm:$0xff]
  %v1552 = vld [vmem:[%s3 + $0xb0] sm:$0xff]
  %v1553 = vld [vmem:[%s3 + $0xb8] sm:$0xff]
  %v1554 = vld [vmem:[%s3 + $0xc0] sm:$0xff]
  %v1555 = vld [vmem:[%s3 + $0xc8] sm:$0xff]
  %v1556 = vld [vmem:[%s3 + $0xd0] sm:$0xff]
  %v1557 = vld [vmem:[%s3 + $0xd8] sm:$0xff]
  %v1558 = vld [vmem:[%s3 + $0xe0] sm:$0xff]
  %v1559 = vld [vmem:[%s3 + $0xe8] sm:$0xff]
  %v1560 = vld [vmem:[%s3 + $0xf0] sm:$0xff]
  %v1561 = vld [vmem:[%s3 + $0xf8] sm:$0xff]
  %v1562 = vld [vmem:[%s3 + $0x100] sm:$0xff]
  %v1563 = vld [vmem:[%s3 + $0x108] sm:$0xff]
  %v1564 = vld [vmem:[%s3 + $0x110] sm:$0xff]
  %v1565 = vld [vmem:[%s3 + $0x118] sm:$0xff]
  %v1566 = vld [vmem:[%s3 + $0x120] sm:$0xff]
  %v1567 = vld [vmem:[%s3 + $0x128] sm:$0xff]
  %v1568 = vld [vmem:[%s3 + $0x130] sm:$0xff]
  %v1569 = vld [vmem:[%s3 + $0x138] sm:$0xff]
  %v1570 = vld [vmem:[%s3 + $0x140] sm:$0xff]
  %v1571 = vld [vmem:[%s3 + $0x148] sm:$0xff]
  %v1572 = vld [vmem:[%s3 + $0x150] sm:$0xff]
  %v1574 = vsel %vm83, %v1530, 0
  %v1577 = vsel %vm83, %v1531, 0
  %v1580 = vsel %vm83, %v1532, 0
  %v1583 = vsel %vm83, %v1533, 0
  %v1586 = vsel %vm83, %v1534, 0
  %v1589 = vsel %vm83, %v1535, 0
  %v1592 = vsel %vm83, %v1536, 0
  %v1595 = vsel %vm83, %v1537, 0
  %v1598 = vsel %vm83, %v1538, 0
  %v1601 = vsel %vm83, %v1539, 0
  %v1604 = vsel %vm83, %v1540, 0
  %v1607 = vsel %vm83, %v1541, 0
  %v1610 = vsel %vm83, %v1542, 0
  %v1613 = vsel %vm83, %v1543, 0
  %v1616 = vsel %vm83, %v1544, 0
  %v1619 = vsel %vm83, %v1545, 0
  %v1622 = vsel %vm83, %v1546, 0
  %v1625 = vsel %vm83, %v1547, 0
  %v1628 = vsel %vm83, %v1548, 0
  %v1631 = vsel %vm83, %v1549, 0
  %v1634 = vsel %vm83, %v1550, 0
  %v1637 = vsel %vm83, %v1551, 0
  %v1640 = vsel %vm83, %v1552, 0
  %v1643 = vsel %vm83, %v1553, 0
  %v1646 = vsel %vm83, %v1554, 0
  %v1649 = vsel %vm83, %v1555, 0
  %v1652 = vsel %vm83, %v1556, 0
  %v1655 = vsel %vm83, %v1557, 0
  %v1658 = vsel %vm83, %v1558, 0
  %v1661 = vsel %vm83, %v1559, 0
  %v1664 = vsel %vm83, %v1560, 0
  %v1667 = vsel %vm83, %v1561, 0
  %v1670 = vsel %vm83, %v1562, 0
  %v1673 = vsel %vm83, %v1563, 0
  %v1676 = vsel %vm83, %v1564, 0
  %v1679 = vsel %vm83, %v1565, 0
  %v1682 = vsel %vm83, %v1566, 0
  %v1685 = vsel %vm83, %v1567, 0
  %v1688 = vsel %vm83, %v1568, 0
  %v1691 = vsel %vm83, %v1569, 0
  %v1694 = vsel %vm83, %v1570, 0
  %v1697 = vsel %vm83, %v1571, 0
  %v1700 = vsel %vm83, %v1572, 0
  %1702 = vmatprep.subr.mxu0 0.0
  %1703 = vmatpush1.msra.mxu0 %v29
  %1704 = vmatprep.subr.mxu0 0.0
  %1705 = vmatpush1.msra.mxu0 %v30
  %1706 = vmatprep.subr.mxu0 0.0
  %1707 = vmatpush1.msra.mxu0 %v31
  %1708 = vmatprep.subr.mxu0 0.0
  %1709 = vmatpush1.msra.mxu0 %v215
  %1710 = vmatprep.subr.mxu0 0.0
  %1711 = vmatpush1.msra.mxu0 0.0
  %1712 = vmatprep.subr.mxu0 0.0
  %1713 = vmatpush1.msra.mxu0 0.0
  %1714 = vmatprep.subr.mxu0 0.0
  %1715 = vmatpush1.msra.mxu0 0.0
  %1716 = vmatprep.subr.mxu0 0.0
  %1717 = vmatpush1.msra.mxu0 0.0
  %1718 = vmatprep.subr.mxu0 0.0
  %1719 = vmatpush1.msra.mxu0 0.0
  %1720 = vmatprep.subr.mxu0 0.0
  %1721 = vmatpush1.msra.mxu0 0.0
  %1722 = vmatprep.subr.mxu0 0.0
  %1723 = vmatpush1.msra.mxu0 0.0
  %1724 = vmatprep.subr.mxu0 0.0
  %1725 = vmatpush1.msra.mxu0 0.0
  %1726 = vmatprep.subr.mxu0 0.0
  %1727 = vmatpush1.msra.mxu0 0.0
  %1728 = vmatprep.subr.mxu0 0.0
  %1729 = vmatpush1.msra.mxu0 0.0
  %1730 = vmatprep.subr.mxu0 0.0
  %1731 = vmatpush1.msra.mxu0 0.0
  %1732 = vmatprep.subr.mxu0 0.0
  %1733 = vmatpush1.msra.mxu0 0.0
  %1734 = vmatprep.subr.mxu0 0.0
  %1735 = vmatpush1.msra.mxu0 0.0
  %1736 = vmatprep.subr.mxu0 0.0
  %1737 = vmatpush1.msra.mxu0 0.0
  %1738 = vmatprep.subr.mxu0 0.0
  %1739 = vmatpush1.msra.mxu0 0.0
  %1740 = vmatprep.subr.mxu0 0.0
  %1741 = vmatpush1.msra.mxu0 0.0
  %1742 = vmatprep.subr.mxu0 0.0
  %1743 = vmatpush1.msra.mxu0 0.0
  %1744 = vmatprep.subr.mxu0 0.0
  %1745 = vmatpush1.msra.mxu0 0.0
  %1746 = vmatprep.subr.mxu0 0.0
  %1747 = vmatpush1.msra.mxu0 0.0
  %1748 = vmatprep.subr.mxu0 0.0
  %1749 = vmatpush1.msra.mxu0 0.0
  %1750 = vmatprep.subr.mxu0 0.0
  %1751 = vmatpush1.msra.mxu0 0.0
  %1752 = vmatprep.subr.mxu0 0.0
  %1753 = vmatpush1.msra.mxu0 0.0
  %1754 = vmatprep.subr.mxu0 0.0
  %1755 = vmatpush1.msra.mxu0 0.0
  %1756 = vmatprep.subr.mxu0 0.0
  %1757 = vmatpush1.msra.mxu0 0.0
  %1758 = vmatprep.subr.mxu0 0.0
  %1759 = vmatpush1.msra.mxu0 0.0
  %1760 = vmatprep.subr.mxu0 0.0
  %1761 = vmatpush1.msra.mxu0 0.0
  %1762 = vmatprep.subr.mxu0 0.0
  %1763 = vmatpush1.msra.mxu0 0.0
  %1764 = vmatprep.subr.mxu0 0.0
  %1765 = vmatpush1.msra.mxu0 0.0
  %1766 = vmatprep.mubr.f32.mxu0 0.0
  %1767 = vmatmul.mubr.f32.gmra.mrb[0].mxu0 %v1574
  %v1768 = vpop.f32.mrb[0].mxu0
  %v1769 = vadd.f32 %v81, %v1768
  %v1770 = vpop.f32.mrb[0].mxu0
  %1771 = vmatprep.mubr.f32.mxu0 0.0
  %1772 = vmatmul.mubr.f32.gmra.mrb[0].mxu0 %v1577
  %v1773 = vpop.f32.mrb[0].mxu0
  %v1774 = vadd.f32 %v81, %v1773
  %v1775 = vpop.f32.mrb[0].mxu0
  %1776 = vmatprep.mubr.f32.mxu0 0.0
  %1777 = vmatmul.mubr.f32.gmra.mrb[0].mxu0 %v1580
  %v1778 = vpop.f32.mrb[0].mxu0
  %v1779 = vadd.f32 %v81, %v1778
  %v1780 = vpop.f32.mrb[0].mxu0
  %1781 = vmatprep.mubr.f32.mxu0 0.0
  %1782 = vmatmul.mubr.f32.gmra.mrb[0].mxu0 %v1583
  %v1783 = vpop.f32.mrb[0].mxu0
  %v1784 = vadd.f32 %v81, %v1783
  %v1785 = vpop.f32.mrb[0].mxu0
  %1786 = vmatprep.mubr.f32.mxu0 0.0
  %1787 = vmatmul.mubr.f32.gmra.mrb[0].mxu0 %v1586
  %v1788 = vpop.f32.mrb[0].mxu0
  %v1789 = vadd.f32 %v81, %v1788
  %v1790 = vpop.f32.mrb[0].mxu0
  %1791 = vmatprep.mubr.f32.mxu0 0.0
  %1792 = vmatmul.mubr.f32.gmra.mrb[0].mxu0 %v1589
  %v1793 = vpop.f32.mrb[0].mxu0
  %v1794 = vadd.f32 %v81, %v1793
  %v1795 = vpop.f32.mrb[0].mxu0
  %1796 = vmatprep.mubr.f32.mxu0 0.0
  %1797 = vmatmul.mubr.f32.gmra.mrb[0].mxu0 %v1592
  %v1798 = vpop.f32.mrb[0].mxu0
  %v1799 = vadd.f32 %v81, %v1798
  %v1800 = vpop.f32.mrb[0].mxu0
  %1801 = vmatprep.mubr.f32.mxu0 0.0
  %1802 = vmatmul.mubr.f32.gmra.mrb[0].mxu0 %v1595
  %v1803 = vpop.f32.mrb[0].mxu0
  %v1804 = vadd.f32 %v81, %v1803
  %v1805 = vpop.f32.mrb[0].mxu0
  %1806 = vmatprep.mubr.f32.mxu0 0.0
  %1807 = vmatmul.mubr.f32.gmra.mrb[0].mxu0 %v1598
  %v1808 = vpop.f32.mrb[0].mxu0
  %v1809 = vadd.f32 %v81, %v1808
  %v1810 = vpop.f32.mrb[0].mxu0
  %1811 = vmatprep.mubr.f32.mxu0 0.0
  %1812 = vmatmul.mubr.f32.gmra.mrb[0].mxu0 %v1601
  %v1813 = vpop.f32.mrb[0].mxu0
  %v1814 = vadd.f32 %v81, %v1813
  %v1815 = vpop.f32.mrb[0].mxu0
  %1816 = vmatprep.mubr.f32.mxu0 0.0
  %1817 = vmatmul.mubr.f32.gmra.mrb[0].mxu0 %v1604
  %v1818 = vpop.f32.mrb[0].mxu0
  %v1819 = vadd.f32 %v81, %v1818
  %v1820 = vpop.f32.mrb[0].mxu0
  %1821 = vmatprep.mubr.f32.mxu0 0.0
  %1822 = vmatmul.mubr.f32.gmra.mrb[0].mxu0 %v1607
  %v1823 = vpop.f32.mrb[0].mxu0
  %v1824 = vadd.f32 %v81, %v1823
  %v1825 = vpop.f32.mrb[0].mxu0
  %1826 = vmatprep.mubr.f32.mxu0 0.0
  %1827 = vmatmul.mubr.f32.gmra.mrb[0].mxu0 %v1610
  %v1828 = vpop.f32.mrb[0].mxu0
  %v1829 = vadd.f32 %v81, %v1828
  %v1830 = vpop.f32.mrb[0].mxu0
  %1831 = vmatprep.mubr.f32.mxu0 0.0
  %1832 = vmatmul.mubr.f32.gmra.mrb[0].mxu0 %v1613
  %v1833 = vpop.f32.mrb[0].mxu0
  %v1834 = vadd.f32 %v81, %v1833
  %v1835 = vpop.f32.mrb[0].mxu0
  %1836 = vmatprep.mubr.f32.mxu0 0.0
  %1837 = vmatmul.mubr.f32.gmra.mrb[0].mxu0 %v1616
  %v1838 = vpop.f32.mrb[0].mxu0
  %v1839 = vadd.f32 %v81, %v1838
  %v1840 = vpop.f32.mrb[0].mxu0
  %1841 = vmatprep.mubr.f32.mxu0 0.0
  %1842 = vmatmul.mubr.f32.gmra.mrb[0].mxu0 %v1619
  %v1843 = vpop.f32.mrb[0].mxu0
  %v1844 = vadd.f32 %v81, %v1843
  %v1845 = vpop.f32.mrb[0].mxu0
  %1846 = vmatprep.mubr.f32.mxu0 0.0
  %1847 = vmatmul.mubr.f32.gmra.mrb[0].mxu0 %v1622
  %v1848 = vpop.f32.mrb[0].mxu0
  %v1849 = vadd.f32 %v81, %v1848
  %v1850 = vpop.f32.mrb[0].mxu0
  %1851 = vmatprep.mubr.f32.mxu0 0.0
  %1852 = vmatmul.mubr.f32.gmra.mrb[0].mxu0 %v1625
  %v1853 = vpop.f32.mrb[0].mxu0
  %v1854 = vadd.f32 %v81, %v1853
  %v1855 = vpop.f32.mrb[0].mxu0
  %1856 = vmatprep.mubr.f32.mxu0 0.0
  %1857 = vmatmul.mubr.f32.gmra.mrb[0].mxu0 %v1628
  %v1858 = vpop.f32.mrb[0].mxu0
  %v1859 = vadd.f32 %v81, %v1858
  %v1860 = vpop.f32.mrb[0].mxu0
  %1861 = vmatprep.mubr.f32.mxu0 0.0
  %1862 = vmatmul.mubr.f32.gmra.mrb[0].mxu0 %v1631
  %v1863 = vpop.f32.mrb[0].mxu0
  %v1864 = vadd.f32 %v81, %v1863
  %v1865 = vpop.f32.mrb[0].mxu0
  %1866 = vmatprep.mubr.f32.mxu0 0.0
  %1867 = vmatmul.mubr.f32.gmra.mrb[0].mxu0 %v1634
  %v1868 = vpop.f32.mrb[0].mxu0
  %v1869 = vadd.f32 %v81, %v1868
  %v1870 = vpop.f32.mrb[0].mxu0
  %1871 = vmatprep.mubr.f32.mxu0 0.0
  %1872 = vmatmul.mubr.f32.gmra.mrb[0].mxu0 %v1637
  %v1873 = vpop.f32.mrb[0].mxu0
  %v1874 = vadd.f32 %v81, %v1873
  %v1875 = vpop.f32.mrb[0].mxu0
  %1876 = vmatprep.mubr.f32.mxu0 0.0
  %1877 = vmatmul.mubr.f32.gmra.mrb[0].mxu0 %v1640
  %v1878 = vpop.f32.mrb[0].mxu0
  %v1879 = vadd.f32 %v81, %v1878
  %v1880 = vpop.f32.mrb[0].mxu0
  %1881 = vmatprep.mubr.f32.mxu0 0.0
  %1882 = vmatmul.mubr.f32.gmra.mrb[0].mxu0 %v1643
  %v1883 = vpop.f32.mrb[0].mxu0
  %v1884 = vadd.f32 %v81, %v1883
  %v1885 = vpop.f32.mrb[0].mxu0
  %1886 = vmatprep.mubr.f32.mxu0 0.0
  %1887 = vmatmul.mubr.f32.gmra.mrb[0].mxu0 %v1646
  %v1888 = vpop.f32.mrb[0].mxu0
  %v1889 = vadd.f32 %v81, %v1888
  %v1890 = vpop.f32.mrb[0].mxu0
  %1891 = vmatprep.mubr.f32.mxu0 0.0
  %1892 = vmatmul.mubr.f32.gmra.mrb[0].mxu0 %v1649
  %v1893 = vpop.f32.mrb[0].mxu0
  %v1894 = vadd.f32 %v81, %v1893
  %v1895 = vpop.f32.mrb[0].mxu0
  %1896 = vmatprep.mubr.f32.mxu0 0.0
  %1897 = vmatmul.mubr.f32.gmra.mrb[0].mxu0 %v1652
  %v1898 = vpop.f32.mrb[0].mxu0
  %v1899 = vadd.f32 %v81, %v1898
  %v1900 = vpop.f32.mrb[0].mxu0
  %1901 = vmatprep.mubr.f32.mxu0 0.0
  %1902 = vmatmul.mubr.f32.gmra.mrb[0].mxu0 %v1655
  %v1903 = vpop.f32.mrb[0].mxu0
  %v1904 = vadd.f32 %v81, %v1903
  %v1905 = vpop.f32.mrb[0].mxu0
  %1906 = vmatprep.mubr.f32.mxu0 0.0
  %1907 = vmatmul.mubr.f32.gmra.mrb[0].mxu0 %v1658
  %v1908 = vpop.f32.mrb[0].mxu0
  %v1909 = vadd.f32 %v81, %v1908
  %v1910 = vpop.f32.mrb[0].mxu0
  %1911 = vmatprep.mubr.f32.mxu0 0.0
  %1912 = vmatmul.mubr.f32.gmra.mrb[0].mxu0 %v1661
  %v1913 = vpop.f32.mrb[0].mxu0
  %v1914 = vadd.f32 %v81, %v1913
  %v1915 = vpop.f32.mrb[0].mxu0
  %1916 = vmatprep.mubr.f32.mxu0 0.0
  %1917 = vmatmul.mubr.f32.gmra.mrb[0].mxu0 %v1664
  %v1918 = vpop.f32.mrb[0].mxu0
  %v1919 = vadd.f32 %v81, %v1918
  %v1920 = vpop.f32.mrb[0].mxu0
  %1921 = vmatprep.mubr.f32.mxu0 0.0
  %1922 = vmatmul.mubr.f32.gmra.mrb[0].mxu0 %v1667
  %v1923 = vpop.f32.mrb[0].mxu0
  %v1924 = vadd.f32 %v81, %v1923
  %v1925 = vpop.f32.mrb[0].mxu0
  %1926 = vmatprep.mubr.f32.mxu0 0.0
  %1927 = vmatmul.mubr.f32.gmra.mrb[0].mxu0 %v1670
  %v1928 = vpop.f32.mrb[0].mxu0
  %v1929 = vadd.f32 %v81, %v1928
  %v1930 = vpop.f32.mrb[0].mxu0
  %1931 = vmatprep.mubr.f32.mxu0 0.0
  %1932 = vmatmul.mubr.f32.gmra.mrb[0].mxu0 %v1673
  %v1933 = vpop.f32.mrb[0].mxu0
  %v1934 = vadd.f32 %v81, %v1933
  %v1935 = vpop.f32.mrb[0].mxu0
  %1936 = vmatprep.mubr.f32.mxu0 0.0
  %1937 = vmatmul.mubr.f32.gmra.mrb[0].mxu0 %v1676
  %v1938 = vpop.f32.mrb[0].mxu0
  %v1939 = vadd.f32 %v81, %v1938
  %v1940 = vpop.f32.mrb[0].mxu0
  %1941 = vmatprep.mubr.f32.mxu0 0.0
  %1942 = vmatmul.mubr.f32.gmra.mrb[0].mxu0 %v1679
  %v1943 = vpop.f32.mrb[0].mxu0
  %v1944 = vadd.f32 %v81, %v1943
  %v1945 = vpop.f32.mrb[0].mxu0
  %1946 = vmatprep.mubr.f32.mxu0 0.0
  %1947 = vmatmul.mubr.f32.gmra.mrb[0].mxu0 %v1682
  %v1948 = vpop.f32.mrb[0].mxu0
  %v1949 = vadd.f32 %v81, %v1948
  %v1950 = vpop.f32.mrb[0].mxu0
  %1951 = vmatprep.mubr.f32.mxu0 0.0
  %1952 = vmatmul.mubr.f32.gmra.mrb[0].mxu0 %v1685
  %v1953 = vpop.f32.mrb[0].mxu0
  %v1954 = vadd.f32 %v81, %v1953
  %v1955 = vpop.f32.mrb[0].mxu0
  %1956 = vmatprep.mubr.f32.mxu0 0.0
  %1957 = vmatmul.mubr.f32.gmra.mrb[0].mxu0 %v1688
  %v1958 = vpop.f32.mrb[0].mxu0
  %v1959 = vadd.f32 %v81, %v1958
  %v1960 = vpop.f32.mrb[0].mxu0
  %1961 = vmatprep.mubr.f32.mxu0 0.0
  %1962 = vmatmul.mubr.f32.gmra.mrb[0].mxu0 %v1691
  %v1963 = vpop.f32.mrb[0].mxu0
  %v1964 = vadd.f32 %v81, %v1963
  %v1965 = vpop.f32.mrb[0].mxu0
  %1966 = vmatprep.mubr.f32.mxu0 0.0
  %1967 = vmatmul.mubr.f32.gmra.mrb[0].mxu0 %v1694
  %v1968 = vpop.f32.mrb[0].mxu0
  %v1969 = vadd.f32 %v81, %v1968
  %v1970 = vpop.f32.mrb[0].mxu0
  %1971 = vmatprep.mubr.f32.mxu0 0.0
  %1972 = vmatmul.mubr.f32.gmra.mrb[0].mxu0 %v1697
  %v1973 = vpop.f32.mrb[0].mxu0
  %v1974 = vadd.f32 %v81, %v1973
  %v1975 = vpop.f32.mrb[0].mxu0
  %1976 = vmatprep.mubr.f32.mxu0 0.0
  %1977 = vmatmul.mubr.f32.gmra.mrb[0].mxu0 %v1700
  %v1978 = vpop.f32.mrb[0].mxu0
  %v1979 = vadd.f32 %v81, %v1978
  %v1980 = vpop.f32.mrb[0].mxu0
  %1981 = vdwg.mxu0
  %v1982 = vmax.f32 %v1769, 0.0
  %v1983 = vmax.f32 %v1774, 0.0
  %v1984 = vmax.f32 %v1779, 0.0
  %v1985 = vmax.f32 %v1784, 0.0
  %v1986 = vmax.f32 %v1789, 0.0
  %v1987 = vmax.f32 %v1794, 0.0
  %v1988 = vmax.f32 %v1799, 0.0
  %v1989 = vmax.f32 %v1804, 0.0
  %v1990 = vmax.f32 %v1809, 0.0
  %v1991 = vmax.f32 %v1814, 0.0
  %v1992 = vmax.f32 %v1819, 0.0
  %v1993 = vmax.f32 %v1824, 0.0
  %v1994 = vmax.f32 %v1829, 0.0
  %v1995 = vmax.f32 %v1834, 0.0
  %v1996 = vmax.f32 %v1839, 0.0
  %v1997 = vmax.f32 %v1844, 0.0
  %v1998 = vmax.f32 %v1849, 0.0
  %v1999 = vmax.f32 %v1854, 0.0
  %v2000 = vmax.f32 %v1859, 0.0
  %v2001 = vmax.f32 %v1864, 0.0
  %v2002 = vmax.f32 %v1869, 0.0
  %v2003 = vmax.f32 %v1874, 0.0
  %v2004 = vmax.f32 %v1879, 0.0
  %v2005 = vmax.f32 %v1884, 0.0
  %v2006 = vmax.f32 %v1889, 0.0
  %v2007 = vmax.f32 %v1894, 0.0
  %v2008 = vmax.f32 %v1899, 0.0
  %v2009 = vmax.f32 %v1904, 0.0
  %v2010 = vmax.f32 %v1909, 0.0
  %v2011 = vmax.f32 %v1914, 0.0
  %v2012 = vmax.f32 %v1919, 0.0
  %v2013 = vmax.f32 %v1924, 0.0
  %v2014 = vmax.f32 %v1929, 0.0
  %v2015 = vmax.f32 %v1934, 0.0
  %v2016 = vmax.f32 %v1939, 0.0
  %v2017 = vmax.f32 %v1944, 0.0
  %v2018 = vmax.f32 %v1949, 0.0
  %v2019 = vmax.f32 %v1954, 0.0
  %v2020 = vmax.f32 %v1959, 0.0
  %v2021 = vmax.f32 %v1964, 0.0
  %v2022 = vmax.f32 %v1969, 0.0
  %v2023 = vmax.f32 %v1974, 0.0
  %v2024 = vmax.f32 %v1979, 0.0
  %v2025 = vmax.f32 %v497, %v992
  %v2026 = vmax.f32 %v498, %v993
  %v2027 = vmax.f32 %v499, %v994
  %v2028 = vmax.f32 %v500, %v995
  %v2029 = vmax.f32 %v501, %v996
  %v2030 = vmax.f32 %v502, %v997
  %v2031 = vmax.f32 %v503, %v998
  %v2032 = vmax.f32 %v504, %v999
  %v2033 = vmax.f32 %v505, %v1000
  %v2034 = vmax.f32 %v506, %v1001
  %v2035 = vmax.f32 %v507, %v1002
  %v2036 = vmax.f32 %v508, %v1003
  %v2037 = vmax.f32 %v509, %v1004
  %v2038 = vmax.f32 %v510, %v1005
  %v2039 = vmax.f32 %v511, %v1006
  %v2040 = vmax.f32 %v512, %v1007
  %v2041 = vmax.f32 %v513, %v1008
  %v2042 = vmax.f32 %v514, %v1009
  %v2043 = vmax.f32 %v515, %v1010
  %v2044 = vmax.f32 %v516, %v1011
  %v2045 = vmax.f32 %v517, %v1012
  %v2046 = vmax.f32 %v518, %v1013
  %v2047 = vmax.f32 %v519, %v1014
  %v2048 = vmax.f32 %v520, %v1015
  %v2049 = vmax.f32 %v521, %v1016
  %v2050 = vmax.f32 %v522, %v1017
  %v2051 = vmax.f32 %v523, %v1018
  %v2052 = vmax.f32 %v524, %v1019
  %v2053 = vmax.f32 %v525, %v1020
  %v2054 = vmax.f32 %v526, %v1021
  %v2055 = vmax.f32 %v527, %v1022
  %v2056 = vmax.f32 %v528, %v1023
  %v2057 = vmax.f32 %v529, %v1024
  %v2058 = vmax.f32 %v530, %v1025
  %v2059 = vmax.f32 %v531, %v1026
  %v2060 = vmax.f32 %v532, %v1027
  %v2061 = vmax.f32 %v533, %v1028
  %v2062 = vmax.f32 %v534, %v1029
  %v2063 = vmax.f32 %v535, %v1030
  %v2064 = vmax.f32 %v536, %v1031
  %v2065 = vmax.f32 %v537, %v1032
  %v2066 = vmax.f32 %v538, %v1033
  %v2067 = vmax.f32 %v539, %v1034
  %v2068 = vmax.f32 %v1487, %v1982
  %v2069 = vmax.f32 %v1488, %v1983
  %v2070 = vmax.f32 %v1489, %v1984
  %v2071 = vmax.f32 %v1490, %v1985
  %v2072 = vmax.f32 %v1491, %v1986
  %v2073 = vmax.f32 %v1492, %v1987
  %v2074 = vmax.f32 %v1493, %v1988
  %v2075 = vmax.f32 %v1494, %v1989
  %v2076 = vmax.f32 %v1495, %v1990
  %v2077 = vmax.f32 %v1496, %v1991
  %v2078 = vmax.f32 %v1497, %v1992
  %v2079 = vmax.f32 %v1498, %v1993
  %v2080 = vmax.f32 %v1499, %v1994
  %v2081 = vmax.f32 %v1500, %v1995
  %v2082 = vmax.f32 %v1501, %v1996
  %v2083 = vmax.f32 %v1502, %v1997
  %v2084 = vmax.f32 %v1503, %v1998
  %v2085 = vmax.f32 %v1504, %v1999
  %v2086 = vmax.f32 %v1505, %v2000
  %v2087 = vmax.f32 %v1506, %v2001
  %v2088 = vmax.f32 %v1507, %v2002
  %v2089 = vmax.f32 %v1508, %v2003
  %v2090 = vmax.f32 %v1509, %v2004
  %v2091 = vmax.f32 %v1510, %v2005
  %v2092 = vmax.f32 %v1511, %v2006
  %v2093 = vmax.f32 %v1512, %v2007
  %v2094 = vmax.f32 %v1513, %v2008
  %v2095 = vmax.f32 %v1514, %v2009
  %v2096 = vmax.f32 %v1515, %v2010
  %v2097 = vmax.f32 %v1516, %v2011
  %v2098 = vmax.f32 %v1517, %v2012
  %v2099 = vmax.f32 %v1518, %v2013
  %v2100 = vmax.f32 %v1519, %v2014
  %v2101 = vmax.f32 %v1520, %v2015
  %v2102 = vmax.f32 %v1521, %v2016
  %v2103 = vmax.f32 %v1522, %v2017
  %v2104 = vmax.f32 %v1523, %v2018
  %v2105 = vmax.f32 %v1524, %v2019
  %v2106 = vmax.f32 %v1525, %v2020
  %v2107 = vmax.f32 %v1526, %v2021
  %v2108 = vmax.f32 %v1527, %v2022
  %v2109 = vmax.f32 %v1528, %v2023
  %v2110 = vmax.f32 %v1529, %v2024
  %v2111 = vmax.f32 %v2025, %v2068
  %v2112 = vmax.f32 %v2026, %v2069
  %v2113 = vmax.f32 %v2027, %v2070
  %v2114 = vmax.f32 %v2028, %v2071
  %v2115 = vmax.f32 %v2029, %v2072
  %v2116 = vmax.f32 %v2030, %v2073
  %v2117 = vmax.f32 %v2031, %v2074
  %v2118 = vmax.f32 %v2032, %v2075
  %v2119 = vmax.f32 %v2033, %v2076
  %v2120 = vmax.f32 %v2034, %v2077
  %v2121 = vmax.f32 %v2035, %v2078
  %v2122 = vmax.f32 %v2036, %v2079
  %v2123 = vmax.f32 %v2037, %v2080
  %v2124 = vmax.f32 %v2038, %v2081
  %v2125 = vmax.f32 %v2039, %v2082
  %v2126 = vmax.f32 %v2040, %v2083
  %v2127 = vmax.f32 %v2041, %v2084
  %v2128 = vmax.f32 %v2042, %v2085
  %v2129 = vmax.f32 %v2043, %v2086
  %v2130 = vmax.f32 %v2044, %v2087
  %v2131 = vmax.f32 %v2045, %v2088
  %v2132 = vmax.f32 %v2046, %v2089
  %v2133 = vmax.f32 %v2047, %v2090
  %v2134 = vmax.f32 %v2048, %v2091
  %v2135 = vmax.f32 %v2049, %v2092
  %v2136 = vmax.f32 %v2050, %v2093
  %v2137 = vmax.f32 %v2051, %v2094
  %v2138 = vmax.f32 %v2052, %v2095
  %v2139 = vmax.f32 %v2053, %v2096
  %v2140 = vmax.f32 %v2054, %v2097
  %v2141 = vmax.f32 %v2055, %v2098
  %v2142 = vmax.f32 %v2056, %v2099
  %v2143 = vmax.f32 %v2057, %v2100
  %v2144 = vmax.f32 %v2058, %v2101
  %v2145 = vmax.f32 %v2059, %v2102
  %v2146 = vmax.f32 %v2060, %v2103
  %v2147 = vmax.f32 %v2061, %v2104
  %v2148 = vmax.f32 %v2062, %v2105
  %v2149 = vmax.f32 %v2063, %v2106
  %v2150 = vmax.f32 %v2064, %v2107
  %v2151 = vmax.f32 %v2065, %v2108
  %v2152 = vmax.f32 %v2066, %v2109
  %v2153 = vmax.f32 %v2067, %v2110
  %v2154 = vld [vmem:[%s6] sm:$0x1]
  %v2156 = vlaneseq
  %v2157 = vshrl.u32 %v2156, 7
  %v2158 = vsub.s32 0, %v2157
  %v2159 = vrot.slane %v2154, %v2158
  %v2161 = vmul.f32 %v2111, %v2159
  %v2162 = vmul.f32 %v2112, %v2159
  %v2163 = vmul.f32 %v2113, %v2159
  %v2164 = vmul.f32 %v2114, %v2159
  %v2165 = vmul.f32 %v2115, %v2159
  %v2166 = vmul.f32 %v2116, %v2159
  %v2167 = vmul.f32 %v2117, %v2159
  %v2168 = vmul.f32 %v2118, %v2159
  %v2169 = vmul.f32 %v2119, %v2159
  %v2170 = vmul.f32 %v2120, %v2159
  %v2171 = vmul.f32 %v2121, %v2159
  %v2172 = vmul.f32 %v2122, %v2159
  %v2173 = vmul.f32 %v2123, %v2159
  %v2174 = vmul.f32 %v2124, %v2159
  %v2175 = vmul.f32 %v2125, %v2159
  %v2176 = vmul.f32 %v2126, %v2159
  %v2177 = vmul.f32 %v2127, %v2159
  %v2178 = vmul.f32 %v2128, %v2159
  %v2179 = vmul.f32 %v2129, %v2159
  %v2180 = vmul.f32 %v2130, %v2159
  %v2181 = vmul.f32 %v2131, %v2159
  %v2182 = vmul.f32 %v2132, %v2159
  %v2183 = vmul.f32 %v2133, %v2159
  %v2184 = vmul.f32 %v2134, %v2159
  %v2185 = vmul.f32 %v2135, %v2159
  %v2186 = vmul.f32 %v2136, %v2159
  %v2187 = vmul.f32 %v2137, %v2159
  %v2188 = vmul.f32 %v2138, %v2159
  %v2189 = vmul.f32 %v2139, %v2159
  %v2190 = vmul.f32 %v2140, %v2159
  %v2191 = vmul.f32 %v2141, %v2159
  %v2192 = vmul.f32 %v2142, %v2159
  %v2193 = vmul.f32 %v2143, %v2159
  %v2194 = vmul.f32 %v2144, %v2159
  %v2195 = vmul.f32 %v2145, %v2159
  %v2196 = vmul.f32 %v2146, %v2159
  %v2197 = vmul.f32 %v2147, %v2159
  %v2198 = vmul.f32 %v2148, %v2159
  %v2199 = vmul.f32 %v2149, %v2159
  %v2200 = vmul.f32 %v2150, %v2159
  %v2201 = vmul.f32 %v2151, %v2159
  %v2202 = vmul.f32 %v2152, %v2159
  %v2203 = vmul.f32 %v2153, %v2159
  %v2204 = vld [vmem:[%s7] sm:$0x1]
  %v2206 = vlaneseq
  %v2207 = vshrl.u32 %v2206, 7
  %v2208 = vsub.s32 0, %v2207
  %v2209 = vrot.slane %v2204, %v2208
  %v2211 = vadd.f32 %v2161, %v2209
  %v2212 = vadd.f32 %v2162, %v2209
  %v2213 = vadd.f32 %v2163, %v2209
  %v2214 = vadd.f32 %v2164, %v2209
  %v2215 = vadd.f32 %v2165, %v2209
  %v2216 = vadd.f32 %v2166, %v2209
  %v2217 = vadd.f32 %v2167, %v2209
  %v2218 = vadd.f32 %v2168, %v2209
  %v2219 = vadd.f32 %v2169, %v2209
  %v2220 = vadd.f32 %v2170, %v2209
  %v2221 = vadd.f32 %v2171, %v2209
  %v2222 = vadd.f32 %v2172, %v2209
  %v2223 = vadd.f32 %v2173, %v2209
  %v2224 = vadd.f32 %v2174, %v2209
  %v2225 = vadd.f32 %v2175, %v2209
  %v2226 = vadd.f32 %v2176, %v2209
  %v2227 = vadd.f32 %v2177, %v2209
  %v2228 = vadd.f32 %v2178, %v2209
  %v2229 = vadd.f32 %v2179, %v2209
  %v2230 = vadd.f32 %v2180, %v2209
  %v2231 = vadd.f32 %v2181, %v2209
  %v2232 = vadd.f32 %v2182, %v2209
  %v2233 = vadd.f32 %v2183, %v2209
  %v2234 = vadd.f32 %v2184, %v2209
  %v2235 = vadd.f32 %v2185, %v2209
  %v2236 = vadd.f32 %v2186, %v2209
  %v2237 = vadd.f32 %v2187, %v2209
  %v2238 = vadd.f32 %v2188, %v2209
  %v2239 = vadd.f32 %v2189, %v2209
  %v2240 = vadd.f32 %v2190, %v2209
  %v2241 = vadd.f32 %v2191, %v2209
  %v2242 = vadd.f32 %v2192, %v2209
  %v2243 = vadd.f32 %v2193, %v2209
  %v2244 = vadd.f32 %v2194, %v2209
  %v2245 = vadd.f32 %v2195, %v2209
  %v2246 = vadd.f32 %v2196, %v2209
  %v2247 = vadd.f32 %v2197, %v2209
  %v2248 = vadd.f32 %v2198, %v2209
  %v2249 = vadd.f32 %v2199, %v2209
  %v2250 = vadd.f32 %v2200, %v2209
  %v2251 = vadd.f32 %v2201, %v2209
  %v2252 = vadd.f32 %v2202, %v2209
  %v2253 = vadd.f32 %v2203, %v2209
  %vm2254 = vcmask 64512
  %2255 = vst.msk [vmem:[%s8] sm:$0xff] %vm2254, %v2211
  %2256 = vst.msk [vmem:[%s8 + $0x8] sm:$0xff] %vm2254, %v2212
  %2257 = vst.msk [vmem:[%s8 + $0x10] sm:$0xff] %vm2254, %v2213
  %2258 = vst.msk [vmem:[%s8 + $0x18] sm:$0xff] %vm2254, %v2214
  %2259 = vst.msk [vmem:[%s8 + $0x20] sm:$0xff] %vm2254, %v2215
  %2260 = vst.msk [vmem:[%s8 + $0x28] sm:$0xff] %vm2254, %v2216
  %2261 = vst.msk [vmem:[%s8 + $0x30] sm:$0xff] %vm2254, %v2217
  %2262 = vst.msk [vmem:[%s8 + $0x38] sm:$0xff] %vm2254, %v2218
  %2263 = vst.msk [vmem:[%s8 + $0x40] sm:$0xff] %vm2254, %v2219
  %2264 = vst.msk [vmem:[%s8 + $0x48] sm:$0xff] %vm2254, %v2220
  %2265 = vst.msk [vmem:[%s8 + $0x50] sm:$0xff] %vm2254, %v2221
  %2266 = vst.msk [vmem:[%s8 + $0x58] sm:$0xff] %vm2254, %v2222
  %2267 = vst.msk [vmem:[%s8 + $0x60] sm:$0xff] %vm2254, %v2223
  %2268 = vst.msk [vmem:[%s8 + $0x68] sm:$0xff] %vm2254, %v2224
  %2269 = vst.msk [vmem:[%s8 + $0x70] sm:$0xff] %vm2254, %v2225
  %2270 = vst.msk [vmem:[%s8 + $0x78] sm:$0xff] %vm2254, %v2226
  %2271 = vst.msk [vmem:[%s8 + $0x80] sm:$0xff] %vm2254, %v2227
  %2272 = vst.msk [vmem:[%s8 + $0x88] sm:$0xff] %vm2254, %v2228
  %2273 = vst.msk [vmem:[%s8 + $0x90] sm:$0xff] %vm2254, %v2229
  %2274 = vst.msk [vmem:[%s8 + $0x98] sm:$0xff] %vm2254, %v2230
  %2275 = vst.msk [vmem:[%s8 + $0xa0] sm:$0xff] %vm2254, %v2231
  %2276 = vst.msk [vmem:[%s8 + $0xa8] sm:$0xff] %vm2254, %v2232
  %2277 = vst.msk [vmem:[%s8 + $0xb0] sm:$0xff] %vm2254, %v2233
  %2278 = vst.msk [vmem:[%s8 + $0xb8] sm:$0xff] %vm2254, %v2234
  %2279 = vst.msk [vmem:[%s8 + $0xc0] sm:$0xff] %vm2254, %v2235
  %2280 = vst.msk [vmem:[%s8 + $0xc8] sm:$0xff] %vm2254, %v2236
  %2281 = vst.msk [vmem:[%s8 + $0xd0] sm:$0xff] %vm2254, %v2237
  %2282 = vst.msk [vmem:[%s8 + $0xd8] sm:$0xff] %vm2254, %v2238
  %2283 = vst.msk [vmem:[%s8 + $0xe0] sm:$0xff] %vm2254, %v2239
  %2284 = vst.msk [vmem:[%s8 + $0xe8] sm:$0xff] %vm2254, %v2240
  %2285 = vst.msk [vmem:[%s8 + $0xf0] sm:$0xff] %vm2254, %v2241
  %2286 = vst.msk [vmem:[%s8 + $0xf8] sm:$0xff] %vm2254, %v2242
  %2287 = vst.msk [vmem:[%s8 + $0x100] sm:$0xff] %vm2254, %v2243
  %2288 = vst.msk [vmem:[%s8 + $0x108] sm:$0xff] %vm2254, %v2244
  %2289 = vst.msk [vmem:[%s8 + $0x110] sm:$0xff] %vm2254, %v2245
  %2290 = vst.msk [vmem:[%s8 + $0x118] sm:$0xff] %vm2254, %v2246
  %2291 = vst.msk [vmem:[%s8 + $0x120] sm:$0xff] %vm2254, %v2247
  %2292 = vst.msk [vmem:[%s8 + $0x128] sm:$0xff] %vm2254, %v2248
  %2293 = vst.msk [vmem:[%s8 + $0x130] sm:$0xff] %vm2254, %v2249
  %2294 = vst.msk [vmem:[%s8 + $0x138] sm:$0xff] %vm2254, %v2250
  %2295 = vst.msk [vmem:[%s8 + $0x140] sm:$0xff] %vm2254, %v2251
  %2296 = vst.msk [vmem:[%s8 + $0x148] sm:$0xff] %vm2254, %v2252
  %2297 = vst.msk [vmem:[%s8 + $0x150] sm:$0xff] %vm2254, %v2253
  // Predicated region
  $region34: #{variant4_forward.4} parent=0 // pred_check
    _
  $region35: #{variant4_forward.4} parent=0 // pred_check_branch
    %2299 = sbr.rel (0) target = $region37
  $region36: #{variant4_forward.4} parent=0 // pred_region
    _
  $region37: #{variant4_forward.4} parent=0 // pred_fallthru
    _
  // Predicated region
  $region38: #{variant4_forward.4} parent=0 // pred_check
    _
  $region39: #{variant4_forward.4} parent=0 // pred_check_branch
    %2301 = sbr.rel (0) target = $region41
  $region40: #{variant4_forward.4} parent=0 // pred_region
    _
  $region41: #{variant4_forward.4} parent=0 // pred_fallthru
    _

// kernel: variant4_forward.5
$region0: #{variant4_forward.5}
  #allocation0 [shape = 'u32[]', space=smem, size = 0x4, offset = 0x4, fixed_abs, tag = 'smem constant byte address 0x4 - core index']
  #allocation1 [shape = 'u32[144,128]{1,0:T(1,128)}', space=vmem, size = 0x12000, scoped, tag = 'internal scratch']
  %s0 = inlined_call_operand.vmem [shape: f32[56,200], index: 0, kind: input, shape index: {}]
  %s1 = inlined_call_operand.vmem [shape: f32[56,200], index: 1, kind: input, shape index: {}]
  %s2 = inlined_call_operand.vmem [shape: f32[56,200], index: 2, kind: input, shape index: {}]
  %s3 = inlined_call_operand.vmem [shape: f32[56,200], index: 3, kind: input, shape index: {}]
  %s4 = inlined_call_operand.vmem [shape: f32[200,16], index: 4, kind: input, shape index: {}]
  %s5 = inlined_call_operand.vmem [shape: f32[1,16], index: 5, kind: input, shape index: {}]
  %s6 = inlined_call_operand.vmem [shape: f32[1,16], index: 6, kind: input, shape index: {}]
  %s7 = inlined_call_operand.vmem [shape: f32[1,16], index: 7, kind: input, shape index: {}]
  %s8 = inlined_call_operand.vmem [shape: f32[56,16], index: 8, kind: output, shape index: {}]
  %s9 = sld [smem:[#allocation0]]
  $region42: #{variant4_forward.5} parent=0
    _
  %s11 = ssub.s32 1, %s9
  %s12 = scalar_select 0, %s11, %s9
  // Predicated region
  $region2: #{variant4_forward.5} parent=0 // pred_check
    _
  $region3: #{variant4_forward.5} parent=0 // pred_check_branch
    %14 = sbr.rel (0) target = $region5
  $region4: #{variant4_forward.5} parent=0 // pred_region
    _
  $region5: #{variant4_forward.5} parent=0 // pred_fallthru
    _
  // Predicated region
  $region6: #{variant4_forward.5} parent=0 // pred_check
    _
  $region7: #{variant4_forward.5} parent=0 // pred_check_branch
    %16 = sbr.rel (0) target = $region9
  $region8: #{variant4_forward.5} parent=0 // pred_region
    _
  $region9: #{variant4_forward.5} parent=0 // pred_fallthru
    _
  // Predicated region
  $region10: #{variant4_forward.5} parent=0 // pred_check
    _
  $region11: #{variant4_forward.5} parent=0 // pred_check_branch
    %18 = sbr.rel (0) target = $region13
  $region12: #{variant4_forward.5} parent=0 // pred_region
    _
  $region13: #{variant4_forward.5} parent=0 // pred_fallthru
    _
  // Predicated region
  $region14: #{variant4_forward.5} parent=0 // pred_check
    _
  $region15: #{variant4_forward.5} parent=0 // pred_check_branch
    %20 = sbr.rel (0) target = $region17
  $region16: #{variant4_forward.5} parent=0 // pred_region
    _
  $region17: #{variant4_forward.5} parent=0 // pred_fallthru
    _
  // Predicated region
  $region18: #{variant4_forward.5} parent=0 // pred_check
    _
  $region19: #{variant4_forward.5} parent=0 // pred_check_branch
    %22 = sbr.rel (0) target = $region21
  $region20: #{variant4_forward.5} parent=0 // pred_region
    _
  $region21: #{variant4_forward.5} parent=0 // pred_fallthru
    _
  // Predicated region
  $region22: #{variant4_forward.5} parent=0 // pred_check
    _
  $region23: #{variant4_forward.5} parent=0 // pred_check_branch
    %24 = sbr.rel (0) target = $region25
  $region24: #{variant4_forward.5} parent=0 // pred_region
    _
  $region25: #{variant4_forward.5} parent=0 // pred_fallthru
    _
  // Predicated region
  $region26: #{variant4_forward.5} parent=0 // pred_check
    _
  $region27: #{variant4_forward.5} parent=0 // pred_check_branch
    %26 = sbr.rel (0) target = $region29
  $region28: #{variant4_forward.5} parent=0 // pred_region
    _
  $region29: #{variant4_forward.5} parent=0 // pred_fallthru
    _
  // Predicated region
  $region30: #{variant4_forward.5} parent=0 // pred_check
    _
  $region31: #{variant4_forward.5} parent=0 // pred_check_branch
    %28 = sbr.rel (0) target = $region33
  $region32: #{variant4_forward.5} parent=0 // pred_region
    _
  $region33: #{variant4_forward.5} parent=0 // pred_fallthru
    _
  %v29 = vld [vmem:[%s4] sm:$0xff]
  %v30 = vld [vmem:[%s4 + $0x8] sm:$0xff]
  %v31 = vld [vmem:[%s4 + $0x10] sm:$0xff]
  %v32 = vld [vmem:[%s4 + $0x18] sm:$0xff]
  %v33 = vld [vmem:[%s4 + $0x20] sm:$0xff]
  %v34 = vld [vmem:[%s4 + $0x28] sm:$0xff]
  %v35 = vld [vmem:[%s4 + $0x30] sm:$0xff]
  %v36 = vld [vmem:[%s4 + $0x38] sm:$0xff]
  %v37 = vld [vmem:[%s4 + $0x40] sm:$0xff]
  %v38 = vld [vmem:[%s4 + $0x48] sm:$0xff]
  %v39 = vld [vmem:[%s4 + $0x50] sm:$0xff]
  %v40 = vld [vmem:[%s4 + $0x58] sm:$0xff]
  %v41 = vld [vmem:[%s4 + $0x60] sm:$0xff]
  %v42 = vld [vmem:[%s4 + $0x68] sm:$0xff]
  %v43 = vld [vmem:[%s4 + $0x70] sm:$0xff]
  %v44 = vld [vmem:[%s4 + $0x78] sm:$0xff]
  %v45 = vld [vmem:[%s4 + $0x80] sm:$0xff]
  %v46 = vld [vmem:[%s4 + $0x88] sm:$0xff]
  %v47 = vld [vmem:[%s4 + $0x90] sm:$0xff]
  %v48 = vld [vmem:[%s4 + $0x98] sm:$0xff]
  %v49 = vld [vmem:[%s4 + $0xa0] sm:$0xff]
  %v50 = vld [vmem:[%s4 + $0xa8] sm:$0xff]
  %v51 = vld [vmem:[%s4 + $0xb0] sm:$0xff]
  %v52 = vld [vmem:[%s4 + $0xb8] sm:$0xff]
  %v53 = vld [vmem:[%s4 + $0xc0] sm:$0xff]
  %v54 = vld [vmem:[%s5] sm:$0x1]
  %v55 = vld [vmem:[%s0] sm:$0xff]
  %v56 = vld [vmem:[%s0 + $0x8] sm:$0xff]
  %v57 = vld [vmem:[%s0 + $0x10] sm:$0xff]
  %v58 = vld [vmem:[%s0 + $0x18] sm:$0xff]
  %v59 = vld [vmem:[%s0 + $0x20] sm:$0xff]
  %v60 = vld [vmem:[%s0 + $0x28] sm:$0xff]
  %v61 = vld [vmem:[%s0 + $0x30] sm:$0xff]
  %v62 = vld [vmem:[%s0 + $0x38] sm:$0xff]
  %v63 = vld [vmem:[%s0 + $0x40] sm:$0xff]
  %v64 = vld [vmem:[%s0 + $0x48] sm:$0xff]
  %v65 = vld [vmem:[%s0 + $0x50] sm:$0xff]
  %v66 = vld [vmem:[%s0 + $0x58] sm:$0xff]
  %v67 = vld [vmem:[%s0 + $0x60] sm:$0xff]
  %v68 = vld [vmem:[%s0 + $0x68] sm:$0xff]
  %v70 = vlaneseq
  %v71 = vshrl.u32 %v70, 7
  %v72 = vsub.s32 0, %v71
  %v73 = vrot.slane %v54, %v72
  %vm75 = vcmask 588800
  %v77 = vsel %vm75, %v56, 0
  %v80 = vsel %vm75, %v58, 0
  %v83 = vsel %vm75, %v60, 0
  %v86 = vsel %vm75, %v62, 0
  %v89 = vsel %vm75, %v64, 0
  %v92 = vsel %vm75, %v66, 0
  %v95 = vsel %vm75, %v68, 0
  %97 = vmatprep.subr.mxu0 0.0
  %98 = vmatpush1.msra.mxu0 %v29
  %99 = vmatprep.subr.mxu0 0.0
  %100 = vmatpush1.msra.mxu0 %v30
  %101 = vmatprep.subr.mxu0 0.0
  %102 = vmatpush1.msra.mxu0 %v31
  %103 = vmatprep.subr.mxu0 0.0
  %104 = vmatpush1.msra.mxu0 %v32
  %105 = vmatprep.subr.mxu0 0.0
  %106 = vmatpush1.msra.mxu0 %v33
  %107 = vmatprep.subr.mxu0 0.0
  %108 = vmatpush1.msra.mxu0 %v34
  %109 = vmatprep.subr.mxu0 0.0
  %110 = vmatpush1.msra.mxu0 %v35
  %111 = vmatprep.subr.mxu0 0.0
  %112 = vmatpush1.msra.mxu0 %v36
  %113 = vmatprep.subr.mxu0 0.0
  %114 = vmatpush1.msra.mxu0 %v37
  %115 = vmatprep.subr.mxu0 0.0
  %116 = vmatpush1.msra.mxu0 %v38
  %117 = vmatprep.subr.mxu0 0.0
  %118 = vmatpush1.msra.mxu0 %v39
  %119 = vmatprep.subr.mxu0 0.0
  %120 = vmatpush1.msra.mxu0 %v40
  %121 = vmatprep.subr.mxu0 0.0
  %122 = vmatpush1.msra.mxu0 %v41
  %123 = vmatprep.subr.mxu0 0.0
  %124 = vmatpush1.msra.mxu0 %v42
  %125 = vmatprep.subr.mxu0 0.0
  %126 = vmatpush1.msra.mxu0 %v43
  %127 = vmatprep.subr.mxu0 0.0
  %128 = vmatpush1.msra.mxu0 %v44
  %129 = vmatprep.subr.mxu0 0.0
  %130 = vmatpush1.msra.mxu0 %v45
  %131 = vmatprep.subr.mxu0 0.0
  %132 = vmatpush1.msra.mxu0 %v46
  %133 = vmatprep.subr.mxu0 0.0
  %134 = vmatpush1.msra.mxu0 %v47
  %135 = vmatprep.subr.mxu0 0.0
  %136 = vmatpush1.msra.mxu0 %v48
  %137 = vmatprep.subr.mxu0 0.0
  %138 = vmatpush1.msra.mxu0 %v49
  %139 = vmatprep.subr.mxu0 0.0
  %140 = vmatpush1.msra.mxu0 %v50
  %141 = vmatprep.subr.mxu0 0.0
  %142 = vmatpush1.msra.mxu0 %v51
  %143 = vmatprep.subr.mxu0 0.0
  %144 = vmatpush1.msra.mxu0 %v52
  %145 = vmatprep.subr.mxu0 0.0
  %146 = vmatpush1.msra.mxu0 %v53
  %147 = vmatprep.subr.mxu0 0.0
  %148 = vmatpush1.msra.mxu0 0.0
  %149 = vmatprep.subr.mxu0 0.0
  %150 = vmatpush1.msra.mxu0 0.0
  %151 = vmatprep.subr.mxu0 0.0
  %152 = vmatpush1.msra.mxu0 0.0
  %153 = vmatprep.subr.mxu0 0.0
  %154 = vmatpush1.msra.mxu0 0.0
  %155 = vmatprep.subr.mxu0 0.0
  %156 = vmatpush1.msra.mxu0 0.0
  %157 = vmatprep.subr.mxu0 0.0
  %158 = vmatpush1.msra.mxu0 0.0
  %159 = vmatprep.subr.mxu0 0.0
  %160 = vmatpush1.msra.mxu0 0.0
  %161 = vmatprep.mubr.f32.mxu0 %v77
  %162 = vmatmul.mubr.f32.gmra.mrb[0].mxu0 %v55
  %v163 = vpop.f32.mrb[0].mxu0
  %v164 = vadd.f32 %v73, %v163
  %v165 = vpop.f32.mrb[0].mxu0
  %166 = vmatprep.mubr.f32.mxu0 %v80
  %167 = vmatmul.mubr.f32.gmra.mrb[0].mxu0 %v57
  %v168 = vpop.f32.mrb[0].mxu0
  %v169 = vadd.f32 %v73, %v168
  %v170 = vpop.f32.mrb[0].mxu0
  %171 = vmatprep.mubr.f32.mxu0 %v83
  %172 = vmatmul.mubr.f32.gmra.mrb[0].mxu0 %v59
  %v173 = vpop.f32.mrb[0].mxu0
  %v174 = vadd.f32 %v73, %v173
  %v175 = vpop.f32.mrb[0].mxu0
  %176 = vmatprep.mubr.f32.mxu0 %v86
  %177 = vmatmul.mubr.f32.gmra.mrb[0].mxu0 %v61
  %v178 = vpop.f32.mrb[0].mxu0
  %v179 = vadd.f32 %v73, %v178
  %v180 = vpop.f32.mrb[0].mxu0
  %181 = vmatprep.mubr.f32.mxu0 %v89
  %182 = vmatmul.mubr.f32.gmra.mrb[0].mxu0 %v63
  %v183 = vpop.f32.mrb[0].mxu0
  %v184 = vadd.f32 %v73, %v183
  %v185 = vpop.f32.mrb[0].mxu0
  %186 = vmatprep.mubr.f32.mxu0 %v92
  %187 = vmatmul.mubr.f32.gmra.mrb[0].mxu0 %v65
  %v188 = vpop.f32.mrb[0].mxu0
  %v189 = vadd.f32 %v73, %v188
  %v190 = vpop.f32.mrb[0].mxu0
  %191 = vmatprep.mubr.f32.mxu0 %v95
  %192 = vmatmul.mubr.f32.gmra.mrb[0].mxu0 %v67
  %v193 = vpop.f32.mrb[0].mxu0
  %v194 = vadd.f32 %v73, %v193
  %v195 = vpop.f32.mrb[0].mxu0
  %196 = vdwg.mxu0
  %v197 = vmax.f32 %v164, 0.0
  %v198 = vmax.f32 %v169, 0.0
  %v199 = vmax.f32 %v174, 0.0
  %v200 = vmax.f32 %v179, 0.0
  %v201 = vmax.f32 %v184, 0.0
  %v202 = vmax.f32 %v189, 0.0
  %v203 = vmax.f32 %v194, 0.0
  %v204 = vld [vmem:[%s1] sm:$0xff]
  %v205 = vld [vmem:[%s1 + $0x8] sm:$0xff]
  %v206 = vld [vmem:[%s1 + $0x10] sm:$0xff]
  %v207 = vld [vmem:[%s1 + $0x18] sm:$0xff]
  %v208 = vld [vmem:[%s1 + $0x20] sm:$0xff]
  %v209 = vld [vmem:[%s1 + $0x28] sm:$0xff]
  %v210 = vld [vmem:[%s1 + $0x30] sm:$0xff]
  %v211 = vld [vmem:[%s1 + $0x38] sm:$0xff]
  %v212 = vld [vmem:[%s1 + $0x40] sm:$0xff]
  %v213 = vld [vmem:[%s1 + $0x48] sm:$0xff]
  %v214 = vld [vmem:[%s1 + $0x50] sm:$0xff]
  %v215 = vld [vmem:[%s1 + $0x58] sm:$0xff]
  %v216 = vld [vmem:[%s1 + $0x60] sm:$0xff]
  %v217 = vld [vmem:[%s1 + $0x68] sm:$0xff]
  %v219 = vsel %vm75, %v205, 0
  %v222 = vsel %vm75, %v207, 0
  %v225 = vsel %vm75, %v209, 0
  %v228 = vsel %vm75, %v211, 0
  %v231 = vsel %vm75, %v213, 0
  %v234 = vsel %vm75, %v215, 0
  %v237 = vsel %vm75, %v217, 0
  %239 = vmatprep.subr.mxu0 0.0
  %240 = vmatpush1.msra.mxu0 %v29
  %241 = vmatprep.subr.mxu0 0.0
  %242 = vmatpush1.msra.mxu0 %v30
  %243 = vmatprep.subr.mxu0 0.0
  %244 = vmatpush1.msra.mxu0 %v31
  %245 = vmatprep.subr.mxu0 0.0
  %246 = vmatpush1.msra.mxu0 %v32
  %247 = vmatprep.subr.mxu0 0.0
  %248 = vmatpush1.msra.mxu0 %v33
  %249 = vmatprep.subr.mxu0 0.0
  %250 = vmatpush1.msra.mxu0 %v34
  %251 = vmatprep.subr.mxu0 0.0
  %252 = vmatpush1.msra.mxu0 %v35
  %253 = vmatprep.subr.mxu0 0.0
  %254 = vmatpush1.msra.mxu0 %v36
  %255 = vmatprep.subr.mxu0 0.0
  %256 = vmatpush1.msra.mxu0 %v37
  %257 = vmatprep.subr.mxu0 0.0
  %258 = vmatpush1.msra.mxu0 %v38
  %259 = vmatprep.subr.mxu0 0.0
  %260 = vmatpush1.msra.mxu0 %v39
  %261 = vmatprep.subr.mxu0 0.0
  %262 = vmatpush1.msra.mxu0 %v40
  %263 = vmatprep.subr.mxu0 0.0
  %264 = vmatpush1.msra.mxu0 %v41
  %265 = vmatprep.subr.mxu0 0.0
  %266 = vmatpush1.msra.mxu0 %v42
  %267 = vmatprep.subr.mxu0 0.0
  %268 = vmatpush1.msra.mxu0 %v43
  %269 = vmatprep.subr.mxu0 0.0
  %270 = vmatpush1.msra.mxu0 %v44
  %271 = vmatprep.subr.mxu0 0.0
  %272 = vmatpush1.msra.mxu0 %v45
  %273 = vmatprep.subr.mxu0 0.0
  %274 = vmatpush1.msra.mxu0 %v46
  %275 = vmatprep.subr.mxu0 0.0
  %276 = vmatpush1.msra.mxu0 %v47
  %277 = vmatprep.subr.mxu0 0.0
  %278 = vmatpush1.msra.mxu0 %v48
  %279 = vmatprep.subr.mxu0 0.0
  %280 = vmatpush1.msra.mxu0 %v49
  %281 = vmatprep.subr.mxu0 0.0
  %282 = vmatpush1.msra.mxu0 %v50
  %283 = vmatprep.subr.mxu0 0.0
  %284 = vmatpush1.msra.mxu0 %v51
  %285 = vmatprep.subr.mxu0 0.0
  %286 = vmatpush1.msra.mxu0 %v52
  %287 = vmatprep.subr.mxu0 0.0
  %288 = vmatpush1.msra.mxu0 %v53
  %289 = vmatprep.subr.mxu0 0.0
  %290 = vmatpush1.msra.mxu0 0.0
  %291 = vmatprep.subr.mxu0 0.0
  %292 = vmatpush1.msra.mxu0 0.0
  %293 = vmatprep.subr.mxu0 0.0
  %294 = vmatpush1.msra.mxu0 0.0
  %295 = vmatprep.subr.mxu0 0.0
  %296 = vmatpush1.msra.mxu0 0.0
  %297 = vmatprep.subr.mxu0 0.0
  %298 = vmatpush1.msra.mxu0 0.0
  %299 = vmatprep.subr.mxu0 0.0
  %300 = vmatpush1.msra.mxu0 0.0
  %301 = vmatprep.subr.mxu0 0.0
  %302 = vmatpush1.msra.mxu0 0.0
  %303 = vmatprep.mubr.f32.mxu0 %v219
  %304 = vmatmul.mubr.f32.gmra.mrb[0].mxu0 %v204
  %v305 = vpop.f32.mrb[0].mxu0
  %v306 = vadd.f32 %v73, %v305
  %v307 = vpop.f32.mrb[0].mxu0
  %308 = vmatprep.mubr.f32.mxu0 %v222
  %309 = vmatmul.mubr.f32.gmra.mrb[0].mxu0 %v206
  %v310 = vpop.f32.mrb[0].mxu0
  %v311 = vadd.f32 %v73, %v310
  %v312 = vpop.f32.mrb[0].mxu0
  %313 = vmatprep.mubr.f32.mxu0 %v225
  %314 = vmatmul.mubr.f32.gmra.mrb[0].mxu0 %v208
  %v315 = vpop.f32.mrb[0].mxu0
  %v316 = vadd.f32 %v73, %v315
  %v317 = vpop.f32.mrb[0].mxu0
  %318 = vmatprep.mubr.f32.mxu0 %v228
  %319 = vmatmul.mubr.f32.gmra.mrb[0].mxu0 %v210
  %v320 = vpop.f32.mrb[0].mxu0
  %v321 = vadd.f32 %v73, %v320
  %v322 = vpop.f32.mrb[0].mxu0
  %323 = vmatprep.mubr.f32.mxu0 %v231
  %324 = vmatmul.mubr.f32.gmra.mrb[0].mxu0 %v212
  %v325 = vpop.f32.mrb[0].mxu0
  %v326 = vadd.f32 %v73, %v325
  %v327 = vpop.f32.mrb[0].mxu0
  %328 = vmatprep.mubr.f32.mxu0 %v234
  %329 = vmatmul.mubr.f32.gmra.mrb[0].mxu0 %v214
  %v330 = vpop.f32.mrb[0].mxu0
  %v331 = vadd.f32 %v73, %v330
  %v332 = vpop.f32.mrb[0].mxu0
  %333 = vmatprep.mubr.f32.mxu0 %v237
  %334 = vmatmul.mubr.f32.gmra.mrb[0].mxu0 %v216
  %v335 = vpop.f32.mrb[0].mxu0
  %v336 = vadd.f32 %v73, %v335
  %v337 = vpop.f32.mrb[0].mxu0
  %338 = vdwg.mxu0
  %v339 = vmax.f32 %v306, 0.0
  %v340 = vmax.f32 %v311, 0.0
  %v341 = vmax.f32 %v316, 0.0
  %v342 = vmax.f32 %v321, 0.0
  %v343 = vmax.f32 %v326, 0.0
  %v344 = vmax.f32 %v331, 0.0
  %v345 = vmax.f32 %v336, 0.0
  %v346 = vld [vmem:[%s2] sm:$0xff]
  %v347 = vld [vmem:[%s2 + $0x8] sm:$0xff]
  %v348 = vld [vmem:[%s2 + $0x10] sm:$0xff]
  %v349 = vld [vmem:[%s2 + $0x18] sm:$0xff]
  %v350 = vld [vmem:[%s2 + $0x20] sm:$0xff]
  %v351 = vld [vmem:[%s2 + $0x28] sm:$0xff]
  %v352 = vld [vmem:[%s2 + $0x30] sm:$0xff]
  %v353 = vld [vmem:[%s2 + $0x38] sm:$0xff]
  %v354 = vld [vmem:[%s2 + $0x40] sm:$0xff]
  %v355 = vld [vmem:[%s2 + $0x48] sm:$0xff]
  %v356 = vld [vmem:[%s2 + $0x50] sm:$0xff]
  %v357 = vld [vmem:[%s2 + $0x58] sm:$0xff]
  %v358 = vld [vmem:[%s2 + $0x60] sm:$0xff]
  %v359 = vld [vmem:[%s2 + $0x68] sm:$0xff]
  %v361 = vsel %vm75, %v347, 0
  %v364 = vsel %vm75, %v349, 0
  %v367 = vsel %vm75, %v351, 0
  %v370 = vsel %vm75, %v353, 0
  %v373 = vsel %vm75, %v355, 0
  %v376 = vsel %vm75, %v357, 0
  %v379 = vsel %vm75, %v359, 0
  %381 = vmatprep.subr.mxu0 0.0
  %382 = vmatpush1.msra.mxu0 %v29
  %383 = vmatprep.subr.mxu0 0.0
  %384 = vmatpush1.msra.mxu0 %v30
  %385 = vmatprep.subr.mxu0 0.0
  %386 = vmatpush1.msra.mxu0 %v31
  %387 = vmatprep.subr.mxu0 0.0
  %388 = vmatpush1.msra.mxu0 %v32
  %389 = vmatprep.subr.mxu0 0.0
  %390 = vmatpush1.msra.mxu0 %v33
  %391 = vmatprep.subr.mxu0 0.0
  %392 = vmatpush1.msra.mxu0 %v34
  %393 = vmatprep.subr.mxu0 0.0
  %394 = vmatpush1.msra.mxu0 %v35
  %395 = vmatprep.subr.mxu0 0.0
  %396 = vmatpush1.msra.mxu0 %v36
  %397 = vmatprep.subr.mxu0 0.0
  %398 = vmatpush1.msra.mxu0 %v37
  %399 = vmatprep.subr.mxu0 0.0
  %400 = vmatpush1.msra.mxu0 %v38
  %401 = vmatprep.subr.mxu0 0.0
  %402 = vmatpush1.msra.mxu0 %v39
  %403 = vmatprep.subr.mxu0 0.0
  %404 = vmatpush1.msra.mxu0 %v40
  %405 = vmatprep.subr.mxu0 0.0
  %406 = vmatpush1.msra.mxu0 %v41
  %407 = vmatprep.subr.mxu0 0.0
  %408 = vmatpush1.msra.mxu0 %v42
  %409 = vmatprep.subr.mxu0 0.0
  %410 = vmatpush1.msra.mxu0 %v43
  %411 = vmatprep.subr.mxu0 0.0
  %412 = vmatpush1.msra.mxu0 %v44
  %413 = vmatprep.subr.mxu0 0.0
  %414 = vmatpush1.msra.mxu0 %v45
  %415 = vmatprep.subr.mxu0 0.0
  %416 = vmatpush1.msra.mxu0 %v46
  %417 = vmatprep.subr.mxu0 0.0
  %418 = vmatpush1.msra.mxu0 %v47
  %419 = vmatprep.subr.mxu0 0.0
  %420 = vmatpush1.msra.mxu0 %v48
  %421 = vmatprep.subr.mxu0 0.0
  %422 = vmatpush1.msra.mxu0 %v49
  %423 = vmatprep.subr.mxu0 0.0
  %424 = vmatpush1.msra.mxu0 %v50
  %425 = vmatprep.subr.mxu0 0.0
  %426 = vmatpush1.msra.mxu0 %v51
  %427 = vmatprep.subr.mxu0 0.0
  %428 = vmatpush1.msra.mxu0 %v52
  %429 = vmatprep.subr.mxu0 0.0
  %430 = vmatpush1.msra.mxu0 %v53
  %431 = vmatprep.subr.mxu0 0.0
  %432 = vmatpush1.msra.mxu0 0.0
  %433 = vmatprep.subr.mxu0 0.0
  %434 = vmatpush1.msra.mxu0 0.0
  %435 = vmatprep.subr.mxu0 0.0
  %436 = vmatpush1.msra.mxu0 0.0
  %437 = vmatprep.subr.mxu0 0.0
  %438 = vmatpush1.msra.mxu0 0.0
  %439 = vmatprep.subr.mxu0 0.0
  %440 = vmatpush1.msra.mxu0 0.0
  %441 = vmatprep.subr.mxu0 0.0
  %442 = vmatpush1.msra.mxu0 0.0
  %443 = vmatprep.subr.mxu0 0.0
  %444 = vmatpush1.msra.mxu0 0.0
  %445 = vmatprep.mubr.f32.mxu0 %v361
  %446 = vmatmul.mubr.f32.gmra.mrb[0].mxu0 %v346
  %v447 = vpop.f32.mrb[0].mxu0
  %v448 = vadd.f32 %v73, %v447
  %v449 = vpop.f32.mrb[0].mxu0
  %450 = vmatprep.mubr.f32.mxu0 %v364
  %451 = vmatmul.mubr.f32.gmra.mrb[0].mxu0 %v348
  %v452 = vpop.f32.mrb[0].mxu0
  %v453 = vadd.f32 %v73, %v452
  %v454 = vpop.f32.mrb[0].mxu0
  %455 = vmatprep.mubr.f32.mxu0 %v367
  %456 = vmatmul.mubr.f32.gmra.mrb[0].mxu0 %v350
  %v457 = vpop.f32.mrb[0].mxu0
  %v458 = vadd.f32 %v73, %v457
  %v459 = vpop.f32.mrb[0].mxu0
  %460 = vmatprep.mubr.f32.mxu0 %v370
  %461 = vmatmul.mubr.f32.gmra.mrb[0].mxu0 %v352
  %v462 = vpop.f32.mrb[0].mxu0
  %v463 = vadd.f32 %v73, %v462
  %v464 = vpop.f32.mrb[0].mxu0
  %465 = vmatprep.mubr.f32.mxu0 %v373
  %466 = vmatmul.mubr.f32.gmra.mrb[0].mxu0 %v354
  %v467 = vpop.f32.mrb[0].mxu0
  %v468 = vadd.f32 %v73, %v467
  %v469 = vpop.f32.mrb[0].mxu0
  %470 = vmatprep.mubr.f32.mxu0 %v376
  %471 = vmatmul.mubr.f32.gmra.mrb[0].mxu0 %v356
  %v472 = vpop.f32.mrb[0].mxu0
  %v473 = vadd.f32 %v73, %v472
  %v474 = vpop.f32.mrb[0].mxu0
  %475 = vmatprep.mubr.f32.mxu0 %v379
  %476 = vmatmul.mubr.f32.gmra.mrb[0].mxu0 %v358
  %v477 = vpop.f32.mrb[0].mxu0
  %v478 = vadd.f32 %v73, %v477
  %v479 = vpop.f32.mrb[0].mxu0
  %480 = vdwg.mxu0
  %v481 = vmax.f32 %v448, 0.0
  %v482 = vmax.f32 %v453, 0.0
  %v483 = vmax.f32 %v458, 0.0
  %v484 = vmax.f32 %v463, 0.0
  %v485 = vmax.f32 %v468, 0.0
  %v486 = vmax.f32 %v473, 0.0
  %v487 = vmax.f32 %v478, 0.0
  %v488 = vld [vmem:[%s3] sm:$0xff]
  %v489 = vld [vmem:[%s3 + $0x8] sm:$0xff]
  %v490 = vld [vmem:[%s3 + $0x10] sm:$0xff]
  %v491 = vld [vmem:[%s3 + $0x18] sm:$0xff]
  %v492 = vld [vmem:[%s3 + $0x20] sm:$0xff]
  %v493 = vld [vmem:[%s3 + $0x28] sm:$0xff]
  %v494 = vld [vmem:[%s3 + $0x30] sm:$0xff]
  %v495 = vld [vmem:[%s3 + $0x38] sm:$0xff]
  %v496 = vld [vmem:[%s3 + $0x40] sm:$0xff]
  %v497 = vld [vmem:[%s3 + $0x48] sm:$0xff]
  %v498 = vld [vmem:[%s3 + $0x50] sm:$0xff]
  %v499 = vld [vmem:[%s3 + $0x58] sm:$0xff]
  %v500 = vld [vmem:[%s3 + $0x60] sm:$0xff]
  %v501 = vld [vmem:[%s3 + $0x68] sm:$0xff]
  %v503 = vsel %vm75, %v489, 0
  %v506 = vsel %vm75, %v491, 0
  %v509 = vsel %vm75, %v493, 0
  %v512 = vsel %vm75, %v495, 0
  %v515 = vsel %vm75, %v497, 0
  %v518 = vsel %vm75, %v499, 0
  %v521 = vsel %vm75, %v501, 0
  %523 = vmatprep.subr.mxu0 0.0
  %524 = vmatpush1.msra.mxu0 %v29
  %525 = vmatprep.subr.mxu0 0.0
  %526 = vmatpush1.msra.mxu0 %v30
  %527 = vmatprep.subr.mxu0 0.0
  %528 = vmatpush1.msra.mxu0 %v31
  %529 = vmatprep.subr.mxu0 0.0
  %530 = vmatpush1.msra.mxu0 %v32
  %531 = vmatprep.subr.mxu0 0.0
  %532 = vmatpush1.msra.mxu0 %v33
  %533 = vmatprep.subr.mxu0 0.0
  %534 = vmatpush1.msra.mxu0 %v34
  %535 = vmatprep.subr.mxu0 0.0
  %536 = vmatpush1.msra.mxu0 %v35
  %537 = vmatprep.subr.mxu0 0.0
  %538 = vmatpush1.msra.mxu0 %v36
  %539 = vmatprep.subr.mxu0 0.0
  %540 = vmatpush1.msra.mxu0 %v37
  %541 = vmatprep.subr.mxu0 0.0
  %542 = vmatpush1.msra.mxu0 %v38
  %543 = vmatprep.subr.mxu0 0.0
  %544 = vmatpush1.msra.mxu0 %v39
  %545 = vmatprep.subr.mxu0 0.0
  %546 = vmatpush1.msra.mxu0 %v40
  %547 = vmatprep.subr.mxu0 0.0
  %548 = vmatpush1.msra.mxu0 %v41
  %549 = vmatprep.subr.mxu0 0.0
  %550 = vmatpush1.msra.mxu0 %v42
  %551 = vmatprep.subr.mxu0 0.0
  %552 = vmatpush1.msra.mxu0 %v43
  %553 = vmatprep.subr.mxu0 0.0
  %554 = vmatpush1.msra.mxu0 %v44
  %555 = vmatprep.subr.mxu0 0.0
  %556 = vmatpush1.msra.mxu0 %v45
  %557 = vmatprep.subr.mxu0 0.0
  %558 = vmatpush1.msra.mxu0 %v46
  %559 = vmatprep.subr.mxu0 0.0
  %560 = vmatpush1.msra.mxu0 %v47
  %561 = vmatprep.subr.mxu0 0.0
  %562 = vmatpush1.msra.mxu0 %v48
  %563 = vmatprep.subr.mxu0 0.0
  %564 = vmatpush1.msra.mxu0 %v49
  %565 = vmatprep.subr.mxu0 0.0
  %566 = vmatpush1.msra.mxu0 %v50
  %567 = vmatprep.subr.mxu0 0.0
  %568 = vmatpush1.msra.mxu0 %v51
  %569 = vmatprep.subr.mxu0 0.0
  %570 = vmatpush1.msra.mxu0 %v52
  %571 = vmatprep.subr.mxu0 0.0
  %572 = vmatpush1.msra.mxu0 %v53
  %573 = vmatprep.subr.mxu0 0.0
  %574 = vmatpush1.msra.mxu0 0.0
  %575 = vmatprep.subr.mxu0 0.0
  %576 = vmatpush1.msra.mxu0 0.0
  %577 = vmatprep.subr.mxu0 0.0
  %578 = vmatpush1.msra.mxu0 0.0
  %579 = vmatprep.subr.mxu0 0.0
  %580 = vmatpush1.msra.mxu0 0.0
  %581 = vmatprep.subr.mxu0 0.0
  %582 = vmatpush1.msra.mxu0 0.0
  %583 = vmatprep.subr.mxu0 0.0
  %584 = vmatpush1.msra.mxu0 0.0
  %585 = vmatprep.subr.mxu0 0.0
  %586 = vmatpush1.msra.mxu0 0.0
  %587 = vmatprep.mubr.f32.mxu0 %v503
  %588 = vmatmul.mubr.f32.gmra.mrb[0].mxu0 %v488
  %v589 = vpop.f32.mrb[0].mxu0
  %v590 = vadd.f32 %v73, %v589
  %v591 = vpop.f32.mrb[0].mxu0
  %592 = vmatprep.mubr.f32.mxu0 %v506
  %593 = vmatmul.mubr.f32.gmra.mrb[0].mxu0 %v490
  %v594 = vpop.f32.mrb[0].mxu0
  %v595 = vadd.f32 %v73, %v594
  %v596 = vpop.f32.mrb[0].mxu0
  %597 = vmatprep.mubr.f32.mxu0 %v509
  %598 = vmatmul.mubr.f32.gmra.mrb[0].mxu0 %v492
  %v599 = vpop.f32.mrb[0].mxu0
  %v600 = vadd.f32 %v73, %v599
  %v601 = vpop.f32.mrb[0].mxu0
  %602 = vmatprep.mubr.f32.mxu0 %v512
  %603 = vmatmul.mubr.f32.gmra.mrb[0].mxu0 %v494
  %v604 = vpop.f32.mrb[0].mxu0
  %v605 = vadd.f32 %v73, %v604
  %v606 = vpop.f32.mrb[0].mxu0
  %607 = vmatprep.mubr.f32.mxu0 %v515
  %608 = vmatmul.mubr.f32.gmra.mrb[0].mxu0 %v496
  %v609 = vpop.f32.mrb[0].mxu0
  %v610 = vadd.f32 %v73, %v609
  %v611 = vpop.f32.mrb[0].mxu0
  %612 = vmatprep.mubr.f32.mxu0 %v518
  %613 = vmatmul.mubr.f32.gmra.mrb[0].mxu0 %v498
  %v614 = vpop.f32.mrb[0].mxu0
  %v615 = vadd.f32 %v73, %v614
  %v616 = vpop.f32.mrb[0].mxu0
  %617 = vmatprep.mubr.f32.mxu0 %v521
  %618 = vmatmul.mubr.f32.gmra.mrb[0].mxu0 %v500
  %v619 = vpop.f32.mrb[0].mxu0
  %v620 = vadd.f32 %v73, %v619
  %v621 = vpop.f32.mrb[0].mxu0
  %622 = vdwg.mxu0
  %v623 = vmax.f32 %v590, 0.0
  %v624 = vmax.f32 %v595, 0.0
  %v625 = vmax.f32 %v600, 0.0
  %v626 = vmax.f32 %v605, 0.0
  %v627 = vmax.f32 %v610, 0.0
  %v628 = vmax.f32 %v615, 0.0
  %v629 = vmax.f32 %v620, 0.0
  %v630 = vmax.f32 %v197, %v339
  %v631 = vmax.f32 %v198, %v340
  %v632 = vmax.f32 %v199, %v341
  %v633 = vmax.f32 %v200, %v342
  %v634 = vmax.f32 %v201, %v343
  %v635 = vmax.f32 %v202, %v344
  %v636 = vmax.f32 %v203, %v345
  %v637 = vmax.f32 %v481, %v623
  %v638 = vmax.f32 %v482, %v624
  %v639 = vmax.f32 %v483, %v625
  %v640 = vmax.f32 %v484, %v626
  %v641 = vmax.f32 %v485, %v627
  %v642 = vmax.f32 %v486, %v628
  %v643 = vmax.f32 %v487, %v629
  %v644 = vmax.f32 %v630, %v637
  %v645 = vmax.f32 %v631, %v638
  %v646 = vmax.f32 %v632, %v639
  %v647 = vmax.f32 %v633, %v640
  %v648 = vmax.f32 %v634, %v641
  %v649 = vmax.f32 %v635, %v642
  %v650 = vmax.f32 %v636, %v643
  %v651 = vld [vmem:[%s6] sm:$0x1]
  %v653 = vlaneseq
  %v654 = vshrl.u32 %v653, 7
  %v655 = vsub.s32 0, %v654
  %v656 = vrot.slane %v651, %v655
  %v658 = vmul.f32 %v644, %v656
  %v659 = vmul.f32 %v645, %v656
  %v660 = vmul.f32 %v646, %v656
  %v661 = vmul.f32 %v647, %v656
  %v662 = vmul.f32 %v648, %v656
  %v663 = vmul.f32 %v649, %v656
  %v664 = vmul.f32 %v650, %v656
  %v665 = vld [vmem:[%s7] sm:$0x1]
  %v667 = vlaneseq
  %v668 = vshrl.u32 %v667, 7
  %v669 = vsub.s32 0, %v668
  %v670 = vrot.slane %v665, %v669
  %v672 = vadd.f32 %v658, %v670
  %v673 = vadd.f32 %v659, %v670
  %v674 = vadd.f32 %v660, %v670
  %v675 = vadd.f32 %v661, %v670
  %v676 = vadd.f32 %v662, %v670
  %v677 = vadd.f32 %v663, %v670
  %v678 = vadd.f32 %v664, %v670
  %vm679 = vcmask 130048
  %680 = vst.msk [vmem:[%s8] sm:$0xff] %vm679, %v672
  %681 = vst.msk [vmem:[%s8 + $0x8] sm:$0xff] %vm679, %v673
  %682 = vst.msk [vmem:[%s8 + $0x10] sm:$0xff] %vm679, %v674
  %683 = vst.msk [vmem:[%s8 + $0x18] sm:$0xff] %vm679, %v675
  %684 = vst.msk [vmem:[%s8 + $0x20] sm:$0xff] %vm679, %v676
  %685 = vst.msk [vmem:[%s8 + $0x28] sm:$0xff] %vm679, %v677
  %686 = vst.msk [vmem:[%s8 + $0x30] sm:$0xff] %vm679, %v678
  // Predicated region
  $region34: #{variant4_forward.5} parent=0 // pred_check
    _
  $region35: #{variant4_forward.5} parent=0 // pred_check_branch
    %688 = sbr.rel (0) target = $region37
  $region36: #{variant4_forward.5} parent=0 // pred_region
    _
  $region37: #{variant4_forward.5} parent=0 // pred_fallthru
    _
  // Predicated region
  $region38: #{variant4_forward.5} parent=0 // pred_check
    _
  $region39: #{variant4_forward.5} parent=0 // pred_check_branch
    %690 = sbr.rel (0) target = $region41
  $region40: #{variant4_forward.5} parent=0 // pred_region
    _
  $region41: #{variant4_forward.5} parent=0 // pred_fallthru
    _

// kernel: variant4_forward.6
$region0: #{variant4_forward.6}
  #allocation0 [shape = 'u32[]', space=smem, size = 0x4, offset = 0x4, fixed_abs, tag = 'smem constant byte address 0x4 - core index']
  #allocation1 [shape = 'u32[144,128]{1,0:T(1,128)}', space=vmem, size = 0x12000, scoped, tag = 'internal scratch']
  %s0 = inlined_call_operand.vmem [shape: f32[24,400], index: 0, kind: input, shape index: {}]
  %s1 = inlined_call_operand.vmem [shape: f32[400,32], index: 1, kind: input, shape index: {}]
  %s2 = inlined_call_operand.vmem [shape: f32[1,32], index: 2, kind: input, shape index: {}]
  %s3 = inlined_call_operand.vmem [shape: f32[1,32], index: 3, kind: input, shape index: {}]
  %s4 = inlined_call_operand.vmem [shape: f32[1,32], index: 4, kind: input, shape index: {}]
  %s5 = inlined_call_operand.vmem [shape: f32[24,32], index: 5, kind: output, shape index: {}]
  %s6 = sld [smem:[#allocation0]]
  $region30: #{variant4_forward.6} parent=0
    _
  %s8 = ssub.s32 1, %s6
  %s9 = scalar_select 0, %s8, %s6
  // Predicated region
  $region2: #{variant4_forward.6} parent=0 // pred_check
    _
  $region3: #{variant4_forward.6} parent=0 // pred_check_branch
    %11 = sbr.rel (0) target = $region5
  $region4: #{variant4_forward.6} parent=0 // pred_region
    _
  $region5: #{variant4_forward.6} parent=0 // pred_fallthru
    _
  // Predicated region
  $region6: #{variant4_forward.6} parent=0 // pred_check
    _
  $region7: #{variant4_forward.6} parent=0 // pred_check_branch
    %13 = sbr.rel (0) target = $region9
  $region8: #{variant4_forward.6} parent=0 // pred_region
    _
  $region9: #{variant4_forward.6} parent=0 // pred_fallthru
    _
  // Predicated region
  $region10: #{variant4_forward.6} parent=0 // pred_check
    _
  $region11: #{variant4_forward.6} parent=0 // pred_check_branch
    %15 = sbr.rel (0) target = $region13
  $region12: #{variant4_forward.6} parent=0 // pred_region
    _
  $region13: #{variant4_forward.6} parent=0 // pred_fallthru
    _
  // Predicated region
  $region14: #{variant4_forward.6} parent=0 // pred_check
    _
  $region15: #{variant4_forward.6} parent=0 // pred_check_branch
    %17 = sbr.rel (0) target = $region17
  $region16: #{variant4_forward.6} parent=0 // pred_region
    _
  $region17: #{variant4_forward.6} parent=0 // pred_fallthru
    _
  // Predicated region
  $region18: #{variant4_forward.6} parent=0 // pred_check
    _
  $region19: #{variant4_forward.6} parent=0 // pred_check_branch
    %19 = sbr.rel (0) target = $region21
  $region20: #{variant4_forward.6} parent=0 // pred_region
    _
  $region21: #{variant4_forward.6} parent=0 // pred_fallthru
    _
  %v20 = vld [vmem:[%s0] sm:$0xff]
  %v21 = vld [vmem:[%s0 + $0x8] sm:$0xff]
  %v22 = vld [vmem:[%s0 + $0x10] sm:$0xff]
  %v23 = vld [vmem:[%s0 + $0x18] sm:$0xff]
  %v24 = vld [vmem:[%s0 + $0x20] sm:$0xff]
  %v25 = vld [vmem:[%s0 + $0x28] sm:$0xff]
  %v26 = vld [vmem:[%s0 + $0x30] sm:$0xff]
  %v27 = vld [vmem:[%s0 + $0x38] sm:$0xff]
  %v28 = vld [vmem:[%s0 + $0x40] sm:$0xff]
  %v29 = vld [vmem:[%s0 + $0x48] sm:$0xff]
  %v30 = vld [vmem:[%s0 + $0x50] sm:$0xff]
  %v31 = vld [vmem:[%s0 + $0x58] sm:$0xff]
  %v32 = vld [vmem:[%s1] sm:$0xff]
  %v33 = vld [vmem:[%s1 + $0x8] sm:$0xff]
  %v34 = vld [vmem:[%s1 + $0x10] sm:$0xff]
  %v35 = vld [vmem:[%s1 + $0x18] sm:$0xff]
  %v36 = vld [vmem:[%s1 + $0x20] sm:$0xff]
  %v37 = vld [vmem:[%s1 + $0x28] sm:$0xff]
  %v38 = vld [vmem:[%s1 + $0x30] sm:$0xff]
  %v39 = vld [vmem:[%s1 + $0x38] sm:$0xff]
  %v40 = vld [vmem:[%s1 + $0x40] sm:$0xff]
  %v41 = vld [vmem:[%s1 + $0x48] sm:$0xff]
  %v42 = vld [vmem:[%s1 + $0x50] sm:$0xff]
  %v43 = vld [vmem:[%s1 + $0x58] sm:$0xff]
  %v44 = vld [vmem:[%s1 + $0x60] sm:$0xff]
  %v45 = vld [vmem:[%s1 + $0x68] sm:$0xff]
  %v46 = vld [vmem:[%s1 + $0x70] sm:$0xff]
  %v47 = vld [vmem:[%s1 + $0x78] sm:$0xff]
  %v48 = vld [vmem:[%s1 + $0x80] sm:$0xff]
  %v49 = vld [vmem:[%s1 + $0x88] sm:$0xff]
  %v50 = vld [vmem:[%s1 + $0x90] sm:$0xff]
  %v51 = vld [vmem:[%s1 + $0x98] sm:$0xff]
  %v52 = vld [vmem:[%s1 + $0xa0] sm:$0xff]
  %v53 = vld [vmem:[%s1 + $0xa8] sm:$0xff]
  %v54 = vld [vmem:[%s1 + $0xb0] sm:$0xff]
  %v55 = vld [vmem:[%s1 + $0xb8] sm:$0xff]
  %v56 = vld [vmem:[%s1 + $0xc0] sm:$0xff]
  %v57 = vld [vmem:[%s1 + $0xc8] sm:$0xff]
  %v58 = vld [vmem:[%s1 + $0xd0] sm:$0xff]
  %v59 = vld [vmem:[%s1 + $0xd8] sm:$0xff]
  %v60 = vld [vmem:[%s1 + $0xe0] sm:$0xff]
  %v61 = vld [vmem:[%s1 + $0xe8] sm:$0xff]
  %v62 = vld [vmem:[%s1 + $0xf0] sm:$0xff]
  %v63 = vld [vmem:[%s1 + $0xf8] sm:$0xff]
  %v64 = vld [vmem:[%s1 + $0x100] sm:$0xff]
  %v65 = vld [vmem:[%s1 + $0x108] sm:$0xff]
  %v66 = vld [vmem:[%s1 + $0x110] sm:$0xff]
  %v67 = vld [vmem:[%s1 + $0x118] sm:$0xff]
  %v68 = vld [vmem:[%s1 + $0x120] sm:$0xff]
  %v69 = vld [vmem:[%s1 + $0x128] sm:$0xff]
  %v70 = vld [vmem:[%s1 + $0x130] sm:$0xff]
  %v71 = vld [vmem:[%s1 + $0x138] sm:$0xff]
  %v72 = vld [vmem:[%s1 + $0x140] sm:$0xff]
  %v73 = vld [vmem:[%s1 + $0x148] sm:$0xff]
  %v74 = vld [vmem:[%s1 + $0x150] sm:$0xff]
  %v75 = vld [vmem:[%s1 + $0x158] sm:$0xff]
  %v76 = vld [vmem:[%s1 + $0x160] sm:$0xff]
  %v77 = vld [vmem:[%s1 + $0x168] sm:$0xff]
  %v78 = vld [vmem:[%s1 + $0x170] sm:$0xff]
  %v79 = vld [vmem:[%s1 + $0x178] sm:$0xff]
  %v80 = vld [vmem:[%s1 + $0x180] sm:$0xff]
  %v81 = vld [vmem:[%s1 + $0x188] sm:$0xff]
  %v82 = vld [vmem:[%s2] sm:$0x1]
  %v84 = vlaneseq
  %v85 = vshrl.u32 %v84, 7
  %v86 = vsub.s32 0, %v85
  %v87 = vrot.slane %v82, %v86
  %vm89 = vcmask 130048
  %v91 = vsel %vm89, %v23, 0
  %v94 = vsel %vm89, %v27, 0
  %v97 = vsel %vm89, %v31, 0
  %99 = vmatprep.subr.mxu0 0.0
  %100 = vmatpush1.msra.mxu0 %v32
  %101 = vmatprep.subr.mxu0 0.0
  %102 = vmatpush1.msra.mxu0 %v33
  %103 = vmatprep.subr.mxu0 0.0
  %104 = vmatpush1.msra.mxu0 %v34
  %105 = vmatprep.subr.mxu0 0.0
  %106 = vmatpush1.msra.mxu0 %v35
  %107 = vmatprep.subr.mxu0 0.0
  %108 = vmatpush1.msra.mxu0 %v36
  %109 = vmatprep.subr.mxu0 0.0
  %110 = vmatpush1.msra.mxu0 %v37
  %111 = vmatprep.subr.mxu0 0.0
  %112 = vmatpush1.msra.mxu0 %v38
  %113 = vmatprep.subr.mxu0 0.0
  %114 = vmatpush1.msra.mxu0 %v39
  %115 = vmatprep.subr.mxu0 0.0
  %116 = vmatpush1.msra.mxu0 %v40
  %117 = vmatprep.subr.mxu0 0.0
  %118 = vmatpush1.msra.mxu0 %v41
  %119 = vmatprep.subr.mxu0 0.0
  %120 = vmatpush1.msra.mxu0 %v42
  %121 = vmatprep.subr.mxu0 0.0
  %122 = vmatpush1.msra.mxu0 %v43
  %123 = vmatprep.subr.mxu0 0.0
  %124 = vmatpush1.msra.mxu0 %v44
  %125 = vmatprep.subr.mxu0 0.0
  %126 = vmatpush1.msra.mxu0 %v45
  %127 = vmatprep.subr.mxu0 0.0
  %128 = vmatpush1.msra.mxu0 %v46
  %129 = vmatprep.subr.mxu0 0.0
  %130 = vmatpush1.msra.mxu0 %v47
  %131 = vmatprep.subr.mxu0 0.0
  %132 = vmatpush1.msra.mxu0 %v48
  %133 = vmatprep.subr.mxu0 0.0
  %134 = vmatpush1.msra.mxu0 %v49
  %135 = vmatprep.subr.mxu0 0.0
  %136 = vmatpush1.msra.mxu0 %v50
  %137 = vmatprep.subr.mxu0 0.0
  %138 = vmatpush1.msra.mxu0 %v51
  %139 = vmatprep.subr.mxu0 0.0
  %140 = vmatpush1.msra.mxu0 %v52
  %141 = vmatprep.subr.mxu0 0.0
  %142 = vmatpush1.msra.mxu0 %v53
  %143 = vmatprep.subr.mxu0 0.0
  %144 = vmatpush1.msra.mxu0 %v54
  %145 = vmatprep.subr.mxu0 0.0
  %146 = vmatpush1.msra.mxu0 %v55
  %147 = vmatprep.subr.mxu0 0.0
  %148 = vmatpush1.msra.mxu0 %v56
  %149 = vmatprep.subr.mxu0 0.0
  %150 = vmatpush1.msra.mxu0 %v57
  %151 = vmatprep.subr.mxu0 0.0
  %152 = vmatpush1.msra.mxu0 %v58
  %153 = vmatprep.subr.mxu0 0.0
  %154 = vmatpush1.msra.mxu0 %v59
  %155 = vmatprep.subr.mxu0 0.0
  %156 = vmatpush1.msra.mxu0 %v60
  %157 = vmatprep.subr.mxu0 0.0
  %158 = vmatpush1.msra.mxu0 %v61
  %159 = vmatprep.subr.mxu0 0.0
  %160 = vmatpush1.msra.mxu0 %v62
  %161 = vmatprep.subr.mxu0 0.0
  %162 = vmatpush1.msra.mxu0 %v63
  %163 = vmatprep.mubr.f32.mxu0 %v21
  %164 = vmatmul.mubr.f32.gmra.mrb[0].mxu0 %v20
  %v165 = vpop.f32.mrb[0].mxu0
  %v166 = vadd.f32 %v87, %v165
  %v167 = vpop.f32.mrb[0].mxu0
  %168 = vmatprep.mubr.f32.mxu0 %v25
  %169 = vmatmul.mubr.f32.gmra.mrb[0].mxu0 %v24
  %v170 = vpop.f32.mrb[0].mxu0
  %v171 = vadd.f32 %v87, %v170
  %v172 = vpop.f32.mrb[0].mxu0
  %173 = vmatprep.mubr.f32.mxu0 %v29
  %174 = vmatmul.mubr.f32.gmra.mrb[0].mxu0 %v28
  %v175 = vpop.f32.mrb[0].mxu0
  %v176 = vadd.f32 %v87, %v175
  %v177 = vpop.f32.mrb[0].mxu0
  %178 = vdwg.mxu0
  %179 = vmatprep.subr.mxu0 0.0
  %180 = vmatpush1.msra.mxu0 %v64
  %181 = vmatprep.subr.mxu0 0.0
  %182 = vmatpush1.msra.mxu0 %v65
  %183 = vmatprep.subr.mxu0 0.0
  %184 = vmatpush1.msra.mxu0 %v66
  %185 = vmatprep.subr.mxu0 0.0
  %186 = vmatpush1.msra.mxu0 %v67
  %187 = vmatprep.subr.mxu0 0.0
  %188 = vmatpush1.msra.mxu0 %v68
  %189 = vmatprep.subr.mxu0 0.0
  %190 = vmatpush1.msra.mxu0 %v69
  %191 = vmatprep.subr.mxu0 0.0
  %192 = vmatpush1.msra.mxu0 %v70
  %193 = vmatprep.subr.mxu0 0.0
  %194 = vmatpush1.msra.mxu0 %v71
  %195 = vmatprep.subr.mxu0 0.0
  %196 = vmatpush1.msra.mxu0 %v72
  %197 = vmatprep.subr.mxu0 0.0
  %198 = vmatpush1.msra.mxu0 %v73
  %199 = vmatprep.subr.mxu0 0.0
  %200 = vmatpush1.msra.mxu0 %v74
  %201 = vmatprep.subr.mxu0 0.0
  %202 = vmatpush1.msra.mxu0 %v75
  %203 = vmatprep.subr.mxu0 0.0
  %204 = vmatpush1.msra.mxu0 %v76
  %205 = vmatprep.subr.mxu0 0.0
  %206 = vmatpush1.msra.mxu0 %v77
  %207 = vmatprep.subr.mxu0 0.0
  %208 = vmatpush1.msra.mxu0 %v78
  %209 = vmatprep.subr.mxu0 0.0
  %210 = vmatpush1.msra.mxu0 %v79
  %211 = vmatprep.subr.mxu0 0.0
  %212 = vmatpush1.msra.mxu0 %v80
  %213 = vmatprep.subr.mxu0 0.0
  %214 = vmatpush1.msra.mxu0 %v81
  %215 = vmatprep.subr.mxu0 0.0
  %216 = vmatpush1.msra.mxu0 0.0
  %217 = vmatprep.subr.mxu0 0.0
  %218 = vmatpush1.msra.mxu0 0.0
  %219 = vmatprep.subr.mxu0 0.0
  %220 = vmatpush1.msra.mxu0 0.0
  %221 = vmatprep.subr.mxu0 0.0
  %222 = vmatpush1.msra.mxu0 0.0
  %223 = vmatprep.subr.mxu0 0.0
  %224 = vmatpush1.msra.mxu0 0.0
  %225 = vmatprep.subr.mxu0 0.0
  %226 = vmatpush1.msra.mxu0 0.0
  %227 = vmatprep.subr.mxu0 0.0
  %228 = vmatpush1.msra.mxu0 0.0
  %229 = vmatprep.subr.mxu0 0.0
  %230 = vmatpush1.msra.mxu0 0.0
  %231 = vmatprep.subr.mxu0 0.0
  %232 = vmatpush1.msra.mxu0 0.0
  %233 = vmatprep.subr.mxu0 0.0
  %234 = vmatpush1.msra.mxu0 0.0
  %235 = vmatprep.subr.mxu0 0.0
  %236 = vmatpush1.msra.mxu0 0.0
  %237 = vmatprep.subr.mxu0 0.0
  %238 = vmatpush1.msra.mxu0 0.0
  %239 = vmatprep.subr.mxu0 0.0
  %240 = vmatpush1.msra.mxu0 0.0
  %241 = vmatprep.subr.mxu0 0.0
  %242 = vmatpush1.msra.mxu0 0.0
  %243 = vmatprep.mubr.f32.mxu0 %v91
  %244 = vmatmul.mubr.f32.gmra.mrb[0].mxu0 %v22
  %v245 = vpop.f32.mrb[0].mxu0
  %v246 = vadd.f32 %v166, %v245
  %v247 = vpop.f32.mrb[0].mxu0
  %248 = vmatprep.mubr.f32.mxu0 %v94
  %249 = vmatmul.mubr.f32.gmra.mrb[0].mxu0 %v26
  %v250 = vpop.f32.mrb[0].mxu0
  %v251 = vadd.f32 %v171, %v250
  %v252 = vpop.f32.mrb[0].mxu0
  %253 = vmatprep.mubr.f32.mxu0 %v97
  %254 = vmatmul.mubr.f32.gmra.mrb[0].mxu0 %v30
  %v255 = vpop.f32.mrb[0].mxu0
  %v256 = vadd.f32 %v176, %v255
  %v257 = vpop.f32.mrb[0].mxu0
  %258 = vdwg.mxu0
  %v259 = vmax.f32 %v246, 0.0
  %v260 = vmax.f32 %v251, 0.0
  %v261 = vmax.f32 %v256, 0.0
  %v262 = vld [vmem:[%s3] sm:$0x1]
  %v264 = vlaneseq
  %v265 = vshrl.u32 %v264, 7
  %v266 = vsub.s32 0, %v265
  %v267 = vrot.slane %v262, %v266
  %v269 = vmul.f32 %v259, %v267
  %v270 = vmul.f32 %v260, %v267
  %v271 = vmul.f32 %v261, %v267
  %v272 = vld [vmem:[%s4] sm:$0x1]
  %v274 = vlaneseq
  %v275 = vshrl.u32 %v274, 7
  %v276 = vsub.s32 0, %v275
  %v277 = vrot.slane %v272, %v276
  %v279 = vadd.f32 %v269, %v277
  %v280 = vadd.f32 %v270, %v277
  %v281 = vadd.f32 %v271, %v277
  %vm282 = vcmask 261120
  %283 = vst.msk [vmem:[%s5] sm:$0xff] %vm282, %v279
  %284 = vst.msk [vmem:[%s5 + $0x8] sm:$0xff] %vm282, %v280
  %285 = vst.msk [vmem:[%s5 + $0x10] sm:$0xff] %vm282, %v281
  // Predicated region
  $region22: #{variant4_forward.6} parent=0 // pred_check
    _
  $region23: #{variant4_forward.6} parent=0 // pred_check_branch
    %287 = sbr.rel (0) target = $region25
  $region24: #{variant4_forward.6} parent=0 // pred_region
    _
  $region25: #{variant4_forward.6} parent=0 // pred_fallthru
    _
  // Predicated region
  $region26: #{variant4_forward.6} parent=0 // pred_check
    _
  $region27: #{variant4_forward.6} parent=0 // pred_check_branch
    %289 = sbr.rel (0) target = $region29
  $region28: #{variant4_forward.6} parent=0 // pred_region
    _
  $region29: #{variant4_forward.6} parent=0 // pred_fallthru
    _

// kernel: variant4_forward.7
$region0: #{variant4_forward.7}
  #allocation0 [shape = 'u32[]', space=smem, size = 0x4, offset = 0x4, fixed_abs, tag = 'smem constant byte address 0x4 - core index']
  #allocation1 [shape = 'u32[144,128]{1,0:T(1,128)}', space=vmem, size = 0x12000, scoped, tag = 'internal scratch']
  %s0 = inlined_call_operand.vmem [shape: f32[8,288], index: 0, kind: input, shape index: {}]
  %s1 = inlined_call_operand.vmem [shape: f32[288,144], index: 1, kind: input, shape index: {}]
  %s2 = inlined_call_operand.vmem [shape: f32[1,144], index: 2, kind: input, shape index: {}]
  %s3 = inlined_call_operand.vmem [shape: f32[144,36], index: 3, kind: input, shape index: {}]
  %s4 = inlined_call_operand.vmem [shape: f32[1,36], index: 4, kind: input, shape index: {}]
  %s5 = inlined_call_operand.vmem [shape: f32[36,10], index: 5, kind: input, shape index: {}]
  %s6 = inlined_call_operand.vmem [shape: f32[1,10], index: 6, kind: input, shape index: {}]
  %s7 = inlined_call_operand.vmem [shape: f32[8,10], index: 7, kind: output, shape index: {}]
  %s8 = sld [smem:[#allocation0]]
  $region38: #{variant4_forward.7} parent=0
    _
  %s10 = ssub.s32 1, %s8
  %s11 = scalar_select 0, %s10, %s8
  // Predicated region
  $region2: #{variant4_forward.7} parent=0 // pred_check
    _
  $region3: #{variant4_forward.7} parent=0 // pred_check_branch
    %13 = sbr.rel (0) target = $region5
  $region4: #{variant4_forward.7} parent=0 // pred_region
    _
  $region5: #{variant4_forward.7} parent=0 // pred_fallthru
    _
  // Predicated region
  $region6: #{variant4_forward.7} parent=0 // pred_check
    _
  $region7: #{variant4_forward.7} parent=0 // pred_check_branch
    %15 = sbr.rel (0) target = $region9
  $region8: #{variant4_forward.7} parent=0 // pred_region
    _
  $region9: #{variant4_forward.7} parent=0 // pred_fallthru
    _
  // Predicated region
  $region10: #{variant4_forward.7} parent=0 // pred_check
    _
  $region11: #{variant4_forward.7} parent=0 // pred_check_branch
    %17 = sbr.rel (0) target = $region13
  $region12: #{variant4_forward.7} parent=0 // pred_region
    _
  $region13: #{variant4_forward.7} parent=0 // pred_fallthru
    _
  // Predicated region
  $region14: #{variant4_forward.7} parent=0 // pred_check
    _
  $region15: #{variant4_forward.7} parent=0 // pred_check_branch
    %19 = sbr.rel (0) target = $region17
  $region16: #{variant4_forward.7} parent=0 // pred_region
    _
  $region17: #{variant4_forward.7} parent=0 // pred_fallthru
    _
  // Predicated region
  $region18: #{variant4_forward.7} parent=0 // pred_check
    _
  $region19: #{variant4_forward.7} parent=0 // pred_check_branch
    %21 = sbr.rel (0) target = $region21
  $region20: #{variant4_forward.7} parent=0 // pred_region
    _
  $region21: #{variant4_forward.7} parent=0 // pred_fallthru
    _
  // Predicated region
  $region22: #{variant4_forward.7} parent=0 // pred_check
    _
  $region23: #{variant4_forward.7} parent=0 // pred_check_branch
    %23 = sbr.rel (0) target = $region25
  $region24: #{variant4_forward.7} parent=0 // pred_region
    _
  $region25: #{variant4_forward.7} parent=0 // pred_fallthru
    _
  // Predicated region
  $region26: #{variant4_forward.7} parent=0 // pred_check
    _
  $region27: #{variant4_forward.7} parent=0 // pred_check_branch
    %25 = sbr.rel (0) target = $region29
  $region28: #{variant4_forward.7} parent=0 // pred_region
    _
  $region29: #{variant4_forward.7} parent=0 // pred_fallthru
    _
  %v26 = vld [vmem:[%s0] sm:$0xff]
  %v27 = vld [vmem:[%s0 + $0x8] sm:$0xff]
  %v28 = vld [vmem:[%s0 + $0x10] sm:$0xff]
  %v29 = vld [vmem:[%s1] sm:$0xff]
  %v30 = vld [vmem:[%s1 + $0x8] sm:$0xff]
  %v31 = vld [vmem:[%s1 + $0x10] sm:$0xff]
  %v32 = vld [vmem:[%s1 + $0x18] sm:$0xff]
  %v33 = vld [vmem:[%s1 + $0x20] sm:$0xff]
  %v34 = vld [vmem:[%s1 + $0x28] sm:$0xff]
  %v35 = vld [vmem:[%s1 + $0x30] sm:$0xff]
  %v36 = vld [vmem:[%s1 + $0x38] sm:$0xff]
  %v37 = vld [vmem:[%s1 + $0x40] sm:$0xff]
  %v38 = vld [vmem:[%s1 + $0x48] sm:$0xff]
  %v39 = vld [vmem:[%s1 + $0x50] sm:$0xff]
  %v40 = vld [vmem:[%s1 + $0x58] sm:$0xff]
  %v41 = vld [vmem:[%s1 + $0x60] sm:$0xff]
  %v42 = vld [vmem:[%s1 + $0x68] sm:$0xff]
  %v43 = vld [vmem:[%s1 + $0x70] sm:$0xff]
  %v44 = vld [vmem:[%s1 + $0x78] sm:$0xff]
  %v45 = vld [vmem:[%s1 + $0x80] sm:$0xff]
  %v46 = vld [vmem:[%s1 + $0x88] sm:$0xff]
  %v47 = vld [vmem:[%s1 + $0x90] sm:$0xff]
  %v48 = vld [vmem:[%s1 + $0x98] sm:$0xff]
  %v49 = vld [vmem:[%s1 + $0xa0] sm:$0xff]
  %v50 = vld [vmem:[%s1 + $0xa8] sm:$0xff]
  %v51 = vld [vmem:[%s1 + $0xb0] sm:$0xff]
  %v52 = vld [vmem:[%s1 + $0xb8] sm:$0xff]
  %v53 = vld [vmem:[%s1 + $0xc0] sm:$0xff]
  %v54 = vld [vmem:[%s1 + $0xc8] sm:$0xff]
  %v55 = vld [vmem:[%s1 + $0xd0] sm:$0xff]
  %v56 = vld [vmem:[%s1 + $0xd8] sm:$0xff]
  %v57 = vld [vmem:[%s1 + $0xe0] sm:$0xff]
  %v58 = vld [vmem:[%s1 + $0xe8] sm:$0xff]
  %v59 = vld [vmem:[%s1 + $0xf0] sm:$0xff]
  %v60 = vld [vmem:[%s1 + $0xf8] sm:$0xff]
  %v61 = vld [vmem:[%s1 + $0x100] sm:$0xff]
  %v62 = vld [vmem:[%s1 + $0x108] sm:$0xff]
  %v63 = vld [vmem:[%s1 + $0x110] sm:$0xff]
  %v64 = vld [vmem:[%s1 + $0x118] sm:$0xff]
  %v65 = vld [vmem:[%s1 + $0x120] sm:$0xff]
  %v66 = vld [vmem:[%s1 + $0x128] sm:$0xff]
  %v67 = vld [vmem:[%s1 + $0x130] sm:$0xff]
  %v68 = vld [vmem:[%s1 + $0x138] sm:$0xff]
  %v69 = vld [vmem:[%s1 + $0x140] sm:$0xff]
  %v70 = vld [vmem:[%s1 + $0x148] sm:$0xff]
  %v71 = vld [vmem:[%s1 + $0x150] sm:$0xff]
  %v72 = vld [vmem:[%s1 + $0x158] sm:$0xff]
  %v73 = vld [vmem:[%s1 + $0x160] sm:$0xff]
  %v74 = vld [vmem:[%s1 + $0x168] sm:$0xff]
  %v75 = vld [vmem:[%s1 + $0x170] sm:$0xff]
  %v76 = vld [vmem:[%s1 + $0x178] sm:$0xff]
  %v77 = vld [vmem:[%s1 + $0x180] sm:$0xff]
  %v78 = vld [vmem:[%s1 + $0x188] sm:$0xff]
  %v79 = vld [vmem:[%s1 + $0x190] sm:$0xff]
  %v80 = vld [vmem:[%s1 + $0x198] sm:$0xff]
  %v81 = vld [vmem:[%s1 + $0x1a0] sm:$0xff]
  %v82 = vld [vmem:[%s1 + $0x1a8] sm:$0xff]
  %v83 = vld [vmem:[%s1 + $0x1b0] sm:$0xff]
  %v84 = vld [vmem:[%s1 + $0x1b8] sm:$0xff]
  %v85 = vld [vmem:[%s1 + $0x1c0] sm:$0xff]
  %v86 = vld [vmem:[%s1 + $0x1c8] sm:$0xff]
  %v87 = vld [vmem:[%s1 + $0x1d0] sm:$0xff]
  %v88 = vld [vmem:[%s1 + $0x1d8] sm:$0xff]
  %v89 = vld [vmem:[%s1 + $0x1e0] sm:$0xff]
  %v90 = vld [vmem:[%s1 + $0x1e8] sm:$0xff]
  %v91 = vld [vmem:[%s1 + $0x1f0] sm:$0xff]
  %v92 = vld [vmem:[%s1 + $0x1f8] sm:$0xff]
  %v93 = vld [vmem:[%s1 + $0x200] sm:$0xff]
  %v94 = vld [vmem:[%s1 + $0x208] sm:$0xff]
  %v95 = vld [vmem:[%s1 + $0x210] sm:$0xff]
  %v96 = vld [vmem:[%s1 + $0x218] sm:$0xff]
  %v97 = vld [vmem:[%s1 + $0x220] sm:$0xff]
  %v98 = vld [vmem:[%s1 + $0x228] sm:$0xff]
  %v99 = vld [vmem:[%s1 + $0x230] sm:$0xff]
  %v100 = vld [vmem:[%s1 + $0x238] sm:$0xff]
  %v101 = vld [vmem:[%s2] sm:$0x3]
  %v103 = vlaneseq
  %v104 = vshrl.u32 %v103, 7
  %v105 = vsub.s32 0, %v104
  %v106 = vrot.slane %v101, %v105
  %v107 = vlaneseq
  %v108 = vshrl.u32 %v107, 7
  %v109 = vsub.s32 1, %v108
  %v110 = vrot.slane %v101, %v109
  %vm113 = vcmask 261120
  %v115 = vsel %vm113, %v28, 0
  %117 = vmatprep.subr.mxu0 %v30
  %118 = vmatpush1.msra.mxu0 %v29
  %119 = vmatprep.subr.mxu0 %v32
  %120 = vmatpush1.msra.mxu0 %v31
  %121 = vmatprep.subr.mxu0 %v34
  %122 = vmatpush1.msra.mxu0 %v33
  %123 = vmatprep.subr.mxu0 %v36
  %124 = vmatpush1.msra.mxu0 %v35
  %125 = vmatprep.subr.mxu0 %v38
  %126 = vmatpush1.msra.mxu0 %v37
  %127 = vmatprep.subr.mxu0 %v40
  %128 = vmatpush1.msra.mxu0 %v39
  %129 = vmatprep.subr.mxu0 %v42
  %130 = vmatpush1.msra.mxu0 %v41
  %131 = vmatprep.subr.mxu0 %v44
  %132 = vmatpush1.msra.mxu0 %v43
  %133 = vmatprep.subr.mxu0 %v46
  %134 = vmatpush1.msra.mxu0 %v45
  %135 = vmatprep.subr.mxu0 %v48
  %136 = vmatpush1.msra.mxu0 %v47
  %137 = vmatprep.subr.mxu0 %v50
  %138 = vmatpush1.msra.mxu0 %v49
  %139 = vmatprep.subr.mxu0 %v52
  %140 = vmatpush1.msra.mxu0 %v51
  %141 = vmatprep.subr.mxu0 %v54
  %142 = vmatpush1.msra.mxu0 %v53
  %143 = vmatprep.subr.mxu0 %v56
  %144 = vmatpush1.msra.mxu0 %v55
  %145 = vmatprep.subr.mxu0 %v58
  %146 = vmatpush1.msra.mxu0 %v57
  %147 = vmatprep.subr.mxu0 %v60
  %148 = vmatpush1.msra.mxu0 %v59
  %149 = vmatprep.subr.mxu0 %v62
  %150 = vmatpush1.msra.mxu0 %v61
  %151 = vmatprep.subr.mxu0 %v64
  %152 = vmatpush1.msra.mxu0 %v63
  %153 = vmatprep.subr.mxu0 %v66
  %154 = vmatpush1.msra.mxu0 %v65
  %155 = vmatprep.subr.mxu0 %v68
  %156 = vmatpush1.msra.mxu0 %v67
  %157 = vmatprep.subr.mxu0 %v70
  %158 = vmatpush1.msra.mxu0 %v69
  %159 = vmatprep.subr.mxu0 %v72
  %160 = vmatpush1.msra.mxu0 %v71
  %161 = vmatprep.subr.mxu0 %v74
  %162 = vmatpush1.msra.mxu0 %v73
  %163 = vmatprep.subr.mxu0 %v76
  %164 = vmatpush1.msra.mxu0 %v75
  %165 = vmatprep.subr.mxu0 %v78
  %166 = vmatpush1.msra.mxu0 %v77
  %167 = vmatprep.subr.mxu0 %v80
  %168 = vmatpush1.msra.mxu0 %v79
  %169 = vmatprep.subr.mxu0 %v82
  %170 = vmatpush1.msra.mxu0 %v81
  %171 = vmatprep.subr.mxu0 %v84
  %172 = vmatpush1.msra.mxu0 %v83
  %173 = vmatprep.subr.mxu0 %v86
  %174 = vmatpush1.msra.mxu0 %v85
  %175 = vmatprep.subr.mxu0 %v88
  %176 = vmatpush1.msra.mxu0 %v87
  %177 = vmatprep.subr.mxu0 %v90
  %178 = vmatpush1.msra.mxu0 %v89
  %179 = vmatprep.subr.mxu0 %v92
  %180 = vmatpush1.msra.mxu0 %v91
  %181 = vmatprep.mubr.f32.mxu0 %v27
  %182 = vmatmul.mubr.f32.gmra.mrb[0].mxu0 %v26
  %v183 = vpop.f32.mrb[0].mxu0
  %v184 = vadd.f32 %v106, %v183
  %v185 = vpop.f32.mrb[0].mxu0
  %v186 = vadd.f32 %v110, %v185
  %187 = vdwg.mxu0
  %188 = vmatprep.subr.mxu0 %v94
  %189 = vmatpush1.msra.mxu0 %v93
  %190 = vmatprep.subr.mxu0 %v96
  %191 = vmatpush1.msra.mxu0 %v95
  %192 = vmatprep.subr.mxu0 %v98
  %193 = vmatpush1.msra.mxu0 %v97
  %194 = vmatprep.subr.mxu0 %v100
  %195 = vmatpush1.msra.mxu0 %v99
  %196 = vmatprep.subr.mxu0 0.0
  %197 = vmatpush1.msra.mxu0 0.0
  %198 = vmatprep.subr.mxu0 0.0
  %199 = vmatpush1.msra.mxu0 0.0
  %200 = vmatprep.subr.mxu0 0.0
  %201 = vmatpush1.msra.mxu0 0.0
  %202 = vmatprep.subr.mxu0 0.0
  %203 = vmatpush1.msra.mxu0 0.0
  %204 = vmatprep.subr.mxu0 0.0
  %205 = vmatpush1.msra.mxu0 0.0
  %206 = vmatprep.subr.mxu0 0.0
  %207 = vmatpush1.msra.mxu0 0.0
  %208 = vmatprep.subr.mxu0 0.0
  %209 = vmatpush1.msra.mxu0 0.0
  %210 = vmatprep.subr.mxu0 0.0
  %211 = vmatpush1.msra.mxu0 0.0
  %212 = vmatprep.subr.mxu0 0.0
  %213 = vmatpush1.msra.mxu0 0.0
  %214 = vmatprep.subr.mxu0 0.0
  %215 = vmatpush1.msra.mxu0 0.0
  %216 = vmatprep.subr.mxu0 0.0
  %217 = vmatpush1.msra.mxu0 0.0
  %218 = vmatprep.subr.mxu0 0.0
  %219 = vmatpush1.msra.mxu0 0.0
  %220 = vmatprep.subr.mxu0 0.0
  %221 = vmatpush1.msra.mxu0 0.0
  %222 = vmatprep.subr.mxu0 0.0
  %223 = vmatpush1.msra.mxu0 0.0
  %224 = vmatprep.subr.mxu0 0.0
  %225 = vmatpush1.msra.mxu0 0.0
  %226 = vmatprep.subr.mxu0 0.0
  %227 = vmatpush1.msra.mxu0 0.0
  %228 = vmatprep.subr.mxu0 0.0
  %229 = vmatpush1.msra.mxu0 0.0
  %230 = vmatprep.subr.mxu0 0.0
  %231 = vmatpush1.msra.mxu0 0.0
  %232 = vmatprep.subr.mxu0 0.0
  %233 = vmatpush1.msra.mxu0 0.0
  %234 = vmatprep.subr.mxu0 0.0
  %235 = vmatpush1.msra.mxu0 0.0
  %236 = vmatprep.subr.mxu0 0.0
  %237 = vmatpush1.msra.mxu0 0.0
  %238 = vmatprep.subr.mxu0 0.0
  %239 = vmatpush1.msra.mxu0 0.0
  %240 = vmatprep.subr.mxu0 0.0
  %241 = vmatpush1.msra.mxu0 0.0
  %242 = vmatprep.subr.mxu0 0.0
  %243 = vmatpush1.msra.mxu0 0.0
  %244 = vmatprep.subr.mxu0 0.0
  %245 = vmatpush1.msra.mxu0 0.0
  %246 = vmatprep.subr.mxu0 0.0
  %247 = vmatpush1.msra.mxu0 0.0
  %248 = vmatprep.subr.mxu0 0.0
  %249 = vmatpush1.msra.mxu0 0.0
  %250 = vmatprep.subr.mxu0 0.0
  %251 = vmatpush1.msra.mxu0 0.0
  %252 = vmatprep.mubr.f32.mxu0 0.0
  %253 = vmatmul.mubr.f32.gmra.mrb[0].mxu0 %v115
  %v254 = vpop.f32.mrb[0].mxu0
  %v255 = vadd.f32 %v184, %v254
  %v256 = vpop.f32.mrb[0].mxu0
  %v257 = vadd.f32 %v186, %v256
  %258 = vdwg.mxu0
  %v259 = vld [vmem:[%s3] sm:$0xff]
  %v260 = vld [vmem:[%s3 + $0x8] sm:$0xff]
  %v261 = vld [vmem:[%s3 + $0x10] sm:$0xff]
  %v262 = vld [vmem:[%s3 + $0x18] sm:$0xff]
  %v263 = vld [vmem:[%s3 + $0x20] sm:$0xff]
  %v264 = vld [vmem:[%s3 + $0x28] sm:$0xff]
  %v265 = vld [vmem:[%s3 + $0x30] sm:$0xff]
  %v266 = vld [vmem:[%s3 + $0x38] sm:$0xff]
  %v267 = vld [vmem:[%s3 + $0x40] sm:$0xff]
  %v268 = vld [vmem:[%s3 + $0x48] sm:$0xff]
  %v269 = vld [vmem:[%s3 + $0x50] sm:$0xff]
  %v270 = vld [vmem:[%s3 + $0x58] sm:$0xff]
  %v271 = vld [vmem:[%s3 + $0x60] sm:$0xff]
  %v272 = vld [vmem:[%s3 + $0x68] sm:$0xff]
  %v273 = vld [vmem:[%s3 + $0x70] sm:$0xff]
  %v274 = vld [vmem:[%s3 + $0x78] sm:$0xff]
  %v275 = vld [vmem:[%s3 + $0x80] sm:$0xff]
  %v276 = vld [vmem:[%s3 + $0x88] sm:$0xff]
  %v277 = vld [vmem:[%s4] sm:$0x1]
  %v279 = vlaneseq
  %v280 = vshrl.u32 %v279, 7
  %v281 = vsub.s32 0, %v280
  %v282 = vrot.slane %v277, %v281
  %vm284 = vcmask 130048
  %v286 = vsel %vm284, %v257, 0
  %288 = vmatprep.subr.mxu0 0.0
  %289 = vmatpush1.msra.mxu0 %v259
  %290 = vmatprep.subr.mxu0 0.0
  %291 = vmatpush1.msra.mxu0 %v260
  %292 = vmatprep.subr.mxu0 0.0
  %293 = vmatpush1.msra.mxu0 %v261
  %294 = vmatprep.subr.mxu0 0.0
  %295 = vmatpush1.msra.mxu0 %v262
  %296 = vmatprep.subr.mxu0 0.0
  %297 = vmatpush1.msra.mxu0 %v263
  %298 = vmatprep.subr.mxu0 0.0
  %299 = vmatpush1.msra.mxu0 %v264
  %300 = vmatprep.subr.mxu0 0.0
  %301 = vmatpush1.msra.mxu0 %v265
  %302 = vmatprep.subr.mxu0 0.0
  %303 = vmatpush1.msra.mxu0 %v266
  %304 = vmatprep.subr.mxu0 0.0
  %305 = vmatpush1.msra.mxu0 %v267
  %306 = vmatprep.subr.mxu0 0.0
  %307 = vmatpush1.msra.mxu0 %v268
  %308 = vmatprep.subr.mxu0 0.0
  %309 = vmatpush1.msra.mxu0 %v269
  %310 = vmatprep.subr.mxu0 0.0
  %311 = vmatpush1.msra.mxu0 %v270
  %312 = vmatprep.subr.mxu0 0.0
  %313 = vmatpush1.msra.mxu0 %v271
  %314 = vmatprep.subr.mxu0 0.0
  %315 = vmatpush1.msra.mxu0 %v272
  %316 = vmatprep.subr.mxu0 0.0
  %317 = vmatpush1.msra.mxu0 %v273
  %318 = vmatprep.subr.mxu0 0.0
  %319 = vmatpush1.msra.mxu0 %v274
  %320 = vmatprep.subr.mxu0 0.0
  %321 = vmatpush1.msra.mxu0 %v275
  %322 = vmatprep.subr.mxu0 0.0
  %323 = vmatpush1.msra.mxu0 %v276
  %324 = vmatprep.subr.mxu0 0.0
  %325 = vmatpush1.msra.mxu0 0.0
  %326 = vmatprep.subr.mxu0 0.0
  %327 = vmatpush1.msra.mxu0 0.0
  %328 = vmatprep.subr.mxu0 0.0
  %329 = vmatpush1.msra.mxu0 0.0
  %330 = vmatprep.subr.mxu0 0.0
  %331 = vmatpush1.msra.mxu0 0.0
  %332 = vmatprep.subr.mxu0 0.0
  %333 = vmatpush1.msra.mxu0 0.0
  %334 = vmatprep.subr.mxu0 0.0
  %335 = vmatpush1.msra.mxu0 0.0
  %336 = vmatprep.subr.mxu0 0.0
  %337 = vmatpush1.msra.mxu0 0.0
  %338 = vmatprep.subr.mxu0 0.0
  %339 = vmatpush1.msra.mxu0 0.0
  %340 = vmatprep.subr.mxu0 0.0
  %341 = vmatpush1.msra.mxu0 0.0
  %342 = vmatprep.subr.mxu0 0.0
  %343 = vmatpush1.msra.mxu0 0.0
  %344 = vmatprep.subr.mxu0 0.0
  %345 = vmatpush1.msra.mxu0 0.0
  %346 = vmatprep.subr.mxu0 0.0
  %347 = vmatpush1.msra.mxu0 0.0
  %348 = vmatprep.subr.mxu0 0.0
  %349 = vmatpush1.msra.mxu0 0.0
  %350 = vmatprep.subr.mxu0 0.0
  %351 = vmatpush1.msra.mxu0 0.0
  %352 = vmatprep.mubr.f32.mxu0 %v286
  %353 = vmatmul.mubr.f32.gmra.mrb[0].mxu0 %v255
  %v354 = vpop.f32.mrb[0].mxu0
  %v355 = vadd.f32 %v282, %v354
  %v356 = vpop.f32.mrb[0].mxu0
  %357 = vdwg.mxu0
  %v358 = vld [vmem:[%s5] sm:$0xff]
  %v359 = vld [vmem:[%s5 + $0x8] sm:$0xff]
  %v360 = vld [vmem:[%s5 + $0x10] sm:$0xff]
  %v361 = vld [vmem:[%s5 + $0x18] sm:$0xff]
  %v362 = vld [vmem:[%s5 + $0x20] sm:$0xf]
  %v363 = vld [vmem:[%s6] sm:$0x1]
  %v365 = vlaneseq
  %v366 = vshrl.u32 %v365, 7
  %v367 = vsub.s32 0, %v366
  %v368 = vrot.slane %v363, %v367
  %vm370 = vcmask 293888
  %v372 = vsel %vm370, %v355, 0
  %vm374 = vcmask 1043456
  %v376 = vsel %vm374, %v362, 0
  %378 = vmatprep.subr.mxu0 0.0
  %379 = vmatpush1.msra.mxu0 %v358
  %380 = vmatprep.subr.mxu0 0.0
  %381 = vmatpush1.msra.mxu0 %v359
  %382 = vmatprep.subr.mxu0 0.0
  %383 = vmatpush1.msra.mxu0 %v360
  %384 = vmatprep.subr.mxu0 0.0
  %385 = vmatpush1.msra.mxu0 %v361
  %386 = vmatprep.subr.mxu0 0.0
  %387 = vmatpush1.msra.mxu0 %v376
  %388 = vmatprep.subr.mxu0 0.0
  %389 = vmatpush1.msra.mxu0 0.0
  %390 = vmatprep.subr.mxu0 0.0
  %391 = vmatpush1.msra.mxu0 0.0
  %392 = vmatprep.subr.mxu0 0.0
  %393 = vmatpush1.msra.mxu0 0.0
  %394 = vmatprep.subr.mxu0 0.0
  %395 = vmatpush1.msra.mxu0 0.0
  %396 = vmatprep.subr.mxu0 0.0
  %397 = vmatpush1.msra.mxu0 0.0
  %398 = vmatprep.subr.mxu0 0.0
  %399 = vmatpush1.msra.mxu0 0.0
  %400 = vmatprep.subr.mxu0 0.0
  %401 = vmatpush1.msra.mxu0 0.0
  %402 = vmatprep.subr.mxu0 0.0
  %403 = vmatpush1.msra.mxu0 0.0
  %404 = vmatprep.subr.mxu0 0.0
  %405 = vmatpush1.msra.mxu0 0.0
  %406 = vmatprep.subr.mxu0 0.0
  %407 = vmatpush1.msra.mxu0 0.0
  %408 = vmatprep.subr.mxu0 0.0
  %409 = vmatpush1.msra.mxu0 0.0
  %410 = vmatprep.subr.mxu0 0.0
  %411 = vmatpush1.msra.mxu0 0.0
  %412 = vmatprep.subr.mxu0 0.0
  %413 = vmatpush1.msra.mxu0 0.0
  %414 = vmatprep.subr.mxu0 0.0
  %415 = vmatpush1.msra.mxu0 0.0
  %416 = vmatprep.subr.mxu0 0.0
  %417 = vmatpush1.msra.mxu0 0.0
  %418 = vmatprep.subr.mxu0 0.0
  %419 = vmatpush1.msra.mxu0 0.0
  %420 = vmatprep.subr.mxu0 0.0
  %421 = vmatpush1.msra.mxu0 0.0
  %422 = vmatprep.subr.mxu0 0.0
  %423 = vmatpush1.msra.mxu0 0.0
  %424 = vmatprep.subr.mxu0 0.0
  %425 = vmatpush1.msra.mxu0 0.0
  %426 = vmatprep.subr.mxu0 0.0
  %427 = vmatpush1.msra.mxu0 0.0
  %428 = vmatprep.subr.mxu0 0.0
  %429 = vmatpush1.msra.mxu0 0.0
  %430 = vmatprep.subr.mxu0 0.0
  %431 = vmatpush1.msra.mxu0 0.0
  %432 = vmatprep.subr.mxu0 0.0
  %433 = vmatpush1.msra.mxu0 0.0
  %434 = vmatprep.subr.mxu0 0.0
  %435 = vmatpush1.msra.mxu0 0.0
  %436 = vmatprep.subr.mxu0 0.0
  %437 = vmatpush1.msra.mxu0 0.0
  %438 = vmatprep.subr.mxu0 0.0
  %439 = vmatpush1.msra.mxu0 0.0
  %440 = vmatprep.subr.mxu0 0.0
  %441 = vmatpush1.msra.mxu0 0.0
  %442 = vmatprep.mubr.f32.mxu0 0.0
  %443 = vmatmul.mubr.f32.gmra.mrb[0].mxu0 %v372
  %v444 = vpop.f32.mrb[0].mxu0
  %v445 = vadd.f32 %v368, %v444
  %v446 = vpop.f32.mrb[0].mxu0
  %447 = vdwg.mxu0
  %vm448 = vcmask 80896
  %449 = vst.msk [vmem:[%s7] sm:$0xff] %vm448, %v445
  // Predicated region
  $region30: #{variant4_forward.7} parent=0 // pred_check
    _
  $region31: #{variant4_forward.7} parent=0 // pred_check_branch
    %451 = sbr.rel (0) target = $region33
  $region32: #{variant4_forward.7} parent=0 // pred_region
    _
  $region33: #{variant4_forward.7} parent=0 // pred_fallthru
    _
  // Predicated region
  $region34: #{variant4_forward.7} parent=0 // pred_check
    _
  $region35: #{variant4_forward.7} parent=0 // pred_check_branch
    %453 = sbr.rel (0) target = $region37
  $region36: #{variant4_forward.7} parent=0 // pred_region
    _
  $region37: #{variant4_forward.7} parent=0 // pred_fallthru
    _

</llo_original>
